<compile_context>
chip_gen: v6e
topology: v6e:2x2x1
jax: 0.10.0
libtpu: 0.0.40
codegen_flags: <defaults>
</compile_context>

<pallas_src>
import functools

import jax
import jax.numpy as jnp
from jax.experimental import pallas as pl
from jax.experimental.pallas import tpu as pltpu


def _round_up(v, m):
    return ((v + m - 1) // m) * m


OFF = 8  # leading spare rows in the input slab / ybuf (keeps all halo reads in bounds)


# -----------------------------------------------------------------------------
# Fused kernel, one (batch, depth-tile) grid step:
#   layer 1: 9 band-matmuls over the lane-packed input slab -> masked contiguous
#            store into the ybuf scratch (TD+2 depth slices, incl. conv2 halo)
#   layer 2: 9 band-matmuls over ybuf -> lane-dense output block (TD depth slices)
# All row offsets are static; each (kd,kh) weight is a (LK,LN) block-banded matrix
# that already contains the kw taps, the channel mixing and the folded BN scale.
# -----------------------------------------------------------------------------
def _decoder3d_kernel(x_ref, mask_ref, w1_ref, b1_ref, w2_ref, b2_ref,
                      out_ref, ybuf, *, TD, Hp, LN, chunk):
    rows1 = (TD + 2) * Hp
    rows2 = TD * Hp
    t = pl.program_id(1)
    n_t = pl.num_programs(1)

    def conv9(load_lhs, w_ref):
        acc = None
        for kd in range(3):
            for kh in range(3):
                part = jnp.dot(load_lhs(kd * Hp + kh), w_ref[kd * 3 + kh],
                               preferred_element_type=jnp.float32)
                acc = part if acc is None else acc + part
        return acc

    # ---------------- layer 1: conv1 + BN1 + ReLU (TD+2 slices incl. depth halo) ----
    for c0 in range(0, rows1, chunk):
        cn = min(chunk, rows1 - c0)
        acc = conv9(lambda d: x_ref[0, pl.ds(c0 + d + OFF - 1, cn), :], w1_ref)
        val = jnp.maximum(acc + b1_ref[...], 0.0)
        keep = mask_ref[pl.ds(c0, cn), :] > 0.5          # 0 on the H-halo rows
        ybuf[pl.ds(OFF + c0, cn), :] = jnp.where(keep, val, 0.0)

    # depth slices outside the volume must be zero padding for conv2
    @pl.when(t == 0)
    def _():
        ybuf[pl.ds(OFF, Hp), :] = jnp.zeros((Hp, LN), jnp.float32)

    @pl.when(t == n_t - 1)
    def _():
        ybuf[pl.ds(OFF + (TD + 1) * Hp, Hp), :] = jnp.zeros((Hp, LN), jnp.float32)

    # ---------------- layer 2: conv2 + BN2 + ReLU (TD slices) -----------------------
    for c0 in range(0, rows2, chunk):
        cn = min(chunk, rows2 - c0)
        acc = conv9(lambda d: ybuf[pl.ds(c0 + d + OFF - 1, cn), :], w2_ref)
        val = jnp.maximum(acc + b2_ref[...], 0.0)
        out_ref[0, pl.ds(c0, cn), :] = val.astype(out_ref.dtype)


# -----------------------------------------------------------------------------
# Host-side parameter folding: BN (eval) + bias folded in; kw taps + channel mixing
# packed into 9 block-banded (LK, LN) matrices (one per (kd, kh)).
# -----------------------------------------------------------------------------
def _band_weights(w, gamma, var, eps, W, LK, LN):
    Co, Ci = w.shape[0], w.shape[1]
    scale = gamma / jnp.sqrt(var + eps)                                   # (Co,)
    w_t = jnp.transpose(w, (2, 3, 4, 1, 0)).astype(jnp.float32) * scale  # (3,3,3,Ci,Co)
    mats = []
    for kd in range(3):
        for kh in range(3):
            m = jnp.zeros((W * Ci, W * Co), jnp.float32)
            for kw in range(3):
                shift = jnp.eye(W, k=1 - kw, dtype=jnp.float32)  # w_in = w_out + kw - 1
                m = m + jnp.kron(shift, w_t[kd, kh, kw])
            mats.append(m)
    m9 = jnp.stack(mats)                                                  # (9, W*Ci, W*Co)
    return jnp.pad(m9, ((0, 0), (0, LK - W * Ci), (0, LN - W * Co)))


def _fold_bias(b, gamma, beta, mean, var, eps, W, LN):
    Co = b.shape[0]
    scale = gamma / jnp.sqrt(var + eps)
    b_eff = (b - mean) * scale + beta                                     # (Co,)
    b_lane = jnp.tile(b_eff.astype(jnp.float32), W)                       # (W*Co,)
    return jnp.pad(b_lane, (0, LN - W * Co)).reshape(1, LN)


def _choose_d_tile(N, D, Hp, LK, LN, itemsize, budget_bytes=12 * 2 ** 20):
    """Largest divisor of D whose per-step buffers fit the budget; prefer >=2 steps."""
    def step_bytes(TD):
        slab = ((TD + 4) * Hp + 2 * OFF) * LK * itemsize * 2   # double-buffered input
        act = ((TD + 2) * Hp + 2 * OFF) * LN * 4               # layer-1 scratch
        outb = TD * Hp * LN * itemsize * 2                     # double-buffered output
        return slab + act + outb

    best = None
    for TD in sorted((d for d in range(1, D + 1) if D % d == 0), reverse=True):
        if step_bytes(TD) > budget_bytes:
            continue
        if best is None:
            best = TD
        if N * (D // TD) >= 2:          # keep both v7x TensorCores busy
            return TD
    return best or 1


# -----------------------------------------------------------------------------
# Wrapper: lane-pack / pad the input, build band matrices, call the fused kernel.
# -----------------------------------------------------------------------------
def decoder3d_forward(x, params, *, d_tile=None, chunk=256, eps=1e-5):
    """x: (N, C_in, D, H, W) NCDHW (PyTorch layout). Returns (N, C_out, D, H, W)."""
    N, C_in, D, H, W = x.shape
    C_out = params["conv1_w"].shape[0]
    Hp = H + 2
    LK = _round_up(W * C_in, 128)      # lane-packed input width  (w, ci)
    LN = _round_up(W * C_out, 128)     # lane-packed activation / output width (w, co)
    f32 = jnp.float32

    if d_tile is None:
        d_tile = _choose_d_tile(N, D, Hp, LK, LN, jnp.dtype(x.dtype).itemsize)
    assert D % d_tile == 0, "d_tile must divide D"
    TD = d_tile
    NT = D // TD
    SLAB = (TD + 4) * Hp + 2 * OFF
    rows1 = (TD + 2) * Hp
    rows2 = TD * Hp

    # ---- fold BN (eval-mode running stats) + conv bias into band matrices / biases --
    w1 = _band_weights(params["conv1_w"], params["bn1_gamma"], params["bn1_var"],
                       eps, W, LK, LN)
    b1 = _fold_bias(params["conv1_b"], params["bn1_gamma"], params["bn1_beta"],
                    params["bn1_mean"], params["bn1_var"], eps, W, LN)
    w2 = _band_weights(params["conv2_w"], params["bn2_gamma"], params["bn2_var"],
                       eps, W, LN, LN)
    b2 = _fold_bias(params["conv2_b"], params["bn2_gamma"], params["bn2_beta"],
                    params["bn2_mean"], params["bn2_var"], eps, W, LN)

    # ---- lane-packed rows: lanes = (w, ci) padded to LK; rows = (depth, h) with a
    #      1-row H halo and a 2-slice depth halo.  W needs no padding (the band
    #      matrices implement the w-boundary zero padding themselves).
    x_ln = jnp.transpose(x, (0, 2, 3, 4, 1)).reshape(N, D, H, W * C_in)
    x_ln = jnp.pad(x_ln, ((0, 0), (2, 2), (1, 1), (0, LK - W * C_in)))
    x_rows = x_ln.reshape(N, (D + 4) * Hp, LK)
    x_rows = jnp.pad(x_rows, ((0, 0), (OFF, OFF), (0, 0)))
    # host-side overlapping depth-tile view -> BlockSpec auto-pipelines (double-buffers)
    # the halo'd slab fetch with no manual DMA / semaphores.
    x_tiles = jnp.concatenate(
        [x_rows[:, t * TD * Hp: t * TD * Hp + SLAB, :][:, None] for t in range(NT)],
        axis=1).reshape(N * NT, SLAB, LK)

    # 0/1 mask that zeroes the H-halo rows of the layer-1 activation (tile-invariant)
    h_idx = jnp.arange(rows1) % Hp
    mask = ((h_idx != 0) & (h_idx != Hp - 1)).astype(f32).reshape(rows1, 1)

    kernel = functools.partial(_decoder3d_kernel, TD=TD, Hp=Hp, LN=LN, chunk=chunk)

    out_rows = pl.pallas_call(
        kernel,
        out_shape=jax.ShapeDtypeStruct((N * NT, rows2, LN), x.dtype),
        grid=(N, NT),
        in_specs=[
            pl.BlockSpec((1, SLAB, LK), lambda n, t: (n * NT + t, 0, 0)),   # input slab
            pl.BlockSpec((rows1, 1), lambda n, t: (0, 0)),                  # H-halo mask
            pl.BlockSpec((9, LK, LN), lambda n, t: (0, 0, 0)),              # band W1
            pl.BlockSpec((1, LN), lambda n, t: (0, 0)),                     # folded b1
            pl.BlockSpec((9, LN, LN), lambda n, t: (0, 0, 0)),              # band W2
            pl.BlockSpec((1, LN), lambda n, t: (0, 0)),                     # folded b2
        ],
        out_specs=pl.BlockSpec((1, rows2, LN), lambda n, t: (n * NT + t, 0, 0)),
        scratch_shapes=[pltpu.VMEM((rows1 + 2 * OFF, LN), f32)],            # layer-1 act
        compiler_params=pltpu.CompilerParams(
            dimension_semantics=("parallel", "parallel")),
    )(x_tiles, mask, w1, b1, w2, b2)

    out = out_rows.reshape(N, NT, TD, Hp, LN)[:, :, :, 1:H + 1, :W * C_out]
    out = out.reshape(N, D, H, W, C_out)
    return jnp.transpose(out, (0, 4, 1, 2, 3))


# -----------------------------------------------------------------------------
# Pure-JAX reference (mirrors the PyTorch forward in eval mode) for validation.
# -----------------------------------------------------------------------------
def decoder3d_reference(x, params, *, eps=1e-5):
    def layer(y, w, b, gamma, beta, mean, var):
        y = jax.lax.conv_general_dilated(
            y.astype(jnp.float32), w.astype(jnp.float32),
            window_strides=(1, 1, 1), padding=((1, 1), (1, 1), (1, 1)),
            dimension_numbers=("NCDHW", "OIDHW", "NCDHW"),
            precision=jax.lax.Precision.HIGHEST)
        y = y + b.reshape(1, -1, 1, 1, 1)
        y = (y - mean.reshape(1, -1, 1, 1, 1)) / jnp.sqrt(var.reshape(1, -1, 1, 1, 1) + eps)
        y = y * gamma.reshape(1, -1, 1, 1, 1) + beta.reshape(1, -1, 1, 1, 1)
        return jnp.maximum(y, 0.0)

    y = layer(x, params["conv1_w"], params["conv1_b"], params["bn1_gamma"],
              params["bn1_beta"], params["bn1_mean"], params["bn1_var"])
    y = layer(y, params["conv2_w"], params["conv2_b"], params["bn2_gamma"],
              params["bn2_beta"], params["bn2_mean"], params["bn2_var"])
    return y


if __name__ == "__main__":
    import numpy as np

    key = jax.random.PRNGKey(0)
    N, C_in, C_out = 2, 8, 8
    D = H = W = 16
    ks = jax.random.split(key, 13)

    def rnd(k, shape, scale=1.0):
        return jax.random.normal(k, shape, jnp.float32) * scale

    params = {
        "conv1_w": rnd(ks[0], (C_out, C_in, 3, 3, 3), 0.08),
        "conv1_b": rnd(ks[1], (C_out,), 0.1),
        "bn1_gamma": 1.0 + 0.1 * rnd(ks[2], (C_out,)),
        "bn1_beta": 0.1 * rnd(ks[3], (C_out,)),
        "bn1_mean": 0.1 * rnd(ks[4], (C_out,)),
        "bn1_var": 1.0 + 0.1 * jnp.abs(rnd(ks[5], (C_out,))),
        "conv2_w": rnd(ks[6], (C_out, C_out, 3, 3, 3), 0.08),
        "conv2_b": rnd(ks[7], (C_out,), 0.1),
        "bn2_gamma": 1.0 + 0.1 * rnd(ks[8], (C_out,)),
        "bn2_beta": 0.1 * rnd(ks[9], (C_out,)),
        "bn2_mean": 0.1 * rnd(ks[10], (C_out,)),
        "bn2_var": 1.0 + 0.1 * jnp.abs(rnd(ks[11], (C_out,))),
    }
    x = rnd(ks[12], (N, C_in, D, H, W))

    # d_tile=8 with D=16 -> two depth tiles, exercising the halo-recompute / boundary
    # zeroing path and giving a (2, 2) grid (both axes parallel).
    out = decoder3d_forward(x, params, d_tile=8)
    out = jax.block_until_ready(out)

    ref = decoder3d_reference(x, params)
    np.testing.assert_allclose(np.asarray(out), np.asarray(ref), rtol=1e-3, atol=1e-3)
    print("KERNEL_OK")
</pallas_src>

<mosaic_0001>
module attributes {stable_mosaic.version = 11 : i64} {
  func.func @_decoder3d_kernel(%arg0: i32, %arg1: i32, %arg2: memref<1x232x128xf32, #tpu.memory_space<vmem>>, %arg3: memref<180x1xf32, #tpu.memory_space<vmem>>, %arg4: memref<9x128x128xf32, #tpu.memory_space<vmem>>, %arg5: memref<1x128xf32, #tpu.memory_space<vmem>>, %arg6: memref<9x128x128xf32, #tpu.memory_space<vmem>>, %arg7: memref<1x128xf32, #tpu.memory_space<vmem>>, %arg8: memref<1x144x128xf32, #tpu.memory_space<vmem>>, %arg9: memref<196x128xf32, #tpu.memory_space<vmem>>) attributes {dimension_semantics = [#tpu.dimension_semantics<parallel>, #tpu.dimension_semantics<parallel>], iteration_bounds = array<i64: 2, 2>, scalar_prefetch = 0 : i64, scratch_operands = 1 : i64, tpu.core_type = #tpu.core_type<tc>, window_params = [{transform_indices = @transform_0, window_bounds = array<i64: 1, 232, 128>}, {pipeline_mode = #tpu.pipeline_mode<synchronous>, transform_indices = @transform_1, window_bounds = array<i64: 180, 1>}, {pipeline_mode = #tpu.pipeline_mode<synchronous>, transform_indices = @transform_2, window_bounds = array<i64: 9, 128, 128>}, {pipeline_mode = #tpu.pipeline_mode<synchronous>, transform_indices = @transform_3, window_bounds = array<i64: 1, 128>}, {pipeline_mode = #tpu.pipeline_mode<synchronous>, transform_indices = @transform_4, window_bounds = array<i64: 9, 128, 128>}, {pipeline_mode = #tpu.pipeline_mode<synchronous>, transform_indices = @transform_5, window_bounds = array<i64: 1, 128>}, {transform_indices = @transform_6, window_bounds = array<i64: 1, 144, 128>}]} {
    %c0 = arith.constant 0 : index
    %c7 = arith.constant 7 : index
    %c0_0 = arith.constant 0 : index
    %0 = vector.load %arg2[%c0, %c7, %c0_0] : memref<1x232x128xf32, #tpu.memory_space<vmem>>, vector<1x180x128xf32>
    %1 = vector.shape_cast %0 : vector<1x180x128xf32> to vector<180x128xf32>
    %c0_1 = arith.constant 0 : index
    %c0_2 = arith.constant 0 : index
    %c0_3 = arith.constant 0 : index
    %2 = vector.load %arg4[%c0_1, %c0_2, %c0_3] : memref<9x128x128xf32, #tpu.memory_space<vmem>>, vector<1x128x128xf32>
    %3 = vector.shape_cast %2 : vector<1x128x128xf32> to vector<128x128xf32>
    %cst = arith.constant dense<0.000000e+00> : vector<180x128xf32>
    %4 = tpu.matmul %1, %3, %cst {dimension_numbers = #tpu.dot_dimension_numbers<[1], [0], [0], [1], [0, 0, 1, 1], [], []>} : vector<180x128xf32>, vector<128x128xf32>, vector<180x128xf32> -> vector<180x128xf32>
    %c0_4 = arith.constant 0 : index
    %c8 = arith.constant 8 : index
    %c0_5 = arith.constant 0 : index
    %5 = vector.load %arg2[%c0_4, %c8, %c0_5] : memref<1x232x128xf32, #tpu.memory_space<vmem>>, vector<1x180x128xf32>
    %6 = vector.shape_cast %5 : vector<1x180x128xf32> to vector<180x128xf32>
    %c1 = arith.constant 1 : index
    %c0_6 = arith.constant 0 : index
    %c0_7 = arith.constant 0 : index
    %7 = vector.load %arg4[%c1, %c0_6, %c0_7] : memref<9x128x128xf32, #tpu.memory_space<vmem>>, vector<1x128x128xf32>
    %8 = vector.shape_cast %7 : vector<1x128x128xf32> to vector<128x128xf32>
    %cst_8 = arith.constant dense<0.000000e+00> : vector<180x128xf32>
    %9 = tpu.matmul %6, %8, %cst_8 {dimension_numbers = #tpu.dot_dimension_numbers<[1], [0], [0], [1], [0, 0, 1, 1], [], []>} : vector<180x128xf32>, vector<128x128xf32>, vector<180x128xf32> -> vector<180x128xf32>
    %10 = arith.addf %4, %9 : vector<180x128xf32>
    %c0_9 = arith.constant 0 : index
    %c9 = arith.constant 9 : index
    %c0_10 = arith.constant 0 : index
    %11 = vector.load %arg2[%c0_9, %c9, %c0_10] : memref<1x232x128xf32, #tpu.memory_space<vmem>>, vector<1x180x128xf32>
    %12 = vector.shape_cast %11 : vector<1x180x128xf32> to vector<180x128xf32>
    %c2 = arith.constant 2 : index
    %c0_11 = arith.constant 0 : index
    %c0_12 = arith.constant 0 : index
    %13 = vector.load %arg4[%c2, %c0_11, %c0_12] : memref<9x128x128xf32, #tpu.memory_space<vmem>>, vector<1x128x128xf32>
    %14 = vector.shape_cast %13 : vector<1x128x128xf32> to vector<128x128xf32>
    %cst_13 = arith.constant dense<0.000000e+00> : vector<180x128xf32>
    %15 = tpu.matmul %12, %14, %cst_13 {dimension_numbers = #tpu.dot_dimension_numbers<[1], [0], [0], [1], [0, 0, 1, 1], [], []>} : vector<180x128xf32>, vector<128x128xf32>, vector<180x128xf32> -> vector<180x128xf32>
    %16 = arith.addf %10, %15 : vector<180x128xf32>
    %c0_14 = arith.constant 0 : index
    %c25 = arith.constant 25 : index
    %c0_15 = arith.constant 0 : index
    %17 = vector.load %arg2[%c0_14, %c25, %c0_15] : memref<1x232x128xf32, #tpu.memory_space<vmem>>, vector<1x180x128xf32>
    %18 = vector.shape_cast %17 : vector<1x180x128xf32> to vector<180x128xf32>
    %c3 = arith.constant 3 : index
    %c0_16 = arith.constant 0 : index
    %c0_17 = arith.constant 0 : index
    %19 = vector.load %arg4[%c3, %c0_16, %c0_17] : memref<9x128x128xf32, #tpu.memory_space<vmem>>, vector<1x128x128xf32>
    %20 = vector.shape_cast %19 : vector<1x128x128xf32> to vector<128x128xf32>
    %cst_18 = arith.constant dense<0.000000e+00> : vector<180x128xf32>
    %21 = tpu.matmul %18, %20, %cst_18 {dimension_numbers = #tpu.dot_dimension_numbers<[1], [0], [0], [1], [0, 0, 1, 1], [], []>} : vector<180x128xf32>, vector<128x128xf32>, vector<180x128xf32> -> vector<180x128xf32>
    %22 = arith.addf %16, %21 : vector<180x128xf32>
    %c0_19 = arith.constant 0 : index
    %c26 = arith.constant 26 : index
    %c0_20 = arith.constant 0 : index
    %23 = vector.load %arg2[%c0_19, %c26, %c0_20] : memref<1x232x128xf32, #tpu.memory_space<vmem>>, vector<1x180x128xf32>
    %24 = vector.shape_cast %23 : vector<1x180x128xf32> to vector<180x128xf32>
    %c4 = arith.constant 4 : index
    %c0_21 = arith.constant 0 : index
    %c0_22 = arith.constant 0 : index
    %25 = vector.load %arg4[%c4, %c0_21, %c0_22] : memref<9x128x128xf32, #tpu.memory_space<vmem>>, vector<1x128x128xf32>
    %26 = vector.shape_cast %25 : vector<1x128x128xf32> to vector<128x128xf32>
    %cst_23 = arith.constant dense<0.000000e+00> : vector<180x128xf32>
    %27 = tpu.matmul %24, %26, %cst_23 {dimension_numbers = #tpu.dot_dimension_numbers<[1], [0], [0], [1], [0, 0, 1, 1], [], []>} : vector<180x128xf32>, vector<128x128xf32>, vector<180x128xf32> -> vector<180x128xf32>
    %28 = arith.addf %22, %27 : vector<180x128xf32>
    %c0_24 = arith.constant 0 : index
    %c27 = arith.constant 27 : index
    %c0_25 = arith.constant 0 : index
    %29 = vector.load %arg2[%c0_24, %c27, %c0_25] : memref<1x232x128xf32, #tpu.memory_space<vmem>>, vector<1x180x128xf32>
    %30 = vector.shape_cast %29 : vector<1x180x128xf32> to vector<180x128xf32>
    %c5 = arith.constant 5 : index
    %c0_26 = arith.constant 0 : index
    %c0_27 = arith.constant 0 : index
    %31 = vector.load %arg4[%c5, %c0_26, %c0_27] : memref<9x128x128xf32, #tpu.memory_space<vmem>>, vector<1x128x128xf32>
    %32 = vector.shape_cast %31 : vector<1x128x128xf32> to vector<128x128xf32>
    %cst_28 = arith.constant dense<0.000000e+00> : vector<180x128xf32>
    %33 = tpu.matmul %30, %32, %cst_28 {dimension_numbers = #tpu.dot_dimension_numbers<[1], [0], [0], [1], [0, 0, 1, 1], [], []>} : vector<180x128xf32>, vector<128x128xf32>, vector<180x128xf32> -> vector<180x128xf32>
    %34 = arith.addf %28, %33 : vector<180x128xf32>
    %c0_29 = arith.constant 0 : index
    %c43 = arith.constant 43 : index
    %c0_30 = arith.constant 0 : index
    %35 = vector.load %arg2[%c0_29, %c43, %c0_30] : memref<1x232x128xf32, #tpu.memory_space<vmem>>, vector<1x180x128xf32>
    %36 = vector.shape_cast %35 : vector<1x180x128xf32> to vector<180x128xf32>
    %c6 = arith.constant 6 : index
    %c0_31 = arith.constant 0 : index
    %c0_32 = arith.constant 0 : index
    %37 = vector.load %arg4[%c6, %c0_31, %c0_32] : memref<9x128x128xf32, #tpu.memory_space<vmem>>, vector<1x128x128xf32>
    %38 = vector.shape_cast %37 : vector<1x128x128xf32> to vector<128x128xf32>
    %cst_33 = arith.constant dense<0.000000e+00> : vector<180x128xf32>
    %39 = tpu.matmul %36, %38, %cst_33 {dimension_numbers = #tpu.dot_dimension_numbers<[1], [0], [0], [1], [0, 0, 1, 1], [], []>} : vector<180x128xf32>, vector<128x128xf32>, vector<180x128xf32> -> vector<180x128xf32>
    %40 = arith.addf %34, %39 : vector<180x128xf32>
    %c0_34 = arith.constant 0 : index
    %c44 = arith.constant 44 : index
    %c0_35 = arith.constant 0 : index
    %41 = vector.load %arg2[%c0_34, %c44, %c0_35] : memref<1x232x128xf32, #tpu.memory_space<vmem>>, vector<1x180x128xf32>
    %42 = vector.shape_cast %41 : vector<1x180x128xf32> to vector<180x128xf32>
    %c7_36 = arith.constant 7 : index
    %c0_37 = arith.constant 0 : index
    %c0_38 = arith.constant 0 : index
    %43 = vector.load %arg4[%c7_36, %c0_37, %c0_38] : memref<9x128x128xf32, #tpu.memory_space<vmem>>, vector<1x128x128xf32>
    %44 = vector.shape_cast %43 : vector<1x128x128xf32> to vector<128x128xf32>
    %cst_39 = arith.constant dense<0.000000e+00> : vector<180x128xf32>
    %45 = tpu.matmul %42, %44, %cst_39 {dimension_numbers = #tpu.dot_dimension_numbers<[1], [0], [0], [1], [0, 0, 1, 1], [], []>} : vector<180x128xf32>, vector<128x128xf32>, vector<180x128xf32> -> vector<180x128xf32>
    %46 = arith.addf %40, %45 : vector<180x128xf32>
    %c0_40 = arith.constant 0 : index
    %c45 = arith.constant 45 : index
    %c0_41 = arith.constant 0 : index
    %47 = vector.load %arg2[%c0_40, %c45, %c0_41] : memref<1x232x128xf32, #tpu.memory_space<vmem>>, vector<1x180x128xf32>
    %48 = vector.shape_cast %47 : vector<1x180x128xf32> to vector<180x128xf32>
    %c8_42 = arith.constant 8 : index
    %c0_43 = arith.constant 0 : index
    %c0_44 = arith.constant 0 : index
    %49 = vector.load %arg4[%c8_42, %c0_43, %c0_44] : memref<9x128x128xf32, #tpu.memory_space<vmem>>, vector<1x128x128xf32>
    %50 = vector.shape_cast %49 : vector<1x128x128xf32> to vector<128x128xf32>
    %cst_45 = arith.constant dense<0.000000e+00> : vector<180x128xf32>
    %51 = tpu.matmul %48, %50, %cst_45 {dimension_numbers = #tpu.dot_dimension_numbers<[1], [0], [0], [1], [0, 0, 1, 1], [], []>} : vector<180x128xf32>, vector<128x128xf32>, vector<180x128xf32> -> vector<180x128xf32>
    %52 = arith.addf %46, %51 : vector<180x128xf32>
    %c0_46 = arith.constant 0 : index
    %c0_47 = arith.constant 0 : index
    %53 = vector.load %arg5[%c0_46, %c0_47] : memref<1x128xf32, #tpu.memory_space<vmem>>, vector<1x128xf32>
    %54 = vector.broadcast %53 : vector<1x128xf32> to vector<180x128xf32>
    %55 = arith.addf %52, %54 : vector<180x128xf32>
    %cst_48 = arith.constant 0.000000e+00 : f32
    %56 = vector.broadcast %cst_48 : f32 to vector<180x128xf32>
    %57 = arith.maximumf %55, %56 : vector<180x128xf32>
    %c0_49 = arith.constant 0 : index
    %c0_50 = arith.constant 0 : index
    %58 = vector.load %arg3[%c0_49, %c0_50] : memref<180x1xf32, #tpu.memory_space<vmem>>, vector<180x1xf32>
    %cst_51 = arith.constant 5.000000e-01 : f32
    %59 = vector.broadcast %cst_51 : f32 to vector<180x1xf32>
    %60 = arith.cmpf ogt, %58, %59 : vector<180x1xf32>
    %cst_52 = arith.constant 0.000000e+00 : f32
    %61 = vector.shape_cast %60 : vector<180x1xi1> to vector<180x1xi1>
    %62 = vector.broadcast %61 : vector<180x1xi1> to vector<180x128xi1>
    %63 = vector.broadcast %cst_52 : f32 to vector<180x128xf32>
    %64 = arith.select %62, %57, %63 : vector<180x128xi1>, vector<180x128xf32>
    %c8_53 = arith.constant 8 : index
    %c0_54 = arith.constant 0 : index
    %65 = vector.load %arg9[%c8_53, %c0_54] : memref<196x128xf32, #tpu.memory_space<vmem>>, vector<180x128xf32>
    tpu.vector_store %arg9[%c8_53, %c0_54], %64 {strides = array<i32>} : memref<196x128xf32, #tpu.memory_space<vmem>>, vector<180x128xf32>,
    %c0_i32 = arith.constant 0 : i32
    %66 = arith.cmpi eq, %arg1, %c0_i32 : i32
    %67 = arith.extui %66 : i1 to i32
    %c0_i32_55 = arith.constant 0 : i32
    %68 = arith.cmpi ne, %67, %c0_i32_55 : i32
    scf.if %68 {
      %cst_117 = arith.constant 0.000000e+00 : f32
      %124 = vector.broadcast %cst_117 : f32 to vector<18x128xf32>
      %c8_118 = arith.constant 8 : index
      %c0_119 = arith.constant 0 : index
      %125 = vector.load %arg9[%c8_118, %c0_119] : memref<196x128xf32, #tpu.memory_space<vmem>>, vector<18x128xf32>
      tpu.vector_store %arg9[%c8_118, %c0_119], %124 {strides = array<i32>} : memref<196x128xf32, #tpu.memory_space<vmem>>, vector<18x128xf32>,
    } else {
    }
    %c1_i32 = arith.constant 1 : i32
    %69 = arith.cmpi eq, %arg1, %c1_i32 : i32
    %70 = arith.extui %69 : i1 to i32
    %c0_i32_56 = arith.constant 0 : i32
    %71 = arith.cmpi ne, %70, %c0_i32_56 : i32
    scf.if %71 {
      %cst_117 = arith.constant 0.000000e+00 : f32
      %124 = vector.broadcast %cst_117 : f32 to vector<18x128xf32>
      %c170 = arith.constant 170 : index
      %c0_118 = arith.constant 0 : index
      %125 = vector.load %arg9[%c170, %c0_118] : memref<196x128xf32, #tpu.memory_space<vmem>>, vector<18x128xf32>
      tpu.vector_store %arg9[%c170, %c0_118], %124 {strides = array<i32>} : memref<196x128xf32, #tpu.memory_space<vmem>>, vector<18x128xf32>,
    } else {
    }
    %c7_57 = arith.constant 7 : index
    %c0_58 = arith.constant 0 : index
    %72 = vector.load %arg9[%c7_57, %c0_58] : memref<196x128xf32, #tpu.memory_space<vmem>>, vector<144x128xf32>
    %c0_59 = arith.constant 0 : index
    %c0_60 = arith.constant 0 : index
    %c0_61 = arith.constant 0 : index
    %73 = vector.load %arg6[%c0_59, %c0_60, %c0_61] : memref<9x128x128xf32, #tpu.memory_space<vmem>>, vector<1x128x128xf32>
    %74 = vector.shape_cast %73 : vector<1x128x128xf32> to vector<128x128xf32>
    %cst_62 = arith.constant dense<0.000000e+00> : vector<144x128xf32>
    %75 = tpu.matmul %72, %74, %cst_62 {dimension_numbers = #tpu.dot_dimension_numbers<[1], [0], [0], [1], [0, 0, 1, 1], [], []>} : vector<144x128xf32>, vector<128x128xf32>, vector<144x128xf32> -> vector<144x128xf32>
    %c8_63 = arith.constant 8 : index
    %c0_64 = arith.constant 0 : index
    %76 = vector.load %arg9[%c8_63, %c0_64] : memref<196x128xf32, #tpu.memory_space<vmem>>, vector<144x128xf32>
    %c1_65 = arith.constant 1 : index
    %c0_66 = arith.constant 0 : index
    %c0_67 = arith.constant 0 : index
    %77 = vector.load %arg6[%c1_65, %c0_66, %c0_67] : memref<9x128x128xf32, #tpu.memory_space<vmem>>, vector<1x128x128xf32>
    %78 = vector.shape_cast %77 : vector<1x128x128xf32> to vector<128x128xf32>
    %cst_68 = arith.constant dense<0.000000e+00> : vector<144x128xf32>
    %79 = tpu.matmul %76, %78, %cst_68 {dimension_numbers = #tpu.dot_dimension_numbers<[1], [0], [0], [1], [0, 0, 1, 1], [], []>} : vector<144x128xf32>, vector<128x128xf32>, vector<144x128xf32> -> vector<144x128xf32>
    %80 = arith.addf %75, %79 : vector<144x128xf32>
    %c9_69 = arith.constant 9 : index
    %c0_70 = arith.constant 0 : index
    %81 = vector.load %arg9[%c9_69, %c0_70] : memref<196x128xf32, #tpu.memory_space<vmem>>, vector<144x128xf32>
    %c2_71 = arith.constant 2 : index
    %c0_72 = arith.constant 0 : index
    %c0_73 = arith.constant 0 : index
    %82 = vector.load %arg6[%c2_71, %c0_72, %c0_73] : memref<9x128x128xf32, #tpu.memory_space<vmem>>, vector<1x128x128xf32>
    %83 = vector.shape_cast %82 : vector<1x128x128xf32> to vector<128x128xf32>
    %cst_74 = arith.constant dense<0.000000e+00> : vector<144x128xf32>
    %84 = tpu.matmul %81, %83, %cst_74 {dimension_numbers = #tpu.dot_dimension_numbers<[1], [0], [0], [1], [0, 0, 1, 1], [], []>} : vector<144x128xf32>, vector<128x128xf32>, vector<144x128xf32> -> vector<144x128xf32>
    %85 = arith.addf %80, %84 : vector<144x128xf32>
    %c25_75 = arith.constant 25 : index
    %c0_76 = arith.constant 0 : index
    %86 = vector.load %arg9[%c25_75, %c0_76] : memref<196x128xf32, #tpu.memory_space<vmem>>, vector<144x128xf32>
    %c3_77 = arith.constant 3 : index
    %c0_78 = arith.constant 0 : index
    %c0_79 = arith.constant 0 : index
    %87 = vector.load %arg6[%c3_77, %c0_78, %c0_79] : memref<9x128x128xf32, #tpu.memory_space<vmem>>, vector<1x128x128xf32>
    %88 = vector.shape_cast %87 : vector<1x128x128xf32> to vector<128x128xf32>
    %cst_80 = arith.constant dense<0.000000e+00> : vector<144x128xf32>
    %89 = tpu.matmul %86, %88, %cst_80 {dimension_numbers = #tpu.dot_dimension_numbers<[1], [0], [0], [1], [0, 0, 1, 1], [], []>} : vector<144x128xf32>, vector<128x128xf32>, vector<144x128xf32> -> vector<144x128xf32>
    %90 = arith.addf %85, %89 : vector<144x128xf32>
    %c26_81 = arith.constant 26 : index
    %c0_82 = arith.constant 0 : index
    %91 = vector.load %arg9[%c26_81, %c0_82] : memref<196x128xf32, #tpu.memory_space<vmem>>, vector<144x128xf32>
    %c4_83 = arith.constant 4 : index
    %c0_84 = arith.constant 0 : index
    %c0_85 = arith.constant 0 : index
    %92 = vector.load %arg6[%c4_83, %c0_84, %c0_85] : memref<9x128x128xf32, #tpu.memory_space<vmem>>, vector<1x128x128xf32>
    %93 = vector.shape_cast %92 : vector<1x128x128xf32> to vector<128x128xf32>
    %cst_86 = arith.constant dense<0.000000e+00> : vector<144x128xf32>
    %94 = tpu.matmul %91, %93, %cst_86 {dimension_numbers = #tpu.dot_dimension_numbers<[1], [0], [0], [1], [0, 0, 1, 1], [], []>} : vector<144x128xf32>, vector<128x128xf32>, vector<144x128xf32> -> vector<144x128xf32>
    %95 = arith.addf %90, %94 : vector<144x128xf32>
    %c27_87 = arith.constant 27 : index
    %c0_88 = arith.constant 0 : index
    %96 = vector.load %arg9[%c27_87, %c0_88] : memref<196x128xf32, #tpu.memory_space<vmem>>, vector<144x128xf32>
    %c5_89 = arith.constant 5 : index
    %c0_90 = arith.constant 0 : index
    %c0_91 = arith.constant 0 : index
    %97 = vector.load %arg6[%c5_89, %c0_90, %c0_91] : memref<9x128x128xf32, #tpu.memory_space<vmem>>, vector<1x128x128xf32>
    %98 = vector.shape_cast %97 : vector<1x128x128xf32> to vector<128x128xf32>
    %cst_92 = arith.constant dense<0.000000e+00> : vector<144x128xf32>
    %99 = tpu.matmul %96, %98, %cst_92 {dimension_numbers = #tpu.dot_dimension_numbers<[1], [0], [0], [1], [0, 0, 1, 1], [], []>} : vector<144x128xf32>, vector<128x128xf32>, vector<144x128xf32> -> vector<144x128xf32>
    %100 = arith.addf %95, %99 : vector<144x128xf32>
    %c43_93 = arith.constant 43 : index
    %c0_94 = arith.constant 0 : index
    %101 = vector.load %arg9[%c43_93, %c0_94] : memref<196x128xf32, #tpu.memory_space<vmem>>, vector<144x128xf32>
    %c6_95 = arith.constant 6 : index
    %c0_96 = arith.constant 0 : index
    %c0_97 = arith.constant 0 : index
    %102 = vector.load %arg6[%c6_95, %c0_96, %c0_97] : memref<9x128x128xf32, #tpu.memory_space<vmem>>, vector<1x128x128xf32>
    %103 = vector.shape_cast %102 : vector<1x128x128xf32> to vector<128x128xf32>
    %cst_98 = arith.constant dense<0.000000e+00> : vector<144x128xf32>
    %104 = tpu.matmul %101, %103, %cst_98 {dimension_numbers = #tpu.dot_dimension_numbers<[1], [0], [0], [1], [0, 0, 1, 1], [], []>} : vector<144x128xf32>, vector<128x128xf32>, vector<144x128xf32> -> vector<144x128xf32>
    %105 = arith.addf %100, %104 : vector<144x128xf32>
    %c44_99 = arith.constant 44 : index
    %c0_100 = arith.constant 0 : index
    %106 = vector.load %arg9[%c44_99, %c0_100] : memref<196x128xf32, #tpu.memory_space<vmem>>, vector<144x128xf32>
    %c7_101 = arith.constant 7 : index
    %c0_102 = arith.constant 0 : index
    %c0_103 = arith.constant 0 : index
    %107 = vector.load %arg6[%c7_101, %c0_102, %c0_103] : memref<9x128x128xf32, #tpu.memory_space<vmem>>, vector<1x128x128xf32>
    %108 = vector.shape_cast %107 : vector<1x128x128xf32> to vector<128x128xf32>
    %cst_104 = arith.constant dense<0.000000e+00> : vector<144x128xf32>
    %109 = tpu.matmul %106, %108, %cst_104 {dimension_numbers = #tpu.dot_dimension_numbers<[1], [0], [0], [1], [0, 0, 1, 1], [], []>} : vector<144x128xf32>, vector<128x128xf32>, vector<144x128xf32> -> vector<144x128xf32>
    %110 = arith.addf %105, %109 : vector<144x128xf32>
    %c45_105 = arith.constant 45 : index
    %c0_106 = arith.constant 0 : index
    %111 = vector.load %arg9[%c45_105, %c0_106] : memref<196x128xf32, #tpu.memory_space<vmem>>, vector<144x128xf32>
    %c8_107 = arith.constant 8 : index
    %c0_108 = arith.constant 0 : index
    %c0_109 = arith.constant 0 : index
    %112 = vector.load %arg6[%c8_107, %c0_108, %c0_109] : memref<9x128x128xf32, #tpu.memory_space<vmem>>, vector<1x128x128xf32>
    %113 = vector.shape_cast %112 : vector<1x128x128xf32> to vector<128x128xf32>
    %cst_110 = arith.constant dense<0.000000e+00> : vector<144x128xf32>
    %114 = tpu.matmul %111, %113, %cst_110 {dimension_numbers = #tpu.dot_dimension_numbers<[1], [0], [0], [1], [0, 0, 1, 1], [], []>} : vector<144x128xf32>, vector<128x128xf32>, vector<144x128xf32> -> vector<144x128xf32>
    %115 = arith.addf %110, %114 : vector<144x128xf32>
    %c0_111 = arith.constant 0 : index
    %c0_112 = arith.constant 0 : index
    %116 = vector.load %arg7[%c0_111, %c0_112] : memref<1x128xf32, #tpu.memory_space<vmem>>, vector<1x128xf32>
    %117 = vector.broadcast %116 : vector<1x128xf32> to vector<144x128xf32>
    %118 = arith.addf %115, %117 : vector<144x128xf32>
    %cst_113 = arith.constant 0.000000e+00 : f32
    %119 = vector.broadcast %cst_113 : f32 to vector<144x128xf32>
    %120 = arith.maximumf %118, %119 : vector<144x128xf32>
    %c0_114 = arith.constant 0 : index
    %c0_115 = arith.constant 0 : index
    %c0_116 = arith.constant 0 : index
    %121 = vector.load %arg8[%c0_114, %c0_115, %c0_116] : memref<1x144x128xf32, #tpu.memory_space<vmem>>, vector<1x144x128xf32>
    %122 = vector.shape_cast %121 : vector<1x144x128xf32> to vector<144x128xf32>
    %123 = vector.shape_cast %120 : vector<144x128xf32> to vector<1x144x128xf32>
    tpu.vector_store %arg8[%c0_114, %c0_115, %c0_116], %123 {strides = array<i32>} : memref<1x144x128xf32, #tpu.memory_space<vmem>>, vector<1x144x128xf32>,
    return
  }
  func.func @transform_0(%arg0: i32, %arg1: i32) -> (i32, i32, i32) {
    %c2_i32 = arith.constant 2 : i32
    %0 = arith.muli %arg0, %c2_i32 : i32
    %1 = arith.addi %0, %arg1 : i32
    %c0_i32 = arith.constant 0 : i32
    %c0_i32_0 = arith.constant 0 : i32
    %c0_i32_1 = arith.constant 0 : i32
    return %1, %c0_i32, %c0_i32_0 : i32, i32, i32
  }
  func.func @transform_1(%arg0: i32, %arg1: i32) -> (i32, i32) {
    %c0_i32 = arith.constant 0 : i32
    %c0_i32_0 = arith.constant 0 : i32
    %c0_i32_1 = arith.constant 0 : i32
    return %c0_i32, %c0_i32_0 : i32, i32
  }
  func.func @transform_2(%arg0: i32, %arg1: i32) -> (i32, i32, i32) {
    %c0_i32 = arith.constant 0 : i32
    %c0_i32_0 = arith.constant 0 : i32
    %c0_i32_1 = arith.constant 0 : i32
    %c0_i32_2 = arith.constant 0 : i32
    return %c0_i32, %c0_i32_0, %c0_i32_1 : i32, i32, i32
  }
  func.func @transform_3(%arg0: i32, %arg1: i32) -> (i32, i32) {
    %c0_i32 = arith.constant 0 : i32
    %c0_i32_0 = arith.constant 0 : i32
    %c0_i32_1 = arith.constant 0 : i32
    return %c0_i32, %c0_i32_0 : i32, i32
  }
  func.func @transform_4(%arg0: i32, %arg1: i32) -> (i32, i32, i32) {
    %c0_i32 = arith.constant 0 : i32
    %c0_i32_0 = arith.constant 0 : i32
    %c0_i32_1 = arith.constant 0 : i32
    %c0_i32_2 = arith.constant 0 : i32
    return %c0_i32, %c0_i32_0, %c0_i32_1 : i32, i32, i32
  }
  func.func @transform_5(%arg0: i32, %arg1: i32) -> (i32, i32) {
    %c0_i32 = arith.constant 0 : i32
    %c0_i32_0 = arith.constant 0 : i32
    %c0_i32_1 = arith.constant 0 : i32
    return %c0_i32, %c0_i32_0 : i32, i32
  }
  func.func @transform_6(%arg0: i32, %arg1: i32) -> (i32, i32, i32) {
    %c2_i32 = arith.constant 2 : i32
    %0 = arith.muli %arg0, %c2_i32 : i32
    %1 = arith.addi %0, %arg1 : i32
    %c0_i32 = arith.constant 0 : i32
    %c0_i32_0 = arith.constant 0 : i32
    %c0_i32_1 = arith.constant 0 : i32
    return %1, %c0_i32, %c0_i32_0 : i32, i32, i32
  }
}

</mosaic_0001>

<llo_original>
// kernel: tpu_custom_call.1
$region0: #{tpu_custom_call.1}
  #allocation0 [shape = 'u32[]', space=smem, size = 0x4, offset = 0x4, fixed_abs, tag = 'smem constant byte address 0x4 - core index']
  #allocation1 [shape = 'u32[144,128]{1,0:T(1,128)}', space=vmem, size = 0x12000, scoped, tag = 'internal scratch']
  #allocation2 [shape = 'f32[196,128]{1,0:T(8,128)}', space=vmem, size = 0x19000, scoped, tag = 'scratch operand']
  %s0 = inlined_call_operand.hbm [shape: f32[4,232,128], index: 0, kind: input, shape index: {}]
  %s1 = inlined_call_operand.vmem [shape: f32[180,1], index: 1, kind: input, shape index: {}]
  %s2 = inlined_call_operand.hbm [shape: f32[9,128,128], index: 2, kind: input, shape index: {}]
  %s3 = inlined_call_operand.vmem [shape: f32[1,128], index: 3, kind: input, shape index: {}]
  %s4 = inlined_call_operand.hbm [shape: f32[9,128,128], index: 4, kind: input, shape index: {}]
  %s5 = inlined_call_operand.vmem [shape: f32[1,128], index: 5, kind: input, shape index: {}]
  %s6 = inlined_call_operand.hbm [shape: f32[4,144,128], index: 6, kind: output, shape index: {}]
  %s7 = sld [smem:[#allocation0]]
  $region77: #{tpu_custom_call.1} parent=0
    _
  %s9 = ssub.s32 1, %s7
  %s10 = scalar_select 0, %s9, %s7
  $region1: #{tpu_custom_call.1} parent=0
    #allocation3 [shape = 'u8[237568]{0}', space=vmem, size = 0x3a000, scoped, tag = 'input window, operand 0']
    #allocation4 [shape = 's32[2]{0}', space=sflag, size = 0x8, scoped, tag = 'scoped memory for tpu_custom_call.1']
    #allocation5 [shape = 's32[2]{0}', space=sflag, size = 0x8, scoped, tag = 'scoped memory for tpu_custom_call.1']
    #allocation6 [shape = 'u8[589824]{0}', space=vmem, size = 0x90000, scoped, tag = 'input window, operand 2, single buffered']
    #allocation7 [shape = 's32[1]{0}', space=sflag, size = 0x4, scoped, tag = 'scoped memory for tpu_custom_call.1']
    #allocation8 [shape = 'u8[589824]{0}', space=vmem, size = 0x90000, scoped, tag = 'input window, operand 4, single buffered']
    #allocation9 [shape = 'u8[147456]{0}', space=vmem, size = 0x24000, scoped, tag = 'output window, operand 0']
    %11 = vsyncpa [#allocation4], 0
    %s12 = scalar_lea.sflag [#allocation4], 1
    %13 = vsyncpa %s12, 0
    %14 = vsyncpa [#allocation7], 0
    %15 = vsyncpa [#allocation5], 0
    %s16 = scalar_lea.sflag [#allocation5], 1
    %17 = vsyncpa %s16, 0
    loop: start=0, step=1, limit=6
    $region2: #{tpu_custom_call.1} parent=1 // loop_pre_header
      _
    $region3: #{tpu_custom_call.1} parent=1 // loop_header
      %s19 = sphi 0, %s23
      %p20 = scmp.ge.s32.totalorder %s19, 6
      %s26 = sphi 0, %s38
      %s27 = sphi 0, %s34
      %s28 = sphi 0, %s26
      %s29 = sphi 0, %s27
      %s30 = sphi 0, %s28
      %s31 = sphi 0, %s29
      %s45 = sphi 0, %s47
      %s48 = sphi 0, %s45
      %s49 = sphi 0, %s48
      %s65 = sphi 0, %s49
      %s69 = sphi 0, %s69
      %s71 = sphi 0, %s69
      %s72 = sphi 0, %s71
      %s86 = sphi 0, %s72
      %s90 = sphi 0, %s90
      %s92 = sphi 0, %s90
      %s93 = sphi 0, %s92
      %s107 = sphi 0, %s93
      %s111 = sphi 0, %s111
      %s113 = sphi 0, %s111
      %s114 = sphi 0, %s113
      %s128 = sphi 0, %s114
      %s132 = sphi 0, %s132
      %s134 = sphi 0, %s132
      %s135 = sphi 0, %s134
      %s149 = sphi 0, %s135
      %s153 = sphi 0, %s153
      %s155 = sphi 0, %s153
      %s156 = sphi 0, %s155
      %s170 = sphi 0, %s156
      %s180 = sphi 0, %s182
      %s183 = sphi 0, %s180
      %s184 = sphi 0, %s183
      %s200 = sphi 0, %s184
    $region4: #{tpu_custom_call.1} parent=1 // loop_header_branch
      %22 = sbr.rel (%p20) target = $region8
    $region5: #{tpu_custom_call.1} parent=1 // loop_body
      %s24 = ssub.s32 %s19, 1
      %s25 = ssub.s32 %s19, 2
      %s32 = sadd.s32 1, %s27
      %p33 = scmp.ge.s32.totalorder %s32, 2
      %s34 = scalar_select %p33, 0, %s32
      %s35 = sadd.s32 1, %s26
      %s36 = scalar_select %p33, %s35, %s26
      %p37 = scmp.ge.s32.totalorder %s36, 2
      %s38 = scalar_select %p37, 0, %s36
      %s39 = smul.u32 %s26, 2
      %s40 = sadd.s32 %s39, %s27
      %s41 = smul.u32 %s38, 2
      %s42 = sadd.s32 %s41, %s34
      %s43 = ssub.s32 %s40, %s42
      %p44 = scmp.eq.s32.totalorder %s43, 0
      %s46 = sadd.s32 %s45, 1
      %s47 = scalar_select %p44, %s45, %s46
      %p50 = pneg %p44
      %p51 = scmp.eq.s32.totalorder %s19, 3
      %p52 = por %p50, %p51
      %p53 = scmp.ne.s32.totalorder %s45, %s48
      %p54 = scmp.eq.s32.totalorder %s19, 0
      %p55 = por %p53, %p54
      %p56 = scmp.ne.s32.totalorder %s45, %s48
      %p57 = scmp.eq.s32.totalorder %s24, 3
      %p58 = por %p56, %p57
      %p59 = scmp.ne.s32.totalorder %s48, %s49
      %p60 = scmp.eq.s32.totalorder %s24, 0
      %p61 = por %p59, %p60
      %p62 = scmp.ne.s32.totalorder %s48, %s49
      %p63 = scmp.eq.s32.totalorder %s25, 3
      %p64 = por %p62, %p63
      %p66 = scmp.ne.s32.totalorder %s49, %s65
      %p67 = scmp.eq.s32.totalorder %s25, 0
      %p68 = por %p66, %p67
      %s70 = sadd.s32 %s69, 1
      %p73 = scmp.eq.s32.totalorder %s19, 3
      %p74 = scmp.ne.s32.totalorder %s69, %s71
      %p75 = scmp.eq.s32.totalorder %s19, 0
      %p76 = por %p74, %p75
      %p77 = scmp.ne.s32.totalorder %s69, %s71
      %p78 = scmp.eq.s32.totalorder %s24, 3
      %p79 = por %p77, %p78
      %p80 = scmp.ne.s32.totalorder %s71, %s72
      %p81 = scmp.eq.s32.totalorder %s24, 0
      %p82 = por %p80, %p81
      %p83 = scmp.ne.s32.totalorder %s71, %s72
      %p84 = scmp.eq.s32.totalorder %s25, 3
      %p85 = por %p83, %p84
      %p87 = scmp.ne.s32.totalorder %s72, %s86
      %p88 = scmp.eq.s32.totalorder %s25, 0
      %p89 = por %p87, %p88
      %s91 = sadd.s32 %s90, 1
      %p94 = scmp.eq.s32.totalorder %s19, 3
      %p95 = scmp.ne.s32.totalorder %s90, %s92
      %p96 = scmp.eq.s32.totalorder %s19, 0
      %p97 = por %p95, %p96
      %p98 = scmp.ne.s32.totalorder %s90, %s92
      %p99 = scmp.eq.s32.totalorder %s24, 3
      %p100 = por %p98, %p99
      %p101 = scmp.ne.s32.totalorder %s92, %s93
      %p102 = scmp.eq.s32.totalorder %s24, 0
      %p103 = por %p101, %p102
      %p104 = scmp.ne.s32.totalorder %s92, %s93
      %p105 = scmp.eq.s32.totalorder %s25, 3
      %p106 = por %p104, %p105
      %p108 = scmp.ne.s32.totalorder %s93, %s107
      %p109 = scmp.eq.s32.totalorder %s25, 0
      %p110 = por %p108, %p109
      %s112 = sadd.s32 %s111, 1
      %p115 = scmp.eq.s32.totalorder %s19, 3
      %p116 = scmp.ne.s32.totalorder %s111, %s113
      %p117 = scmp.eq.s32.totalorder %s19, 0
      %p118 = por %p116, %p117
      %p119 = scmp.ne.s32.totalorder %s111, %s113
      %p120 = scmp.eq.s32.totalorder %s24, 3
      %p121 = por %p119, %p120
      %p122 = scmp.ne.s32.totalorder %s113, %s114
      %p123 = scmp.eq.s32.totalorder %s24, 0
      %p124 = por %p122, %p123
      %p125 = scmp.ne.s32.totalorder %s113, %s114
      %p126 = scmp.eq.s32.totalorder %s25, 3
      %p127 = por %p125, %p126
      %p129 = scmp.ne.s32.totalorder %s114, %s128
      %p130 = scmp.eq.s32.totalorder %s25, 0
      %p131 = por %p129, %p130
      %s133 = sadd.s32 %s132, 1
      %p136 = scmp.eq.s32.totalorder %s19, 3
      %p137 = scmp.ne.s32.totalorder %s132, %s134
      %p138 = scmp.eq.s32.totalorder %s19, 0
      %p139 = por %p137, %p138
      %p140 = scmp.ne.s32.totalorder %s132, %s134
      %p141 = scmp.eq.s32.totalorder %s24, 3
      %p142 = por %p140, %p141
      %p143 = scmp.ne.s32.totalorder %s134, %s135
      %p144 = scmp.eq.s32.totalorder %s24, 0
      %p145 = por %p143, %p144
      %p146 = scmp.ne.s32.totalorder %s134, %s135
      %p147 = scmp.eq.s32.totalorder %s25, 3
      %p148 = por %p146, %p147
      %p150 = scmp.ne.s32.totalorder %s135, %s149
      %p151 = scmp.eq.s32.totalorder %s25, 0
      %p152 = por %p150, %p151
      %s154 = sadd.s32 %s153, 1
      %p157 = scmp.eq.s32.totalorder %s19, 3
      %p158 = scmp.ne.s32.totalorder %s153, %s155
      %p159 = scmp.eq.s32.totalorder %s19, 0
      %p160 = por %p158, %p159
      %p161 = scmp.ne.s32.totalorder %s153, %s155
      %p162 = scmp.eq.s32.totalorder %s24, 3
      %p163 = por %p161, %p162
      %p164 = scmp.ne.s32.totalorder %s155, %s156
      %p165 = scmp.eq.s32.totalorder %s24, 0
      %p166 = por %p164, %p165
      %p167 = scmp.ne.s32.totalorder %s155, %s156
      %p168 = scmp.eq.s32.totalorder %s25, 3
      %p169 = por %p167, %p168
      %p171 = scmp.ne.s32.totalorder %s156, %s170
      %p172 = scmp.eq.s32.totalorder %s25, 0
      %p173 = por %p171, %p172
      %s174 = smul.u32 %s26, 2
      %s175 = sadd.s32 %s174, %s27
      %s176 = smul.u32 %s38, 2
      %s177 = sadd.s32 %s176, %s34
      %s178 = ssub.s32 %s175, %s177
      %p179 = scmp.eq.s32.totalorder %s178, 0
      %s181 = sadd.s32 %s180, 1
      %s182 = scalar_select %p179, %s180, %s181
      %p185 = pneg %p179
      %p186 = scmp.eq.s32.totalorder %s19, 3
      %p187 = por %p185, %p186
      %p188 = scmp.ne.s32.totalorder %s180, %s183
      %p189 = scmp.eq.s32.totalorder %s19, 0
      %p190 = por %p188, %p189
      %p191 = scmp.ne.s32.totalorder %s180, %s183
      %p192 = scmp.eq.s32.totalorder %s24, 3
      %p193 = por %p191, %p192
      %p194 = scmp.ne.s32.totalorder %s183, %s184
      %p195 = scmp.eq.s32.totalorder %s24, 0
      %p196 = por %p194, %p195
      %p197 = scmp.ne.s32.totalorder %s183, %s184
      %p198 = scmp.eq.s32.totalorder %s25, 3
      %p199 = por %p197, %p198
      %p201 = scmp.ne.s32.totalorder %s184, %s200
      %p202 = scmp.eq.s32.totalorder %s25, 0
      %p203 = por %p201, %p202
      %p204 = scmp.le.s32.totalorder 1, %s19
      %p205 = scmp.lt.s32.totalorder %s19, 5
      %p206 = pnand %p204, %p205
      %p207 = pneg %p206
      // Predicated region
      $region9: #{tpu_custom_call.1} parent=5 // pred_check
        _
      $region10: #{tpu_custom_call.1} parent=5 // pred_check_branch
        %209 = sbr.rel (%p206) target = $region12
      $region11: #{tpu_custom_call.1} parent=5 // pred_region
        %s210 = ssub.s32 %s19, 1
        // Predicated region
        $region13: #{tpu_custom_call.1} parent=11 // pred_check
          %p211 = pneg %p82
        $region14: #{tpu_custom_call.1} parent=11 // pred_check_branch
          %213 = sbr.rel (%p211) target = $region16
        $region15: #{tpu_custom_call.1} parent=11 // pred_region
          _
        $region16: #{tpu_custom_call.1} parent=11 // pred_fallthru
          _
        // Predicated region
        $region17: #{tpu_custom_call.1} parent=11 // pred_check
          %p214 = pneg %p103
        $region18: #{tpu_custom_call.1} parent=11 // pred_check_branch
          %216 = sbr.rel (%p214) target = $region20
        $region19: #{tpu_custom_call.1} parent=11 // pred_region
          %s218 = ssub.s32 18432, 18432
          %219 = vsyncadd [#allocation7], %s218
          %s220 = sshll.u32 [#allocation6], 4
          %s221 = int_to_ptr.vmem [resolvable:$true] %s220
          %226 = dma.hbm_to_vmem [thread:$0]  %s2, 18432, %s221, [#allocation7], 128, 128, 8
        $region20: #{tpu_custom_call.1} parent=11 // pred_fallthru
          _
        // Predicated region
        $region21: #{tpu_custom_call.1} parent=11 // pred_check
          %p227 = pneg %p124
        $region22: #{tpu_custom_call.1} parent=11 // pred_check_branch
          %229 = sbr.rel (%p227) target = $region24
        $region23: #{tpu_custom_call.1} parent=11 // pred_region
          _
        $region24: #{tpu_custom_call.1} parent=11 // pred_fallthru
          _
        // Predicated region
        $region25: #{tpu_custom_call.1} parent=11 // pred_check
          %p230 = pneg %p145
        $region26: #{tpu_custom_call.1} parent=11 // pred_check_branch
          %232 = sbr.rel (%p230) target = $region28
        $region27: #{tpu_custom_call.1} parent=11 // pred_region
          %s234 = ssub.s32 18432, 18432
          %235 = vsyncadd [#allocation7], %s234
          %s236 = sshll.u32 [#allocation8], 4
          %s237 = int_to_ptr.vmem [resolvable:$true] %s236
          %242 = dma.hbm_to_vmem [thread:$0]  %s4, 18432, %s237, [#allocation7], 128, 128, 8
        $region28: #{tpu_custom_call.1} parent=11 // pred_fallthru
          _
        // Predicated region
        $region29: #{tpu_custom_call.1} parent=11 // pred_check
          %p243 = pneg %p166
        $region30: #{tpu_custom_call.1} parent=11 // pred_check_branch
          %245 = sbr.rel (%p243) target = $region32
        $region31: #{tpu_custom_call.1} parent=11 // pred_region
          _
        $region32: #{tpu_custom_call.1} parent=11 // pred_fallthru
          _
      $region12: #{tpu_custom_call.1} parent=5 // pred_fallthru
        _
      %p246 = scmp.lt.s32.totalorder %s19, 4
      // Predicated region
      $region33: #{tpu_custom_call.1} parent=5 // pred_check
        %p247 = pneg %p246
      $region34: #{tpu_custom_call.1} parent=5 // pred_check_branch
        %249 = sbr.rel (%p247) target = $region36
      $region35: #{tpu_custom_call.1} parent=5 // pred_region
        // Predicated region
        $region37: #{tpu_custom_call.1} parent=35 // pred_check
          %p250 = pneg %p55
        $region38: #{tpu_custom_call.1} parent=35 // pred_check_branch
          %252 = sbr.rel (%p250) target = $region40
        $region39: #{tpu_custom_call.1} parent=35 // pred_region
          %s253 = sand.u32 %s45, 1
          %s254 = scalar_lea.sflag [#allocation4], %s253
          %s255 = sand.u32 %s45, 1
          %s256 = smul.addr %s255, 232
          %s257 = scalar_lea.vmem [#allocation3], %s256
          %s258 = smul.u32 %s26, 2
          %s259 = sadd.s32 %s258, %s27
          %s261 = ssub.s32 3712, 3712
          %262 = vsyncadd %s254, %s261
          %s263 = smul.addr %s259, 29
          %s264 = smul.addr %s263, 128
          %s265 = scalar_lea.hbm %s0, %s264
          %s266 = sshll.u32 %s257, 4
          %s267 = int_to_ptr.vmem [resolvable:$true] %s266
          %272 = dma.hbm_to_vmem [thread:$0]  %s265, 3712, %s267, %s254, 128, 128, 8
        $region40: #{tpu_custom_call.1} parent=35 // pred_fallthru
          _
      $region36: #{tpu_custom_call.1} parent=5 // pred_fallthru
        _
      %p273 = scmp.le.s32.totalorder 1, %s19
      %p274 = scmp.lt.s32.totalorder %s19, 5
      %p275 = pnand %p273, %p274
      %p276 = pneg %p275
      // Predicated region
      $region41: #{tpu_custom_call.1} parent=5 // pred_check
        _
      $region42: #{tpu_custom_call.1} parent=5 // pred_check_branch
        %278 = sbr.rel (%p275) target = $region44
      $region43: #{tpu_custom_call.1} parent=5 // pred_region
        %s279 = ssub.s32 %s19, 1
        %s280 = sand.u32 %s48, 1
        %s281 = scalar_lea.sflag [#allocation4], %s280
        %s282 = sand.u32 %s48, 1
        %s283 = smul.addr %s282, 232
        %s284 = scalar_lea.vmem [#allocation3], %s283
        // Predicated region
        $region45: #{tpu_custom_call.1} parent=43 // pred_check
          %p285 = pneg %p61
        $region46: #{tpu_custom_call.1} parent=43 // pred_check_branch
          %287 = sbr.rel (%p285) target = $region48
        $region47: #{tpu_custom_call.1} parent=43 // pred_region
          %288 = dma.done %s281, 3712
        $region48: #{tpu_custom_call.1} parent=43 // pred_fallthru
          _
        // Predicated region
        $region49: #{tpu_custom_call.1} parent=43 // pred_check
          %p289 = pneg %p103
        $region50: #{tpu_custom_call.1} parent=43 // pred_check_branch
          %291 = sbr.rel (%p289) target = $region52
        $region51: #{tpu_custom_call.1} parent=43 // pred_region
          %292 = dma.done [#allocation7], 18432
        $region52: #{tpu_custom_call.1} parent=43 // pred_fallthru
          _
        // Predicated region
        $region53: #{tpu_custom_call.1} parent=43 // pred_check
          %p293 = pneg %p145
        $region54: #{tpu_custom_call.1} parent=43 // pred_check_branch
          %295 = sbr.rel (%p293) target = $region56
        $region55: #{tpu_custom_call.1} parent=43 // pred_region
          %296 = dma.done [#allocation7], 18432
        $region56: #{tpu_custom_call.1} parent=43 // pred_fallthru
          _
        %s297 = sand.u32 %s48, 1
        %s298 = scalar_lea.sflag [#allocation4], %s297
        %s299 = sand.u32 %s48, 1
        %s300 = smul.addr %s299, 232
        %s301 = scalar_lea.vmem [#allocation3], %s300
        %p302 = pneg %p61
        %p303 = pneg %p58
        %p304 = pneg %p82
        %p305 = pneg %p79
        %p306 = pneg %p103
        %p307 = pneg %p100
        %p308 = pneg %p124
        %p309 = pneg %p121
        %p310 = pneg %p145
        %p311 = pneg %p142
        %p312 = pneg %p166
        %p313 = pneg %p163
        %p314 = pneg %p196
        %p315 = pneg %p193
        %s316 = sand.u32 %s183, 1
        %s317 = scalar_lea.sflag [#allocation5], %s316
        %s318 = sand.u32 %s183, 1
        %s319 = smul.addr %s318, 144
        %s320 = scalar_lea.vmem [#allocation9], %s319
        %s321 = smul.u32 %s28, 2
        %s322 = sadd.s32 %s321, %s29
        %s323 = smul.u32 %s28, 2
        %s324 = sadd.s32 %s323, %s29
        %v325 = vld [vmem:[%s284 + $0x7] sm:$0xff]
        %v326 = vld [vmem:[%s284 + $0xf] sm:$0xff]
        %v327 = vld [vmem:[%s284 + $0x17] sm:$0xff]
        %v328 = vld [vmem:[%s284 + $0x1f] sm:$0xff]
        %v329 = vld [vmem:[%s284 + $0x27] sm:$0xff]
        %v330 = vld [vmem:[%s284 + $0x2f] sm:$0xff]
        %v331 = vld [vmem:[%s284 + $0x37] sm:$0xff]
        %v332 = vld [vmem:[%s284 + $0x3f] sm:$0xff]
        %v333 = vld [vmem:[%s284 + $0x47] sm:$0xff]
        %v334 = vld [vmem:[%s284 + $0x4f] sm:$0xff]
        %v335 = vld [vmem:[%s284 + $0x57] sm:$0xff]
        %v336 = vld [vmem:[%s284 + $0x5f] sm:$0xff]
        %v337 = vld [vmem:[%s284 + $0x67] sm:$0xff]
        %v338 = vld [vmem:[%s284 + $0x6f] sm:$0xff]
        %v339 = vld [vmem:[%s284 + $0x77] sm:$0xff]
        %v340 = vld [vmem:[%s284 + $0x7f] sm:$0xff]
        %v341 = vld [vmem:[%s284 + $0x87] sm:$0xff]
        %v342 = vld [vmem:[%s284 + $0x8f] sm:$0xff]
        %v343 = vld [vmem:[%s284 + $0x97] sm:$0xff]
        %v344 = vld [vmem:[%s284 + $0x9f] sm:$0xff]
        %v345 = vld [vmem:[%s284 + $0xa7] sm:$0xff]
        %v346 = vld [vmem:[%s284 + $0xaf] sm:$0xff]
        %v347 = vld [vmem:[%s284 + $0xb7] sm:$0xf]
        %v348 = vld [vmem:[#allocation6] sm:$0xff]
        %v349 = vld [vmem:[#allocation6 + $0x8] sm:$0xff]
        %v350 = vld [vmem:[#allocation6 + $0x10] sm:$0xff]
        %v351 = vld [vmem:[#allocation6 + $0x18] sm:$0xff]
        %v352 = vld [vmem:[#allocation6 + $0x20] sm:$0xff]
        %v353 = vld [vmem:[#allocation6 + $0x28] sm:$0xff]
        %v354 = vld [vmem:[#allocation6 + $0x30] sm:$0xff]
        %v355 = vld [vmem:[#allocation6 + $0x38] sm:$0xff]
        %v356 = vld [vmem:[#allocation6 + $0x40] sm:$0xff]
        %v357 = vld [vmem:[#allocation6 + $0x48] sm:$0xff]
        %v358 = vld [vmem:[#allocation6 + $0x50] sm:$0xff]
        %v359 = vld [vmem:[#allocation6 + $0x58] sm:$0xff]
        %v360 = vld [vmem:[#allocation6 + $0x60] sm:$0xff]
        %v361 = vld [vmem:[#allocation6 + $0x68] sm:$0xff]
        %v362 = vld [vmem:[#allocation6 + $0x70] sm:$0xff]
        %v363 = vld [vmem:[#allocation6 + $0x78] sm:$0xff]
        %v364 = vld [vmem:[%s284 + $0x8] sm:$0xff]
        %v365 = vld [vmem:[%s284 + $0x10] sm:$0xff]
        %v366 = vld [vmem:[%s284 + $0x18] sm:$0xff]
        %v367 = vld [vmem:[%s284 + $0x20] sm:$0xff]
        %v368 = vld [vmem:[%s284 + $0x28] sm:$0xff]
        %v369 = vld [vmem:[%s284 + $0x30] sm:$0xff]
        %v370 = vld [vmem:[%s284 + $0x38] sm:$0xff]
        %v371 = vld [vmem:[%s284 + $0x40] sm:$0xff]
        %v372 = vld [vmem:[%s284 + $0x48] sm:$0xff]
        %v373 = vld [vmem:[%s284 + $0x50] sm:$0xff]
        %v374 = vld [vmem:[%s284 + $0x58] sm:$0xff]
        %v375 = vld [vmem:[%s284 + $0x60] sm:$0xff]
        %v376 = vld [vmem:[%s284 + $0x68] sm:$0xff]
        %v377 = vld [vmem:[%s284 + $0x70] sm:$0xff]
        %v378 = vld [vmem:[%s284 + $0x78] sm:$0xff]
        %v379 = vld [vmem:[%s284 + $0x80] sm:$0xff]
        %v380 = vld [vmem:[%s284 + $0x88] sm:$0xff]
        %v381 = vld [vmem:[%s284 + $0x90] sm:$0xff]
        %v382 = vld [vmem:[%s284 + $0x98] sm:$0xff]
        %v383 = vld [vmem:[%s284 + $0xa0] sm:$0xff]
        %v384 = vld [vmem:[%s284 + $0xa8] sm:$0xff]
        %v385 = vld [vmem:[%s284 + $0xb0] sm:$0xff]
        %v386 = vld [vmem:[%s284 + $0xb8] sm:$0xf]
        %s387 = scalar_lea.vmem [#allocation6], 128
        %v388 = vld [vmem:[%s387] sm:$0xff]
        %v389 = vld [vmem:[%s387 + $0x8] sm:$0xff]
        %v390 = vld [vmem:[%s387 + $0x10] sm:$0xff]
        %v391 = vld [vmem:[%s387 + $0x18] sm:$0xff]
        %v392 = vld [vmem:[%s387 + $0x20] sm:$0xff]
        %v393 = vld [vmem:[%s387 + $0x28] sm:$0xff]
        %v394 = vld [vmem:[%s387 + $0x30] sm:$0xff]
        %v395 = vld [vmem:[%s387 + $0x38] sm:$0xff]
        %v396 = vld [vmem:[%s387 + $0x40] sm:$0xff]
        %v397 = vld [vmem:[%s387 + $0x48] sm:$0xff]
        %v398 = vld [vmem:[%s387 + $0x50] sm:$0xff]
        %v399 = vld [vmem:[%s387 + $0x58] sm:$0xff]
        %v400 = vld [vmem:[%s387 + $0x60] sm:$0xff]
        %v401 = vld [vmem:[%s387 + $0x68] sm:$0xff]
        %v402 = vld [vmem:[%s387 + $0x70] sm:$0xff]
        %v403 = vld [vmem:[%s387 + $0x78] sm:$0xff]
        %404 = vmatprep.subr.mxu0 0.0
        %405 = vmatpush1.msra.mxu0 %v403
        %406 = vmatprep.subr.mxu0 0.0
        %407 = vmatpush1.msra.mxu0 %v402
        %408 = vmatprep.subr.mxu0 0.0
        %409 = vmatpush1.msra.mxu0 %v401
        %410 = vmatprep.subr.mxu0 0.0
        %411 = vmatpush1.msra.mxu0 %v400
        %412 = vmatprep.subr.mxu0 0.0
        %413 = vmatpush1.msra.mxu0 %v399
        %414 = vmatprep.subr.mxu0 0.0
        %415 = vmatpush1.msra.mxu0 %v398
        %416 = vmatprep.subr.mxu0 0.0
        %417 = vmatpush1.msra.mxu0 %v397
        %418 = vmatprep.subr.mxu0 0.0
        %419 = vmatpush1.msra.mxu0 %v396
        %420 = vmatprep.subr.mxu0 0.0
        %421 = vmatpush1.msra.mxu0 %v395
        %422 = vmatprep.subr.mxu0 0.0
        %423 = vmatpush1.msra.mxu0 %v394
        %424 = vmatprep.subr.mxu0 0.0
        %425 = vmatpush1.msra.mxu0 %v393
        %426 = vmatprep.subr.mxu0 0.0
        %427 = vmatpush1.msra.mxu0 %v392
        %428 = vmatprep.subr.mxu0 0.0
        %429 = vmatpush1.msra.mxu0 %v391
        %430 = vmatprep.subr.mxu0 0.0
        %431 = vmatpush1.msra.mxu0 %v390
        %432 = vmatprep.subr.mxu0 0.0
        %433 = vmatpush1.msra.mxu0 %v389
        %434 = vmatprep.subr.mxu0 0.0
        %435 = vmatpush1.msra.mxu0 %v388
        %436 = vmatprep.subr.mxu0 0.0
        %437 = vmatpush2.msra.mxu0 0.0
        %438 = vmatprep.subr.mxu0 0.0
        %439 = vmatpush2.msra.mxu0 0.0
        %440 = vmatprep.subr.mxu0 0.0
        %441 = vmatpush2.msra.mxu0 0.0
        %442 = vmatprep.subr.mxu0 0.0
        %443 = vmatpush2.msra.mxu0 0.0
        %444 = vmatprep.subr.mxu0 0.0
        %445 = vmatpush2.msra.mxu0 0.0
        %446 = vmatprep.subr.mxu0 0.0
        %447 = vmatpush2.msra.mxu0 0.0
        %448 = vmatprep.subr.mxu0 0.0
        %449 = vmatpush2.msra.mxu0 0.0
        %450 = vmatprep.subr.mxu0 0.0
        %451 = vmatpush2.msra.mxu0 0.0
        %452 = vmatprep.subr.mxu0 0.0
        %453 = vmatpush2.msra.mxu0 0.0
        %454 = vmatprep.subr.mxu0 0.0
        %455 = vmatpush2.msra.mxu0 0.0
        %456 = vmatprep.subr.mxu0 0.0
        %457 = vmatpush2.msra.mxu0 0.0
        %458 = vmatprep.subr.mxu0 0.0
        %459 = vmatpush2.msra.mxu0 0.0
        %460 = vmatprep.subr.mxu0 0.0
        %461 = vmatpush2.msra.mxu0 0.0
        %462 = vmatprep.subr.mxu0 0.0
        %463 = vmatpush2.msra.mxu0 0.0
        %464 = vmatprep.subr.mxu0 0.0
        %465 = vmatpush2.msra.mxu0 0.0
        %466 = vmatprep.subr.mxu0 0.0
        %467 = vmatpush2.msra.mxu0 0.0
        %468 = vmatprep.mubr.f32.mxu0 0.0
        %469 = vmatmul.mubr.f32.gmra.mxu0 %v364
        %v470 = vpop.f32.mrf.mxu0
        %v471 = vadd.f32 0.0, %v470
        %v472 = vpop.f32.mrf.mxu0
        %473 = vmatprep.mubr.f32.mxu0 0.0
        %474 = vmatmul.mubr.f32.gmra.mxu0 %v365
        %v475 = vpop.f32.mrf.mxu0
        %v476 = vadd.f32 0.0, %v475
        %v477 = vpop.f32.mrf.mxu0
        %478 = vmatprep.mubr.f32.mxu0 0.0
        %479 = vmatmul.mubr.f32.gmra.mxu0 %v366
        %v480 = vpop.f32.mrf.mxu0
        %v481 = vadd.f32 0.0, %v480
        %v482 = vpop.f32.mrf.mxu0
        %483 = vmatprep.mubr.f32.mxu0 0.0
        %484 = vmatmul.mubr.f32.gmra.mxu0 %v367
        %v485 = vpop.f32.mrf.mxu0
        %v486 = vadd.f32 0.0, %v485
        %v487 = vpop.f32.mrf.mxu0
        %488 = vmatprep.mubr.f32.mxu0 0.0
        %489 = vmatmul.mubr.f32.gmra.mxu0 %v368
        %v490 = vpop.f32.mrf.mxu0
        %v491 = vadd.f32 0.0, %v490
        %v492 = vpop.f32.mrf.mxu0
        %493 = vmatprep.mubr.f32.mxu0 0.0
        %494 = vmatmul.mubr.f32.gmra.mxu0 %v369
        %v495 = vpop.f32.mrf.mxu0
        %v496 = vadd.f32 0.0, %v495
        %v497 = vpop.f32.mrf.mxu0
        %498 = vmatprep.mubr.f32.mxu0 0.0
        %499 = vmatmul.mubr.f32.gmra.mxu0 %v370
        %v500 = vpop.f32.mrf.mxu0
        %v501 = vadd.f32 0.0, %v500
        %v502 = vpop.f32.mrf.mxu0
        %503 = vmatprep.mubr.f32.mxu0 0.0
        %504 = vmatmul.mubr.f32.gmra.mxu0 %v371
        %v505 = vpop.f32.mrf.mxu0
        %v506 = vadd.f32 0.0, %v505
        %v507 = vpop.f32.mrf.mxu0
        %508 = vmatprep.mubr.f32.mxu0 0.0
        %509 = vmatmul.mubr.f32.gmra.mxu0 %v372
        %v510 = vpop.f32.mrf.mxu0
        %v511 = vadd.f32 0.0, %v510
        %v512 = vpop.f32.mrf.mxu0
        %513 = vmatprep.mubr.f32.mxu0 0.0
        %514 = vmatmul.mubr.f32.gmra.mxu0 %v373
        %v515 = vpop.f32.mrf.mxu0
        %v516 = vadd.f32 0.0, %v515
        %v517 = vpop.f32.mrf.mxu0
        %518 = vmatprep.mubr.f32.mxu0 0.0
        %519 = vmatmul.mubr.f32.gmra.mxu0 %v374
        %v520 = vpop.f32.mrf.mxu0
        %v521 = vadd.f32 0.0, %v520
        %v522 = vpop.f32.mrf.mxu0
        %523 = vmatprep.mubr.f32.mxu0 0.0
        %524 = vmatmul.mubr.f32.gmra.mxu0 %v375
        %v525 = vpop.f32.mrf.mxu0
        %v526 = vadd.f32 0.0, %v525
        %v527 = vpop.f32.mrf.mxu0
        %528 = vmatprep.mubr.f32.mxu0 0.0
        %529 = vmatmul.mubr.f32.gmra.mxu0 %v376
        %v530 = vpop.f32.mrf.mxu0
        %v531 = vadd.f32 0.0, %v530
        %v532 = vpop.f32.mrf.mxu0
        %533 = vmatprep.mubr.f32.mxu0 0.0
        %534 = vmatmul.mubr.f32.gmra.mxu0 %v377
        %v535 = vpop.f32.mrf.mxu0
        %v536 = vadd.f32 0.0, %v535
        %v537 = vpop.f32.mrf.mxu0
        %538 = vmatprep.mubr.f32.mxu0 0.0
        %539 = vmatmul.mubr.f32.gmra.mxu0 %v378
        %v540 = vpop.f32.mrf.mxu0
        %v541 = vadd.f32 0.0, %v540
        %v542 = vpop.f32.mrf.mxu0
        %543 = vmatprep.mubr.f32.mxu0 0.0
        %544 = vmatmul.mubr.f32.gmra.mxu0 %v379
        %v545 = vpop.f32.mrf.mxu0
        %v546 = vadd.f32 0.0, %v545
        %v547 = vpop.f32.mrf.mxu0
        %548 = vmatprep.mubr.f32.mxu0 0.0
        %549 = vmatmul.mubr.f32.gmra.mxu0 %v380
        %v550 = vpop.f32.mrf.mxu0
        %v551 = vadd.f32 0.0, %v550
        %v552 = vpop.f32.mrf.mxu0
        %553 = vmatprep.mubr.f32.mxu0 0.0
        %554 = vmatmul.mubr.f32.gmra.mxu0 %v381
        %v555 = vpop.f32.mrf.mxu0
        %v556 = vadd.f32 0.0, %v555
        %v557 = vpop.f32.mrf.mxu0
        %558 = vmatprep.mubr.f32.mxu0 0.0
        %559 = vmatmul.mubr.f32.gmra.mxu0 %v382
        %v560 = vpop.f32.mrf.mxu0
        %v561 = vadd.f32 0.0, %v560
        %v562 = vpop.f32.mrf.mxu0
        %563 = vmatprep.mubr.f32.mxu0 0.0
        %564 = vmatmul.mubr.f32.gmra.mxu0 %v383
        %v565 = vpop.f32.mrf.mxu0
        %v566 = vadd.f32 0.0, %v565
        %v567 = vpop.f32.mrf.mxu0
        %568 = vmatprep.mubr.f32.mxu0 0.0
        %569 = vmatmul.mubr.f32.gmra.mxu0 %v384
        %v570 = vpop.f32.mrf.mxu0
        %v571 = vadd.f32 0.0, %v570
        %v572 = vpop.f32.mrf.mxu0
        %573 = vmatprep.mubr.f32.mxu0 0.0
        %574 = vmatmul.mubr.f32.gmra.mxu0 %v385
        %v575 = vpop.f32.mrf.mxu0
        %v576 = vadd.f32 0.0, %v575
        %v577 = vpop.f32.mrf.mxu0
        %578 = vmatprep.mubr.f32.mxu0 0.0
        %579 = vmatmul.mubr.f32.gmra.mxu0 %v386
        %v580 = vpop.f32.mrf.mxu0
        %v581 = vadd.f32 0.0, %v580
        %v582 = vpop.f32.mrf.mxu0
        %583 = vdwg.mxu0
        %584 = vmatprep.subr.mxu0 0.0
        %585 = vmatpush1.msra.mxu0 %v363
        %586 = vmatprep.subr.mxu0 0.0
        %587 = vmatpush1.msra.mxu0 %v362
        %588 = vmatprep.subr.mxu0 0.0
        %589 = vmatpush1.msra.mxu0 %v361
        %590 = vmatprep.subr.mxu0 0.0
        %591 = vmatpush1.msra.mxu0 %v360
        %592 = vmatprep.subr.mxu0 0.0
        %593 = vmatpush1.msra.mxu0 %v359
        %594 = vmatprep.subr.mxu0 0.0
        %595 = vmatpush1.msra.mxu0 %v358
        %596 = vmatprep.subr.mxu0 0.0
        %597 = vmatpush1.msra.mxu0 %v357
        %598 = vmatprep.subr.mxu0 0.0
        %599 = vmatpush1.msra.mxu0 %v356
        %600 = vmatprep.subr.mxu0 0.0
        %601 = vmatpush1.msra.mxu0 %v355
        %602 = vmatprep.subr.mxu0 0.0
        %603 = vmatpush1.msra.mxu0 %v354
        %604 = vmatprep.subr.mxu0 0.0
        %605 = vmatpush1.msra.mxu0 %v353
        %606 = vmatprep.subr.mxu0 0.0
        %607 = vmatpush1.msra.mxu0 %v352
        %608 = vmatprep.subr.mxu0 0.0
        %609 = vmatpush1.msra.mxu0 %v351
        %610 = vmatprep.subr.mxu0 0.0
        %611 = vmatpush1.msra.mxu0 %v350
        %612 = vmatprep.subr.mxu0 0.0
        %613 = vmatpush1.msra.mxu0 %v349
        %614 = vmatprep.subr.mxu0 0.0
        %615 = vmatpush1.msra.mxu0 %v348
        %616 = vmatprep.subr.mxu0 0.0
        %617 = vmatpush2.msra.mxu0 0.0
        %618 = vmatprep.subr.mxu0 0.0
        %619 = vmatpush2.msra.mxu0 0.0
        %620 = vmatprep.subr.mxu0 0.0
        %621 = vmatpush2.msra.mxu0 0.0
        %622 = vmatprep.subr.mxu0 0.0
        %623 = vmatpush2.msra.mxu0 0.0
        %624 = vmatprep.subr.mxu0 0.0
        %625 = vmatpush2.msra.mxu0 0.0
        %626 = vmatprep.subr.mxu0 0.0
        %627 = vmatpush2.msra.mxu0 0.0
        %628 = vmatprep.subr.mxu0 0.0
        %629 = vmatpush2.msra.mxu0 0.0
        %630 = vmatprep.subr.mxu0 0.0
        %631 = vmatpush2.msra.mxu0 0.0
        %632 = vmatprep.subr.mxu0 0.0
        %633 = vmatpush2.msra.mxu0 0.0
        %634 = vmatprep.subr.mxu0 0.0
        %635 = vmatpush2.msra.mxu0 0.0
        %636 = vmatprep.subr.mxu0 0.0
        %637 = vmatpush2.msra.mxu0 0.0
        %638 = vmatprep.subr.mxu0 0.0
        %639 = vmatpush2.msra.mxu0 0.0
        %640 = vmatprep.subr.mxu0 0.0
        %641 = vmatpush2.msra.mxu0 0.0
        %642 = vmatprep.subr.mxu0 0.0
        %643 = vmatpush2.msra.mxu0 0.0
        %644 = vmatprep.subr.mxu0 0.0
        %645 = vmatpush2.msra.mxu0 0.0
        %646 = vmatprep.subr.mxu0 0.0
        %647 = vmatpush2.msra.mxu0 0.0
        %648 = vmatprep.mubr.f32.mxu0 0.0
        %649 = vmatmul.mubr.f32.gmra.mxu0 %v325
        %v650 = vpop.f32.mrf.mxu0
        %v651 = vadd.f32 %v471, %v650
        %v652 = vpop.f32.mrf.mxu0
        %653 = vmatprep.mubr.f32.mxu0 0.0
        %654 = vmatmul.mubr.f32.gmra.mxu0 %v326
        %v655 = vpop.f32.mrf.mxu0
        %v656 = vadd.f32 %v476, %v655
        %v657 = vpop.f32.mrf.mxu0
        %658 = vmatprep.mubr.f32.mxu0 0.0
        %659 = vmatmul.mubr.f32.gmra.mxu0 %v327
        %v660 = vpop.f32.mrf.mxu0
        %v661 = vadd.f32 %v481, %v660
        %v662 = vpop.f32.mrf.mxu0
        %663 = vmatprep.mubr.f32.mxu0 0.0
        %664 = vmatmul.mubr.f32.gmra.mxu0 %v328
        %v665 = vpop.f32.mrf.mxu0
        %v666 = vadd.f32 %v486, %v665
        %v667 = vpop.f32.mrf.mxu0
        %668 = vmatprep.mubr.f32.mxu0 0.0
        %669 = vmatmul.mubr.f32.gmra.mxu0 %v329
        %v670 = vpop.f32.mrf.mxu0
        %v671 = vadd.f32 %v491, %v670
        %v672 = vpop.f32.mrf.mxu0
        %673 = vmatprep.mubr.f32.mxu0 0.0
        %674 = vmatmul.mubr.f32.gmra.mxu0 %v330
        %v675 = vpop.f32.mrf.mxu0
        %v676 = vadd.f32 %v496, %v675
        %v677 = vpop.f32.mrf.mxu0
        %678 = vmatprep.mubr.f32.mxu0 0.0
        %679 = vmatmul.mubr.f32.gmra.mxu0 %v331
        %v680 = vpop.f32.mrf.mxu0
        %v681 = vadd.f32 %v501, %v680
        %v682 = vpop.f32.mrf.mxu0
        %683 = vmatprep.mubr.f32.mxu0 0.0
        %684 = vmatmul.mubr.f32.gmra.mxu0 %v332
        %v685 = vpop.f32.mrf.mxu0
        %v686 = vadd.f32 %v506, %v685
        %v687 = vpop.f32.mrf.mxu0
        %688 = vmatprep.mubr.f32.mxu0 0.0
        %689 = vmatmul.mubr.f32.gmra.mxu0 %v333
        %v690 = vpop.f32.mrf.mxu0
        %v691 = vadd.f32 %v511, %v690
        %v692 = vpop.f32.mrf.mxu0
        %693 = vmatprep.mubr.f32.mxu0 0.0
        %694 = vmatmul.mubr.f32.gmra.mxu0 %v334
        %v695 = vpop.f32.mrf.mxu0
        %v696 = vadd.f32 %v516, %v695
        %v697 = vpop.f32.mrf.mxu0
        %698 = vmatprep.mubr.f32.mxu0 0.0
        %699 = vmatmul.mubr.f32.gmra.mxu0 %v335
        %v700 = vpop.f32.mrf.mxu0
        %v701 = vadd.f32 %v521, %v700
        %v702 = vpop.f32.mrf.mxu0
        %703 = vmatprep.mubr.f32.mxu0 0.0
        %704 = vmatmul.mubr.f32.gmra.mxu0 %v336
        %v705 = vpop.f32.mrf.mxu0
        %v706 = vadd.f32 %v526, %v705
        %v707 = vpop.f32.mrf.mxu0
        %708 = vmatprep.mubr.f32.mxu0 0.0
        %709 = vmatmul.mubr.f32.gmra.mxu0 %v337
        %v710 = vpop.f32.mrf.mxu0
        %v711 = vadd.f32 %v531, %v710
        %v712 = vpop.f32.mrf.mxu0
        %713 = vmatprep.mubr.f32.mxu0 0.0
        %714 = vmatmul.mubr.f32.gmra.mxu0 %v338
        %v715 = vpop.f32.mrf.mxu0
        %v716 = vadd.f32 %v536, %v715
        %v717 = vpop.f32.mrf.mxu0
        %718 = vmatprep.mubr.f32.mxu0 0.0
        %719 = vmatmul.mubr.f32.gmra.mxu0 %v339
        %v720 = vpop.f32.mrf.mxu0
        %v721 = vadd.f32 %v541, %v720
        %v722 = vpop.f32.mrf.mxu0
        %723 = vmatprep.mubr.f32.mxu0 0.0
        %724 = vmatmul.mubr.f32.gmra.mxu0 %v340
        %v725 = vpop.f32.mrf.mxu0
        %v726 = vadd.f32 %v546, %v725
        %v727 = vpop.f32.mrf.mxu0
        %728 = vmatprep.mubr.f32.mxu0 0.0
        %729 = vmatmul.mubr.f32.gmra.mxu0 %v341
        %v730 = vpop.f32.mrf.mxu0
        %v731 = vadd.f32 %v551, %v730
        %v732 = vpop.f32.mrf.mxu0
        %733 = vmatprep.mubr.f32.mxu0 0.0
        %734 = vmatmul.mubr.f32.gmra.mxu0 %v342
        %v735 = vpop.f32.mrf.mxu0
        %v736 = vadd.f32 %v556, %v735
        %v737 = vpop.f32.mrf.mxu0
        %738 = vmatprep.mubr.f32.mxu0 0.0
        %739 = vmatmul.mubr.f32.gmra.mxu0 %v343
        %v740 = vpop.f32.mrf.mxu0
        %v741 = vadd.f32 %v561, %v740
        %v742 = vpop.f32.mrf.mxu0
        %743 = vmatprep.mubr.f32.mxu0 0.0
        %744 = vmatmul.mubr.f32.gmra.mxu0 %v344
        %v745 = vpop.f32.mrf.mxu0
        %v746 = vadd.f32 %v566, %v745
        %v747 = vpop.f32.mrf.mxu0
        %748 = vmatprep.mubr.f32.mxu0 0.0
        %749 = vmatmul.mubr.f32.gmra.mxu0 %v345
        %v750 = vpop.f32.mrf.mxu0
        %v751 = vadd.f32 %v571, %v750
        %v752 = vpop.f32.mrf.mxu0
        %753 = vmatprep.mubr.f32.mxu0 0.0
        %754 = vmatmul.mubr.f32.gmra.mxu0 %v346
        %v755 = vpop.f32.mrf.mxu0
        %v756 = vadd.f32 %v576, %v755
        %v757 = vpop.f32.mrf.mxu0
        %758 = vmatprep.mubr.f32.mxu0 0.0
        %759 = vmatmul.mubr.f32.gmra.mxu0 %v347
        %v760 = vpop.f32.mrf.mxu0
        %v761 = vadd.f32 %v581, %v760
        %v762 = vpop.f32.mrf.mxu0
        %763 = vdwg.mxu0
        %v764 = vld [vmem:[%s284 + $0x9] sm:$0xff]
        %v765 = vld [vmem:[%s284 + $0x11] sm:$0xff]
        %v766 = vld [vmem:[%s284 + $0x19] sm:$0xff]
        %v767 = vld [vmem:[%s284 + $0x21] sm:$0xff]
        %v768 = vld [vmem:[%s284 + $0x29] sm:$0xff]
        %v769 = vld [vmem:[%s284 + $0x31] sm:$0xff]
        %v770 = vld [vmem:[%s284 + $0x39] sm:$0xff]
        %v771 = vld [vmem:[%s284 + $0x41] sm:$0xff]
        %v772 = vld [vmem:[%s284 + $0x49] sm:$0xff]
        %v773 = vld [vmem:[%s284 + $0x51] sm:$0xff]
        %v774 = vld [vmem:[%s284 + $0x59] sm:$0xff]
        %v775 = vld [vmem:[%s284 + $0x61] sm:$0xff]
        %v776 = vld [vmem:[%s284 + $0x69] sm:$0xff]
        %v777 = vld [vmem:[%s284 + $0x71] sm:$0xff]
        %v778 = vld [vmem:[%s284 + $0x79] sm:$0xff]
        %v779 = vld [vmem:[%s284 + $0x81] sm:$0xff]
        %v780 = vld [vmem:[%s284 + $0x89] sm:$0xff]
        %v781 = vld [vmem:[%s284 + $0x91] sm:$0xff]
        %v782 = vld [vmem:[%s284 + $0x99] sm:$0xff]
        %v783 = vld [vmem:[%s284 + $0xa1] sm:$0xff]
        %v784 = vld [vmem:[%s284 + $0xa9] sm:$0xff]
        %v785 = vld [vmem:[%s284 + $0xb1] sm:$0xff]
        %v786 = vld [vmem:[%s284 + $0xb9] sm:$0xf]
        %s787 = scalar_lea.vmem [#allocation6], 256
        %v788 = vld [vmem:[%s787] sm:$0xff]
        %v789 = vld [vmem:[%s787 + $0x8] sm:$0xff]
        %v790 = vld [vmem:[%s787 + $0x10] sm:$0xff]
        %v791 = vld [vmem:[%s787 + $0x18] sm:$0xff]
        %v792 = vld [vmem:[%s787 + $0x20] sm:$0xff]
        %v793 = vld [vmem:[%s787 + $0x28] sm:$0xff]
        %v794 = vld [vmem:[%s787 + $0x30] sm:$0xff]
        %v795 = vld [vmem:[%s787 + $0x38] sm:$0xff]
        %v796 = vld [vmem:[%s787 + $0x40] sm:$0xff]
        %v797 = vld [vmem:[%s787 + $0x48] sm:$0xff]
        %v798 = vld [vmem:[%s787 + $0x50] sm:$0xff]
        %v799 = vld [vmem:[%s787 + $0x58] sm:$0xff]
        %v800 = vld [vmem:[%s787 + $0x60] sm:$0xff]
        %v801 = vld [vmem:[%s787 + $0x68] sm:$0xff]
        %v802 = vld [vmem:[%s787 + $0x70] sm:$0xff]
        %v803 = vld [vmem:[%s787 + $0x78] sm:$0xff]
        %804 = vmatprep.subr.mxu0 0.0
        %805 = vmatpush1.msra.mxu0 %v803
        %806 = vmatprep.subr.mxu0 0.0
        %807 = vmatpush1.msra.mxu0 %v802
        %808 = vmatprep.subr.mxu0 0.0
        %809 = vmatpush1.msra.mxu0 %v801
        %810 = vmatprep.subr.mxu0 0.0
        %811 = vmatpush1.msra.mxu0 %v800
        %812 = vmatprep.subr.mxu0 0.0
        %813 = vmatpush1.msra.mxu0 %v799
        %814 = vmatprep.subr.mxu0 0.0
        %815 = vmatpush1.msra.mxu0 %v798
        %816 = vmatprep.subr.mxu0 0.0
        %817 = vmatpush1.msra.mxu0 %v797
        %818 = vmatprep.subr.mxu0 0.0
        %819 = vmatpush1.msra.mxu0 %v796
        %820 = vmatprep.subr.mxu0 0.0
        %821 = vmatpush1.msra.mxu0 %v795
        %822 = vmatprep.subr.mxu0 0.0
        %823 = vmatpush1.msra.mxu0 %v794
        %824 = vmatprep.subr.mxu0 0.0
        %825 = vmatpush1.msra.mxu0 %v793
        %826 = vmatprep.subr.mxu0 0.0
        %827 = vmatpush1.msra.mxu0 %v792
        %828 = vmatprep.subr.mxu0 0.0
        %829 = vmatpush1.msra.mxu0 %v791
        %830 = vmatprep.subr.mxu0 0.0
        %831 = vmatpush1.msra.mxu0 %v790
        %832 = vmatprep.subr.mxu0 0.0
        %833 = vmatpush1.msra.mxu0 %v789
        %834 = vmatprep.subr.mxu0 0.0
        %835 = vmatpush1.msra.mxu0 %v788
        %836 = vmatprep.subr.mxu0 0.0
        %837 = vmatpush2.msra.mxu0 0.0
        %838 = vmatprep.subr.mxu0 0.0
        %839 = vmatpush2.msra.mxu0 0.0
        %840 = vmatprep.subr.mxu0 0.0
        %841 = vmatpush2.msra.mxu0 0.0
        %842 = vmatprep.subr.mxu0 0.0
        %843 = vmatpush2.msra.mxu0 0.0
        %844 = vmatprep.subr.mxu0 0.0
        %845 = vmatpush2.msra.mxu0 0.0
        %846 = vmatprep.subr.mxu0 0.0
        %847 = vmatpush2.msra.mxu0 0.0
        %848 = vmatprep.subr.mxu0 0.0
        %849 = vmatpush2.msra.mxu0 0.0
        %850 = vmatprep.subr.mxu0 0.0
        %851 = vmatpush2.msra.mxu0 0.0
        %852 = vmatprep.subr.mxu0 0.0
        %853 = vmatpush2.msra.mxu0 0.0
        %854 = vmatprep.subr.mxu0 0.0
        %855 = vmatpush2.msra.mxu0 0.0
        %856 = vmatprep.subr.mxu0 0.0
        %857 = vmatpush2.msra.mxu0 0.0
        %858 = vmatprep.subr.mxu0 0.0
        %859 = vmatpush2.msra.mxu0 0.0
        %860 = vmatprep.subr.mxu0 0.0
        %861 = vmatpush2.msra.mxu0 0.0
        %862 = vmatprep.subr.mxu0 0.0
        %863 = vmatpush2.msra.mxu0 0.0
        %864 = vmatprep.subr.mxu0 0.0
        %865 = vmatpush2.msra.mxu0 0.0
        %866 = vmatprep.subr.mxu0 0.0
        %867 = vmatpush2.msra.mxu0 0.0
        %868 = vmatprep.mubr.f32.mxu0 0.0
        %869 = vmatmul.mubr.f32.gmra.mxu0 %v764
        %v870 = vpop.f32.mrf.mxu0
        %v871 = vadd.f32 0.0, %v870
        %v872 = vpop.f32.mrf.mxu0
        %873 = vmatprep.mubr.f32.mxu0 0.0
        %874 = vmatmul.mubr.f32.gmra.mxu0 %v765
        %v875 = vpop.f32.mrf.mxu0
        %v876 = vadd.f32 0.0, %v875
        %v877 = vpop.f32.mrf.mxu0
        %878 = vmatprep.mubr.f32.mxu0 0.0
        %879 = vmatmul.mubr.f32.gmra.mxu0 %v766
        %v880 = vpop.f32.mrf.mxu0
        %v881 = vadd.f32 0.0, %v880
        %v882 = vpop.f32.mrf.mxu0
        %883 = vmatprep.mubr.f32.mxu0 0.0
        %884 = vmatmul.mubr.f32.gmra.mxu0 %v767
        %v885 = vpop.f32.mrf.mxu0
        %v886 = vadd.f32 0.0, %v885
        %v887 = vpop.f32.mrf.mxu0
        %888 = vmatprep.mubr.f32.mxu0 0.0
        %889 = vmatmul.mubr.f32.gmra.mxu0 %v768
        %v890 = vpop.f32.mrf.mxu0
        %v891 = vadd.f32 0.0, %v890
        %v892 = vpop.f32.mrf.mxu0
        %893 = vmatprep.mubr.f32.mxu0 0.0
        %894 = vmatmul.mubr.f32.gmra.mxu0 %v769
        %v895 = vpop.f32.mrf.mxu0
        %v896 = vadd.f32 0.0, %v895
        %v897 = vpop.f32.mrf.mxu0
        %898 = vmatprep.mubr.f32.mxu0 0.0
        %899 = vmatmul.mubr.f32.gmra.mxu0 %v770
        %v900 = vpop.f32.mrf.mxu0
        %v901 = vadd.f32 0.0, %v900
        %v902 = vpop.f32.mrf.mxu0
        %903 = vmatprep.mubr.f32.mxu0 0.0
        %904 = vmatmul.mubr.f32.gmra.mxu0 %v771
        %v905 = vpop.f32.mrf.mxu0
        %v906 = vadd.f32 0.0, %v905
        %v907 = vpop.f32.mrf.mxu0
        %908 = vmatprep.mubr.f32.mxu0 0.0
        %909 = vmatmul.mubr.f32.gmra.mxu0 %v772
        %v910 = vpop.f32.mrf.mxu0
        %v911 = vadd.f32 0.0, %v910
        %v912 = vpop.f32.mrf.mxu0
        %913 = vmatprep.mubr.f32.mxu0 0.0
        %914 = vmatmul.mubr.f32.gmra.mxu0 %v773
        %v915 = vpop.f32.mrf.mxu0
        %v916 = vadd.f32 0.0, %v915
        %v917 = vpop.f32.mrf.mxu0
        %918 = vmatprep.mubr.f32.mxu0 0.0
        %919 = vmatmul.mubr.f32.gmra.mxu0 %v774
        %v920 = vpop.f32.mrf.mxu0
        %v921 = vadd.f32 0.0, %v920
        %v922 = vpop.f32.mrf.mxu0
        %923 = vmatprep.mubr.f32.mxu0 0.0
        %924 = vmatmul.mubr.f32.gmra.mxu0 %v775
        %v925 = vpop.f32.mrf.mxu0
        %v926 = vadd.f32 0.0, %v925
        %v927 = vpop.f32.mrf.mxu0
        %928 = vmatprep.mubr.f32.mxu0 0.0
        %929 = vmatmul.mubr.f32.gmra.mxu0 %v776
        %v930 = vpop.f32.mrf.mxu0
        %v931 = vadd.f32 0.0, %v930
        %v932 = vpop.f32.mrf.mxu0
        %933 = vmatprep.mubr.f32.mxu0 0.0
        %934 = vmatmul.mubr.f32.gmra.mxu0 %v777
        %v935 = vpop.f32.mrf.mxu0
        %v936 = vadd.f32 0.0, %v935
        %v937 = vpop.f32.mrf.mxu0
        %938 = vmatprep.mubr.f32.mxu0 0.0
        %939 = vmatmul.mubr.f32.gmra.mxu0 %v778
        %v940 = vpop.f32.mrf.mxu0
        %v941 = vadd.f32 0.0, %v940
        %v942 = vpop.f32.mrf.mxu0
        %943 = vmatprep.mubr.f32.mxu0 0.0
        %944 = vmatmul.mubr.f32.gmra.mxu0 %v779
        %v945 = vpop.f32.mrf.mxu0
        %v946 = vadd.f32 0.0, %v945
        %v947 = vpop.f32.mrf.mxu0
        %948 = vmatprep.mubr.f32.mxu0 0.0
        %949 = vmatmul.mubr.f32.gmra.mxu0 %v780
        %v950 = vpop.f32.mrf.mxu0
        %v951 = vadd.f32 0.0, %v950
        %v952 = vpop.f32.mrf.mxu0
        %953 = vmatprep.mubr.f32.mxu0 0.0
        %954 = vmatmul.mubr.f32.gmra.mxu0 %v781
        %v955 = vpop.f32.mrf.mxu0
        %v956 = vadd.f32 0.0, %v955
        %v957 = vpop.f32.mrf.mxu0
        %958 = vmatprep.mubr.f32.mxu0 0.0
        %959 = vmatmul.mubr.f32.gmra.mxu0 %v782
        %v960 = vpop.f32.mrf.mxu0
        %v961 = vadd.f32 0.0, %v960
        %v962 = vpop.f32.mrf.mxu0
        %963 = vmatprep.mubr.f32.mxu0 0.0
        %964 = vmatmul.mubr.f32.gmra.mxu0 %v783
        %v965 = vpop.f32.mrf.mxu0
        %v966 = vadd.f32 0.0, %v965
        %v967 = vpop.f32.mrf.mxu0
        %968 = vmatprep.mubr.f32.mxu0 0.0
        %969 = vmatmul.mubr.f32.gmra.mxu0 %v784
        %v970 = vpop.f32.mrf.mxu0
        %v971 = vadd.f32 0.0, %v970
        %v972 = vpop.f32.mrf.mxu0
        %973 = vmatprep.mubr.f32.mxu0 0.0
        %974 = vmatmul.mubr.f32.gmra.mxu0 %v785
        %v975 = vpop.f32.mrf.mxu0
        %v976 = vadd.f32 0.0, %v975
        %v977 = vpop.f32.mrf.mxu0
        %978 = vmatprep.mubr.f32.mxu0 0.0
        %979 = vmatmul.mubr.f32.gmra.mxu0 %v786
        %v980 = vpop.f32.mrf.mxu0
        %v981 = vadd.f32 0.0, %v980
        %v982 = vpop.f32.mrf.mxu0
        %983 = vdwg.mxu0
        %v984 = vadd.f32 %v651, %v871
        %v985 = vadd.f32 %v656, %v876
        %v986 = vadd.f32 %v661, %v881
        %v987 = vadd.f32 %v666, %v886
        %v988 = vadd.f32 %v671, %v891
        %v989 = vadd.f32 %v676, %v896
        %v990 = vadd.f32 %v681, %v901
        %v991 = vadd.f32 %v686, %v906
        %v992 = vadd.f32 %v691, %v911
        %v993 = vadd.f32 %v696, %v916
        %v994 = vadd.f32 %v701, %v921
        %v995 = vadd.f32 %v706, %v926
        %v996 = vadd.f32 %v711, %v931
        %v997 = vadd.f32 %v716, %v936
        %v998 = vadd.f32 %v721, %v941
        %v999 = vadd.f32 %v726, %v946
        %v1000 = vadd.f32 %v731, %v951
        %v1001 = vadd.f32 %v736, %v956
        %v1002 = vadd.f32 %v741, %v961
        %v1003 = vadd.f32 %v746, %v966
        %v1004 = vadd.f32 %v751, %v971
        %v1005 = vadd.f32 %v756, %v976
        %v1006 = vadd.f32 %v761, %v981
        %v1007 = vld [vmem:[%s284 + $0x19] sm:$0xff]
        %v1008 = vld [vmem:[%s284 + $0x21] sm:$0xff]
        %v1009 = vld [vmem:[%s284 + $0x29] sm:$0xff]
        %v1010 = vld [vmem:[%s284 + $0x31] sm:$0xff]
        %v1011 = vld [vmem:[%s284 + $0x39] sm:$0xff]
        %v1012 = vld [vmem:[%s284 + $0x41] sm:$0xff]
        %v1013 = vld [vmem:[%s284 + $0x49] sm:$0xff]
        %v1014 = vld [vmem:[%s284 + $0x51] sm:$0xff]
        %v1015 = vld [vmem:[%s284 + $0x59] sm:$0xff]
        %v1016 = vld [vmem:[%s284 + $0x61] sm:$0xff]
        %v1017 = vld [vmem:[%s284 + $0x69] sm:$0xff]
        %v1018 = vld [vmem:[%s284 + $0x71] sm:$0xff]
        %v1019 = vld [vmem:[%s284 + $0x79] sm:$0xff]
        %v1020 = vld [vmem:[%s284 + $0x81] sm:$0xff]
        %v1021 = vld [vmem:[%s284 + $0x89] sm:$0xff]
        %v1022 = vld [vmem:[%s284 + $0x91] sm:$0xff]
        %v1023 = vld [vmem:[%s284 + $0x99] sm:$0xff]
        %v1024 = vld [vmem:[%s284 + $0xa1] sm:$0xff]
        %v1025 = vld [vmem:[%s284 + $0xa9] sm:$0xff]
        %v1026 = vld [vmem:[%s284 + $0xb1] sm:$0xff]
        %v1027 = vld [vmem:[%s284 + $0xb9] sm:$0xff]
        %v1028 = vld [vmem:[%s284 + $0xc1] sm:$0xff]
        %v1029 = vld [vmem:[%s284 + $0xc9] sm:$0xf]
        %s1030 = scalar_lea.vmem [#allocation6], 384
        %v1031 = vld [vmem:[%s1030] sm:$0xff]
        %v1032 = vld [vmem:[%s1030 + $0x8] sm:$0xff]
        %v1033 = vld [vmem:[%s1030 + $0x10] sm:$0xff]
        %v1034 = vld [vmem:[%s1030 + $0x18] sm:$0xff]
        %v1035 = vld [vmem:[%s1030 + $0x20] sm:$0xff]
        %v1036 = vld [vmem:[%s1030 + $0x28] sm:$0xff]
        %v1037 = vld [vmem:[%s1030 + $0x30] sm:$0xff]
        %v1038 = vld [vmem:[%s1030 + $0x38] sm:$0xff]
        %v1039 = vld [vmem:[%s1030 + $0x40] sm:$0xff]
        %v1040 = vld [vmem:[%s1030 + $0x48] sm:$0xff]
        %v1041 = vld [vmem:[%s1030 + $0x50] sm:$0xff]
        %v1042 = vld [vmem:[%s1030 + $0x58] sm:$0xff]
        %v1043 = vld [vmem:[%s1030 + $0x60] sm:$0xff]
        %v1044 = vld [vmem:[%s1030 + $0x68] sm:$0xff]
        %v1045 = vld [vmem:[%s1030 + $0x70] sm:$0xff]
        %v1046 = vld [vmem:[%s1030 + $0x78] sm:$0xff]
        %1047 = vmatprep.subr.mxu0 0.0
        %1048 = vmatpush1.msra.mxu0 %v1046
        %1049 = vmatprep.subr.mxu0 0.0
        %1050 = vmatpush1.msra.mxu0 %v1045
        %1051 = vmatprep.subr.mxu0 0.0
        %1052 = vmatpush1.msra.mxu0 %v1044
        %1053 = vmatprep.subr.mxu0 0.0
        %1054 = vmatpush1.msra.mxu0 %v1043
        %1055 = vmatprep.subr.mxu0 0.0
        %1056 = vmatpush1.msra.mxu0 %v1042
        %1057 = vmatprep.subr.mxu0 0.0
        %1058 = vmatpush1.msra.mxu0 %v1041
        %1059 = vmatprep.subr.mxu0 0.0
        %1060 = vmatpush1.msra.mxu0 %v1040
        %1061 = vmatprep.subr.mxu0 0.0
        %1062 = vmatpush1.msra.mxu0 %v1039
        %1063 = vmatprep.subr.mxu0 0.0
        %1064 = vmatpush1.msra.mxu0 %v1038
        %1065 = vmatprep.subr.mxu0 0.0
        %1066 = vmatpush1.msra.mxu0 %v1037
        %1067 = vmatprep.subr.mxu0 0.0
        %1068 = vmatpush1.msra.mxu0 %v1036
        %1069 = vmatprep.subr.mxu0 0.0
        %1070 = vmatpush1.msra.mxu0 %v1035
        %1071 = vmatprep.subr.mxu0 0.0
        %1072 = vmatpush1.msra.mxu0 %v1034
        %1073 = vmatprep.subr.mxu0 0.0
        %1074 = vmatpush1.msra.mxu0 %v1033
        %1075 = vmatprep.subr.mxu0 0.0
        %1076 = vmatpush1.msra.mxu0 %v1032
        %1077 = vmatprep.subr.mxu0 0.0
        %1078 = vmatpush1.msra.mxu0 %v1031
        %1079 = vmatprep.subr.mxu0 0.0
        %1080 = vmatpush2.msra.mxu0 0.0
        %1081 = vmatprep.subr.mxu0 0.0
        %1082 = vmatpush2.msra.mxu0 0.0
        %1083 = vmatprep.subr.mxu0 0.0
        %1084 = vmatpush2.msra.mxu0 0.0
        %1085 = vmatprep.subr.mxu0 0.0
        %1086 = vmatpush2.msra.mxu0 0.0
        %1087 = vmatprep.subr.mxu0 0.0
        %1088 = vmatpush2.msra.mxu0 0.0
        %1089 = vmatprep.subr.mxu0 0.0
        %1090 = vmatpush2.msra.mxu0 0.0
        %1091 = vmatprep.subr.mxu0 0.0
        %1092 = vmatpush2.msra.mxu0 0.0
        %1093 = vmatprep.subr.mxu0 0.0
        %1094 = vmatpush2.msra.mxu0 0.0
        %1095 = vmatprep.subr.mxu0 0.0
        %1096 = vmatpush2.msra.mxu0 0.0
        %1097 = vmatprep.subr.mxu0 0.0
        %1098 = vmatpush2.msra.mxu0 0.0
        %1099 = vmatprep.subr.mxu0 0.0
        %1100 = vmatpush2.msra.mxu0 0.0
        %1101 = vmatprep.subr.mxu0 0.0
        %1102 = vmatpush2.msra.mxu0 0.0
        %1103 = vmatprep.subr.mxu0 0.0
        %1104 = vmatpush2.msra.mxu0 0.0
        %1105 = vmatprep.subr.mxu0 0.0
        %1106 = vmatpush2.msra.mxu0 0.0
        %1107 = vmatprep.subr.mxu0 0.0
        %1108 = vmatpush2.msra.mxu0 0.0
        %1109 = vmatprep.subr.mxu0 0.0
        %1110 = vmatpush2.msra.mxu0 0.0
        %1111 = vmatprep.mubr.f32.mxu0 0.0
        %1112 = vmatmul.mubr.f32.gmra.mxu0 %v1007
        %v1113 = vpop.f32.mrf.mxu0
        %v1114 = vadd.f32 0.0, %v1113
        %v1115 = vpop.f32.mrf.mxu0
        %1116 = vmatprep.mubr.f32.mxu0 0.0
        %1117 = vmatmul.mubr.f32.gmra.mxu0 %v1008
        %v1118 = vpop.f32.mrf.mxu0
        %v1119 = vadd.f32 0.0, %v1118
        %v1120 = vpop.f32.mrf.mxu0
        %1121 = vmatprep.mubr.f32.mxu0 0.0
        %1122 = vmatmul.mubr.f32.gmra.mxu0 %v1009
        %v1123 = vpop.f32.mrf.mxu0
        %v1124 = vadd.f32 0.0, %v1123
        %v1125 = vpop.f32.mrf.mxu0
        %1126 = vmatprep.mubr.f32.mxu0 0.0
        %1127 = vmatmul.mubr.f32.gmra.mxu0 %v1010
        %v1128 = vpop.f32.mrf.mxu0
        %v1129 = vadd.f32 0.0, %v1128
        %v1130 = vpop.f32.mrf.mxu0
        %1131 = vmatprep.mubr.f32.mxu0 0.0
        %1132 = vmatmul.mubr.f32.gmra.mxu0 %v1011
        %v1133 = vpop.f32.mrf.mxu0
        %v1134 = vadd.f32 0.0, %v1133
        %v1135 = vpop.f32.mrf.mxu0
        %1136 = vmatprep.mubr.f32.mxu0 0.0
        %1137 = vmatmul.mubr.f32.gmra.mxu0 %v1012
        %v1138 = vpop.f32.mrf.mxu0
        %v1139 = vadd.f32 0.0, %v1138
        %v1140 = vpop.f32.mrf.mxu0
        %1141 = vmatprep.mubr.f32.mxu0 0.0
        %1142 = vmatmul.mubr.f32.gmra.mxu0 %v1013
        %v1143 = vpop.f32.mrf.mxu0
        %v1144 = vadd.f32 0.0, %v1143
        %v1145 = vpop.f32.mrf.mxu0
        %1146 = vmatprep.mubr.f32.mxu0 0.0
        %1147 = vmatmul.mubr.f32.gmra.mxu0 %v1014
        %v1148 = vpop.f32.mrf.mxu0
        %v1149 = vadd.f32 0.0, %v1148
        %v1150 = vpop.f32.mrf.mxu0
        %1151 = vmatprep.mubr.f32.mxu0 0.0
        %1152 = vmatmul.mubr.f32.gmra.mxu0 %v1015
        %v1153 = vpop.f32.mrf.mxu0
        %v1154 = vadd.f32 0.0, %v1153
        %v1155 = vpop.f32.mrf.mxu0
        %1156 = vmatprep.mubr.f32.mxu0 0.0
        %1157 = vmatmul.mubr.f32.gmra.mxu0 %v1016
        %v1158 = vpop.f32.mrf.mxu0
        %v1159 = vadd.f32 0.0, %v1158
        %v1160 = vpop.f32.mrf.mxu0
        %1161 = vmatprep.mubr.f32.mxu0 0.0
        %1162 = vmatmul.mubr.f32.gmra.mxu0 %v1017
        %v1163 = vpop.f32.mrf.mxu0
        %v1164 = vadd.f32 0.0, %v1163
        %v1165 = vpop.f32.mrf.mxu0
        %1166 = vmatprep.mubr.f32.mxu0 0.0
        %1167 = vmatmul.mubr.f32.gmra.mxu0 %v1018
        %v1168 = vpop.f32.mrf.mxu0
        %v1169 = vadd.f32 0.0, %v1168
        %v1170 = vpop.f32.mrf.mxu0
        %1171 = vmatprep.mubr.f32.mxu0 0.0
        %1172 = vmatmul.mubr.f32.gmra.mxu0 %v1019
        %v1173 = vpop.f32.mrf.mxu0
        %v1174 = vadd.f32 0.0, %v1173
        %v1175 = vpop.f32.mrf.mxu0
        %1176 = vmatprep.mubr.f32.mxu0 0.0
        %1177 = vmatmul.mubr.f32.gmra.mxu0 %v1020
        %v1178 = vpop.f32.mrf.mxu0
        %v1179 = vadd.f32 0.0, %v1178
        %v1180 = vpop.f32.mrf.mxu0
        %1181 = vmatprep.mubr.f32.mxu0 0.0
        %1182 = vmatmul.mubr.f32.gmra.mxu0 %v1021
        %v1183 = vpop.f32.mrf.mxu0
        %v1184 = vadd.f32 0.0, %v1183
        %v1185 = vpop.f32.mrf.mxu0
        %1186 = vmatprep.mubr.f32.mxu0 0.0
        %1187 = vmatmul.mubr.f32.gmra.mxu0 %v1022
        %v1188 = vpop.f32.mrf.mxu0
        %v1189 = vadd.f32 0.0, %v1188
        %v1190 = vpop.f32.mrf.mxu0
        %1191 = vmatprep.mubr.f32.mxu0 0.0
        %1192 = vmatmul.mubr.f32.gmra.mxu0 %v1023
        %v1193 = vpop.f32.mrf.mxu0
        %v1194 = vadd.f32 0.0, %v1193
        %v1195 = vpop.f32.mrf.mxu0
        %1196 = vmatprep.mubr.f32.mxu0 0.0
        %1197 = vmatmul.mubr.f32.gmra.mxu0 %v1024
        %v1198 = vpop.f32.mrf.mxu0
        %v1199 = vadd.f32 0.0, %v1198
        %v1200 = vpop.f32.mrf.mxu0
        %1201 = vmatprep.mubr.f32.mxu0 0.0
        %1202 = vmatmul.mubr.f32.gmra.mxu0 %v1025
        %v1203 = vpop.f32.mrf.mxu0
        %v1204 = vadd.f32 0.0, %v1203
        %v1205 = vpop.f32.mrf.mxu0
        %1206 = vmatprep.mubr.f32.mxu0 0.0
        %1207 = vmatmul.mubr.f32.gmra.mxu0 %v1026
        %v1208 = vpop.f32.mrf.mxu0
        %v1209 = vadd.f32 0.0, %v1208
        %v1210 = vpop.f32.mrf.mxu0
        %1211 = vmatprep.mubr.f32.mxu0 0.0
        %1212 = vmatmul.mubr.f32.gmra.mxu0 %v1027
        %v1213 = vpop.f32.mrf.mxu0
        %v1214 = vadd.f32 0.0, %v1213
        %v1215 = vpop.f32.mrf.mxu0
        %1216 = vmatprep.mubr.f32.mxu0 0.0
        %1217 = vmatmul.mubr.f32.gmra.mxu0 %v1028
        %v1218 = vpop.f32.mrf.mxu0
        %v1219 = vadd.f32 0.0, %v1218
        %v1220 = vpop.f32.mrf.mxu0
        %1221 = vmatprep.mubr.f32.mxu0 0.0
        %1222 = vmatmul.mubr.f32.gmra.mxu0 %v1029
        %v1223 = vpop.f32.mrf.mxu0
        %v1224 = vadd.f32 0.0, %v1223
        %v1225 = vpop.f32.mrf.mxu0
        %1226 = vdwg.mxu0
        %v1227 = vadd.f32 %v984, %v1114
        %v1228 = vadd.f32 %v985, %v1119
        %v1229 = vadd.f32 %v986, %v1124
        %v1230 = vadd.f32 %v987, %v1129
        %v1231 = vadd.f32 %v988, %v1134
        %v1232 = vadd.f32 %v989, %v1139
        %v1233 = vadd.f32 %v990, %v1144
        %v1234 = vadd.f32 %v991, %v1149
        %v1235 = vadd.f32 %v992, %v1154
        %v1236 = vadd.f32 %v993, %v1159
        %v1237 = vadd.f32 %v994, %v1164
        %v1238 = vadd.f32 %v995, %v1169
        %v1239 = vadd.f32 %v996, %v1174
        %v1240 = vadd.f32 %v997, %v1179
        %v1241 = vadd.f32 %v998, %v1184
        %v1242 = vadd.f32 %v999, %v1189
        %v1243 = vadd.f32 %v1000, %v1194
        %v1244 = vadd.f32 %v1001, %v1199
        %v1245 = vadd.f32 %v1002, %v1204
        %v1246 = vadd.f32 %v1003, %v1209
        %v1247 = vadd.f32 %v1004, %v1214
        %v1248 = vadd.f32 %v1005, %v1219
        %v1249 = vadd.f32 %v1006, %v1224
        %v1250 = vld [vmem:[%s284 + $0x1a] sm:$0xff]
        %v1251 = vld [vmem:[%s284 + $0x22] sm:$0xff]
        %v1252 = vld [vmem:[%s284 + $0x2a] sm:$0xff]
        %v1253 = vld [vmem:[%s284 + $0x32] sm:$0xff]
        %v1254 = vld [vmem:[%s284 + $0x3a] sm:$0xff]
        %v1255 = vld [vmem:[%s284 + $0x42] sm:$0xff]
        %v1256 = vld [vmem:[%s284 + $0x4a] sm:$0xff]
        %v1257 = vld [vmem:[%s284 + $0x52] sm:$0xff]
        %v1258 = vld [vmem:[%s284 + $0x5a] sm:$0xff]
        %v1259 = vld [vmem:[%s284 + $0x62] sm:$0xff]
        %v1260 = vld [vmem:[%s284 + $0x6a] sm:$0xff]
        %v1261 = vld [vmem:[%s284 + $0x72] sm:$0xff]
        %v1262 = vld [vmem:[%s284 + $0x7a] sm:$0xff]
        %v1263 = vld [vmem:[%s284 + $0x82] sm:$0xff]
        %v1264 = vld [vmem:[%s284 + $0x8a] sm:$0xff]
        %v1265 = vld [vmem:[%s284 + $0x92] sm:$0xff]
        %v1266 = vld [vmem:[%s284 + $0x9a] sm:$0xff]
        %v1267 = vld [vmem:[%s284 + $0xa2] sm:$0xff]
        %v1268 = vld [vmem:[%s284 + $0xaa] sm:$0xff]
        %v1269 = vld [vmem:[%s284 + $0xb2] sm:$0xff]
        %v1270 = vld [vmem:[%s284 + $0xba] sm:$0xff]
        %v1271 = vld [vmem:[%s284 + $0xc2] sm:$0xff]
        %v1272 = vld [vmem:[%s284 + $0xca] sm:$0xf]
        %s1273 = scalar_lea.vmem [#allocation6], 512
        %v1274 = vld [vmem:[%s1273] sm:$0xff]
        %v1275 = vld [vmem:[%s1273 + $0x8] sm:$0xff]
        %v1276 = vld [vmem:[%s1273 + $0x10] sm:$0xff]
        %v1277 = vld [vmem:[%s1273 + $0x18] sm:$0xff]
        %v1278 = vld [vmem:[%s1273 + $0x20] sm:$0xff]
        %v1279 = vld [vmem:[%s1273 + $0x28] sm:$0xff]
        %v1280 = vld [vmem:[%s1273 + $0x30] sm:$0xff]
        %v1281 = vld [vmem:[%s1273 + $0x38] sm:$0xff]
        %v1282 = vld [vmem:[%s1273 + $0x40] sm:$0xff]
        %v1283 = vld [vmem:[%s1273 + $0x48] sm:$0xff]
        %v1284 = vld [vmem:[%s1273 + $0x50] sm:$0xff]
        %v1285 = vld [vmem:[%s1273 + $0x58] sm:$0xff]
        %v1286 = vld [vmem:[%s1273 + $0x60] sm:$0xff]
        %v1287 = vld [vmem:[%s1273 + $0x68] sm:$0xff]
        %v1288 = vld [vmem:[%s1273 + $0x70] sm:$0xff]
        %v1289 = vld [vmem:[%s1273 + $0x78] sm:$0xff]
        %1290 = vmatprep.subr.mxu0 0.0
        %1291 = vmatpush1.msra.mxu0 %v1289
        %1292 = vmatprep.subr.mxu0 0.0
        %1293 = vmatpush1.msra.mxu0 %v1288
        %1294 = vmatprep.subr.mxu0 0.0
        %1295 = vmatpush1.msra.mxu0 %v1287
        %1296 = vmatprep.subr.mxu0 0.0
        %1297 = vmatpush1.msra.mxu0 %v1286
        %1298 = vmatprep.subr.mxu0 0.0
        %1299 = vmatpush1.msra.mxu0 %v1285
        %1300 = vmatprep.subr.mxu0 0.0
        %1301 = vmatpush1.msra.mxu0 %v1284
        %1302 = vmatprep.subr.mxu0 0.0
        %1303 = vmatpush1.msra.mxu0 %v1283
        %1304 = vmatprep.subr.mxu0 0.0
        %1305 = vmatpush1.msra.mxu0 %v1282
        %1306 = vmatprep.subr.mxu0 0.0
        %1307 = vmatpush1.msra.mxu0 %v1281
        %1308 = vmatprep.subr.mxu0 0.0
        %1309 = vmatpush1.msra.mxu0 %v1280
        %1310 = vmatprep.subr.mxu0 0.0
        %1311 = vmatpush1.msra.mxu0 %v1279
        %1312 = vmatprep.subr.mxu0 0.0
        %1313 = vmatpush1.msra.mxu0 %v1278
        %1314 = vmatprep.subr.mxu0 0.0
        %1315 = vmatpush1.msra.mxu0 %v1277
        %1316 = vmatprep.subr.mxu0 0.0
        %1317 = vmatpush1.msra.mxu0 %v1276
        %1318 = vmatprep.subr.mxu0 0.0
        %1319 = vmatpush1.msra.mxu0 %v1275
        %1320 = vmatprep.subr.mxu0 0.0
        %1321 = vmatpush1.msra.mxu0 %v1274
        %1322 = vmatprep.subr.mxu0 0.0
        %1323 = vmatpush2.msra.mxu0 0.0
        %1324 = vmatprep.subr.mxu0 0.0
        %1325 = vmatpush2.msra.mxu0 0.0
        %1326 = vmatprep.subr.mxu0 0.0
        %1327 = vmatpush2.msra.mxu0 0.0
        %1328 = vmatprep.subr.mxu0 0.0
        %1329 = vmatpush2.msra.mxu0 0.0
        %1330 = vmatprep.subr.mxu0 0.0
        %1331 = vmatpush2.msra.mxu0 0.0
        %1332 = vmatprep.subr.mxu0 0.0
        %1333 = vmatpush2.msra.mxu0 0.0
        %1334 = vmatprep.subr.mxu0 0.0
        %1335 = vmatpush2.msra.mxu0 0.0
        %1336 = vmatprep.subr.mxu0 0.0
        %1337 = vmatpush2.msra.mxu0 0.0
        %1338 = vmatprep.subr.mxu0 0.0
        %1339 = vmatpush2.msra.mxu0 0.0
        %1340 = vmatprep.subr.mxu0 0.0
        %1341 = vmatpush2.msra.mxu0 0.0
        %1342 = vmatprep.subr.mxu0 0.0
        %1343 = vmatpush2.msra.mxu0 0.0
        %1344 = vmatprep.subr.mxu0 0.0
        %1345 = vmatpush2.msra.mxu0 0.0
        %1346 = vmatprep.subr.mxu0 0.0
        %1347 = vmatpush2.msra.mxu0 0.0
        %1348 = vmatprep.subr.mxu0 0.0
        %1349 = vmatpush2.msra.mxu0 0.0
        %1350 = vmatprep.subr.mxu0 0.0
        %1351 = vmatpush2.msra.mxu0 0.0
        %1352 = vmatprep.subr.mxu0 0.0
        %1353 = vmatpush2.msra.mxu0 0.0
        %1354 = vmatprep.mubr.f32.mxu0 0.0
        %1355 = vmatmul.mubr.f32.gmra.mxu0 %v1250
        %v1356 = vpop.f32.mrf.mxu0
        %v1357 = vadd.f32 0.0, %v1356
        %v1358 = vpop.f32.mrf.mxu0
        %1359 = vmatprep.mubr.f32.mxu0 0.0
        %1360 = vmatmul.mubr.f32.gmra.mxu0 %v1251
        %v1361 = vpop.f32.mrf.mxu0
        %v1362 = vadd.f32 0.0, %v1361
        %v1363 = vpop.f32.mrf.mxu0
        %1364 = vmatprep.mubr.f32.mxu0 0.0
        %1365 = vmatmul.mubr.f32.gmra.mxu0 %v1252
        %v1366 = vpop.f32.mrf.mxu0
        %v1367 = vadd.f32 0.0, %v1366
        %v1368 = vpop.f32.mrf.mxu0
        %1369 = vmatprep.mubr.f32.mxu0 0.0
        %1370 = vmatmul.mubr.f32.gmra.mxu0 %v1253
        %v1371 = vpop.f32.mrf.mxu0
        %v1372 = vadd.f32 0.0, %v1371
        %v1373 = vpop.f32.mrf.mxu0
        %1374 = vmatprep.mubr.f32.mxu0 0.0
        %1375 = vmatmul.mubr.f32.gmra.mxu0 %v1254
        %v1376 = vpop.f32.mrf.mxu0
        %v1377 = vadd.f32 0.0, %v1376
        %v1378 = vpop.f32.mrf.mxu0
        %1379 = vmatprep.mubr.f32.mxu0 0.0
        %1380 = vmatmul.mubr.f32.gmra.mxu0 %v1255
        %v1381 = vpop.f32.mrf.mxu0
        %v1382 = vadd.f32 0.0, %v1381
        %v1383 = vpop.f32.mrf.mxu0
        %1384 = vmatprep.mubr.f32.mxu0 0.0
        %1385 = vmatmul.mubr.f32.gmra.mxu0 %v1256
        %v1386 = vpop.f32.mrf.mxu0
        %v1387 = vadd.f32 0.0, %v1386
        %v1388 = vpop.f32.mrf.mxu0
        %1389 = vmatprep.mubr.f32.mxu0 0.0
        %1390 = vmatmul.mubr.f32.gmra.mxu0 %v1257
        %v1391 = vpop.f32.mrf.mxu0
        %v1392 = vadd.f32 0.0, %v1391
        %v1393 = vpop.f32.mrf.mxu0
        %1394 = vmatprep.mubr.f32.mxu0 0.0
        %1395 = vmatmul.mubr.f32.gmra.mxu0 %v1258
        %v1396 = vpop.f32.mrf.mxu0
        %v1397 = vadd.f32 0.0, %v1396
        %v1398 = vpop.f32.mrf.mxu0
        %1399 = vmatprep.mubr.f32.mxu0 0.0
        %1400 = vmatmul.mubr.f32.gmra.mxu0 %v1259
        %v1401 = vpop.f32.mrf.mxu0
        %v1402 = vadd.f32 0.0, %v1401
        %v1403 = vpop.f32.mrf.mxu0
        %1404 = vmatprep.mubr.f32.mxu0 0.0
        %1405 = vmatmul.mubr.f32.gmra.mxu0 %v1260
        %v1406 = vpop.f32.mrf.mxu0
        %v1407 = vadd.f32 0.0, %v1406
        %v1408 = vpop.f32.mrf.mxu0
        %1409 = vmatprep.mubr.f32.mxu0 0.0
        %1410 = vmatmul.mubr.f32.gmra.mxu0 %v1261
        %v1411 = vpop.f32.mrf.mxu0
        %v1412 = vadd.f32 0.0, %v1411
        %v1413 = vpop.f32.mrf.mxu0
        %1414 = vmatprep.mubr.f32.mxu0 0.0
        %1415 = vmatmul.mubr.f32.gmra.mxu0 %v1262
        %v1416 = vpop.f32.mrf.mxu0
        %v1417 = vadd.f32 0.0, %v1416
        %v1418 = vpop.f32.mrf.mxu0
        %1419 = vmatprep.mubr.f32.mxu0 0.0
        %1420 = vmatmul.mubr.f32.gmra.mxu0 %v1263
        %v1421 = vpop.f32.mrf.mxu0
        %v1422 = vadd.f32 0.0, %v1421
        %v1423 = vpop.f32.mrf.mxu0
        %1424 = vmatprep.mubr.f32.mxu0 0.0
        %1425 = vmatmul.mubr.f32.gmra.mxu0 %v1264
        %v1426 = vpop.f32.mrf.mxu0
        %v1427 = vadd.f32 0.0, %v1426
        %v1428 = vpop.f32.mrf.mxu0
        %1429 = vmatprep.mubr.f32.mxu0 0.0
        %1430 = vmatmul.mubr.f32.gmra.mxu0 %v1265
        %v1431 = vpop.f32.mrf.mxu0
        %v1432 = vadd.f32 0.0, %v1431
        %v1433 = vpop.f32.mrf.mxu0
        %1434 = vmatprep.mubr.f32.mxu0 0.0
        %1435 = vmatmul.mubr.f32.gmra.mxu0 %v1266
        %v1436 = vpop.f32.mrf.mxu0
        %v1437 = vadd.f32 0.0, %v1436
        %v1438 = vpop.f32.mrf.mxu0
        %1439 = vmatprep.mubr.f32.mxu0 0.0
        %1440 = vmatmul.mubr.f32.gmra.mxu0 %v1267
        %v1441 = vpop.f32.mrf.mxu0
        %v1442 = vadd.f32 0.0, %v1441
        %v1443 = vpop.f32.mrf.mxu0
        %1444 = vmatprep.mubr.f32.mxu0 0.0
        %1445 = vmatmul.mubr.f32.gmra.mxu0 %v1268
        %v1446 = vpop.f32.mrf.mxu0
        %v1447 = vadd.f32 0.0, %v1446
        %v1448 = vpop.f32.mrf.mxu0
        %1449 = vmatprep.mubr.f32.mxu0 0.0
        %1450 = vmatmul.mubr.f32.gmra.mxu0 %v1269
        %v1451 = vpop.f32.mrf.mxu0
        %v1452 = vadd.f32 0.0, %v1451
        %v1453 = vpop.f32.mrf.mxu0
        %1454 = vmatprep.mubr.f32.mxu0 0.0
        %1455 = vmatmul.mubr.f32.gmra.mxu0 %v1270
        %v1456 = vpop.f32.mrf.mxu0
        %v1457 = vadd.f32 0.0, %v1456
        %v1458 = vpop.f32.mrf.mxu0
        %1459 = vmatprep.mubr.f32.mxu0 0.0
        %1460 = vmatmul.mubr.f32.gmra.mxu0 %v1271
        %v1461 = vpop.f32.mrf.mxu0
        %v1462 = vadd.f32 0.0, %v1461
        %v1463 = vpop.f32.mrf.mxu0
        %1464 = vmatprep.mubr.f32.mxu0 0.0
        %1465 = vmatmul.mubr.f32.gmra.mxu0 %v1272
        %v1466 = vpop.f32.mrf.mxu0
        %v1467 = vadd.f32 0.0, %v1466
        %v1468 = vpop.f32.mrf.mxu0
        %1469 = vdwg.mxu0
        %v1470 = vadd.f32 %v1227, %v1357
        %v1471 = vadd.f32 %v1228, %v1362
        %v1472 = vadd.f32 %v1229, %v1367
        %v1473 = vadd.f32 %v1230, %v1372
        %v1474 = vadd.f32 %v1231, %v1377
        %v1475 = vadd.f32 %v1232, %v1382
        %v1476 = vadd.f32 %v1233, %v1387
        %v1477 = vadd.f32 %v1234, %v1392
        %v1478 = vadd.f32 %v1235, %v1397
        %v1479 = vadd.f32 %v1236, %v1402
        %v1480 = vadd.f32 %v1237, %v1407
        %v1481 = vadd.f32 %v1238, %v1412
        %v1482 = vadd.f32 %v1239, %v1417
        %v1483 = vadd.f32 %v1240, %v1422
        %v1484 = vadd.f32 %v1241, %v1427
        %v1485 = vadd.f32 %v1242, %v1432
        %v1486 = vadd.f32 %v1243, %v1437
        %v1487 = vadd.f32 %v1244, %v1442
        %v1488 = vadd.f32 %v1245, %v1447
        %v1489 = vadd.f32 %v1246, %v1452
        %v1490 = vadd.f32 %v1247, %v1457
        %v1491 = vadd.f32 %v1248, %v1462
        %v1492 = vadd.f32 %v1249, %v1467
        %v1493 = vld [vmem:[%s284 + $0x1b] sm:$0xff]
        %v1494 = vld [vmem:[%s284 + $0x23] sm:$0xff]
        %v1495 = vld [vmem:[%s284 + $0x2b] sm:$0xff]
        %v1496 = vld [vmem:[%s284 + $0x33] sm:$0xff]
        %v1497 = vld [vmem:[%s284 + $0x3b] sm:$0xff]
        %v1498 = vld [vmem:[%s284 + $0x43] sm:$0xff]
        %v1499 = vld [vmem:[%s284 + $0x4b] sm:$0xff]
        %v1500 = vld [vmem:[%s284 + $0x53] sm:$0xff]
        %v1501 = vld [vmem:[%s284 + $0x5b] sm:$0xff]
        %v1502 = vld [vmem:[%s284 + $0x63] sm:$0xff]
        %v1503 = vld [vmem:[%s284 + $0x6b] sm:$0xff]
        %v1504 = vld [vmem:[%s284 + $0x73] sm:$0xff]
        %v1505 = vld [vmem:[%s284 + $0x7b] sm:$0xff]
        %v1506 = vld [vmem:[%s284 + $0x83] sm:$0xff]
        %v1507 = vld [vmem:[%s284 + $0x8b] sm:$0xff]
        %v1508 = vld [vmem:[%s284 + $0x93] sm:$0xff]
        %v1509 = vld [vmem:[%s284 + $0x9b] sm:$0xff]
        %v1510 = vld [vmem:[%s284 + $0xa3] sm:$0xff]
        %v1511 = vld [vmem:[%s284 + $0xab] sm:$0xff]
        %v1512 = vld [vmem:[%s284 + $0xb3] sm:$0xff]
        %v1513 = vld [vmem:[%s284 + $0xbb] sm:$0xff]
        %v1514 = vld [vmem:[%s284 + $0xc3] sm:$0xff]
        %v1515 = vld [vmem:[%s284 + $0xcb] sm:$0xf]
        %s1516 = scalar_lea.vmem [#allocation6], 640
        %v1517 = vld [vmem:[%s1516] sm:$0xff]
        %v1518 = vld [vmem:[%s1516 + $0x8] sm:$0xff]
        %v1519 = vld [vmem:[%s1516 + $0x10] sm:$0xff]
        %v1520 = vld [vmem:[%s1516 + $0x18] sm:$0xff]
        %v1521 = vld [vmem:[%s1516 + $0x20] sm:$0xff]
        %v1522 = vld [vmem:[%s1516 + $0x28] sm:$0xff]
        %v1523 = vld [vmem:[%s1516 + $0x30] sm:$0xff]
        %v1524 = vld [vmem:[%s1516 + $0x38] sm:$0xff]
        %v1525 = vld [vmem:[%s1516 + $0x40] sm:$0xff]
        %v1526 = vld [vmem:[%s1516 + $0x48] sm:$0xff]
        %v1527 = vld [vmem:[%s1516 + $0x50] sm:$0xff]
        %v1528 = vld [vmem:[%s1516 + $0x58] sm:$0xff]
        %v1529 = vld [vmem:[%s1516 + $0x60] sm:$0xff]
        %v1530 = vld [vmem:[%s1516 + $0x68] sm:$0xff]
        %v1531 = vld [vmem:[%s1516 + $0x70] sm:$0xff]
        %v1532 = vld [vmem:[%s1516 + $0x78] sm:$0xff]
        %1533 = vmatprep.subr.mxu0 0.0
        %1534 = vmatpush1.msra.mxu0 %v1532
        %1535 = vmatprep.subr.mxu0 0.0
        %1536 = vmatpush1.msra.mxu0 %v1531
        %1537 = vmatprep.subr.mxu0 0.0
        %1538 = vmatpush1.msra.mxu0 %v1530
        %1539 = vmatprep.subr.mxu0 0.0
        %1540 = vmatpush1.msra.mxu0 %v1529
        %1541 = vmatprep.subr.mxu0 0.0
        %1542 = vmatpush1.msra.mxu0 %v1528
        %1543 = vmatprep.subr.mxu0 0.0
        %1544 = vmatpush1.msra.mxu0 %v1527
        %1545 = vmatprep.subr.mxu0 0.0
        %1546 = vmatpush1.msra.mxu0 %v1526
        %1547 = vmatprep.subr.mxu0 0.0
        %1548 = vmatpush1.msra.mxu0 %v1525
        %1549 = vmatprep.subr.mxu0 0.0
        %1550 = vmatpush1.msra.mxu0 %v1524
        %1551 = vmatprep.subr.mxu0 0.0
        %1552 = vmatpush1.msra.mxu0 %v1523
        %1553 = vmatprep.subr.mxu0 0.0
        %1554 = vmatpush1.msra.mxu0 %v1522
        %1555 = vmatprep.subr.mxu0 0.0
        %1556 = vmatpush1.msra.mxu0 %v1521
        %1557 = vmatprep.subr.mxu0 0.0
        %1558 = vmatpush1.msra.mxu0 %v1520
        %1559 = vmatprep.subr.mxu0 0.0
        %1560 = vmatpush1.msra.mxu0 %v1519
        %1561 = vmatprep.subr.mxu0 0.0
        %1562 = vmatpush1.msra.mxu0 %v1518
        %1563 = vmatprep.subr.mxu0 0.0
        %1564 = vmatpush1.msra.mxu0 %v1517
        %1565 = vmatprep.subr.mxu0 0.0
        %1566 = vmatpush2.msra.mxu0 0.0
        %1567 = vmatprep.subr.mxu0 0.0
        %1568 = vmatpush2.msra.mxu0 0.0
        %1569 = vmatprep.subr.mxu0 0.0
        %1570 = vmatpush2.msra.mxu0 0.0
        %1571 = vmatprep.subr.mxu0 0.0
        %1572 = vmatpush2.msra.mxu0 0.0
        %1573 = vmatprep.subr.mxu0 0.0
        %1574 = vmatpush2.msra.mxu0 0.0
        %1575 = vmatprep.subr.mxu0 0.0
        %1576 = vmatpush2.msra.mxu0 0.0
        %1577 = vmatprep.subr.mxu0 0.0
        %1578 = vmatpush2.msra.mxu0 0.0
        %1579 = vmatprep.subr.mxu0 0.0
        %1580 = vmatpush2.msra.mxu0 0.0
        %1581 = vmatprep.subr.mxu0 0.0
        %1582 = vmatpush2.msra.mxu0 0.0
        %1583 = vmatprep.subr.mxu0 0.0
        %1584 = vmatpush2.msra.mxu0 0.0
        %1585 = vmatprep.subr.mxu0 0.0
        %1586 = vmatpush2.msra.mxu0 0.0
        %1587 = vmatprep.subr.mxu0 0.0
        %1588 = vmatpush2.msra.mxu0 0.0
        %1589 = vmatprep.subr.mxu0 0.0
        %1590 = vmatpush2.msra.mxu0 0.0
        %1591 = vmatprep.subr.mxu0 0.0
        %1592 = vmatpush2.msra.mxu0 0.0
        %1593 = vmatprep.subr.mxu0 0.0
        %1594 = vmatpush2.msra.mxu0 0.0
        %1595 = vmatprep.subr.mxu0 0.0
        %1596 = vmatpush2.msra.mxu0 0.0
        %1597 = vmatprep.mubr.f32.mxu0 0.0
        %1598 = vmatmul.mubr.f32.gmra.mxu0 %v1493
        %v1599 = vpop.f32.mrf.mxu0
        %v1600 = vadd.f32 0.0, %v1599
        %v1601 = vpop.f32.mrf.mxu0
        %1602 = vmatprep.mubr.f32.mxu0 0.0
        %1603 = vmatmul.mubr.f32.gmra.mxu0 %v1494
        %v1604 = vpop.f32.mrf.mxu0
        %v1605 = vadd.f32 0.0, %v1604
        %v1606 = vpop.f32.mrf.mxu0
        %1607 = vmatprep.mubr.f32.mxu0 0.0
        %1608 = vmatmul.mubr.f32.gmra.mxu0 %v1495
        %v1609 = vpop.f32.mrf.mxu0
        %v1610 = vadd.f32 0.0, %v1609
        %v1611 = vpop.f32.mrf.mxu0
        %1612 = vmatprep.mubr.f32.mxu0 0.0
        %1613 = vmatmul.mubr.f32.gmra.mxu0 %v1496
        %v1614 = vpop.f32.mrf.mxu0
        %v1615 = vadd.f32 0.0, %v1614
        %v1616 = vpop.f32.mrf.mxu0
        %1617 = vmatprep.mubr.f32.mxu0 0.0
        %1618 = vmatmul.mubr.f32.gmra.mxu0 %v1497
        %v1619 = vpop.f32.mrf.mxu0
        %v1620 = vadd.f32 0.0, %v1619
        %v1621 = vpop.f32.mrf.mxu0
        %1622 = vmatprep.mubr.f32.mxu0 0.0
        %1623 = vmatmul.mubr.f32.gmra.mxu0 %v1498
        %v1624 = vpop.f32.mrf.mxu0
        %v1625 = vadd.f32 0.0, %v1624
        %v1626 = vpop.f32.mrf.mxu0
        %1627 = vmatprep.mubr.f32.mxu0 0.0
        %1628 = vmatmul.mubr.f32.gmra.mxu0 %v1499
        %v1629 = vpop.f32.mrf.mxu0
        %v1630 = vadd.f32 0.0, %v1629
        %v1631 = vpop.f32.mrf.mxu0
        %1632 = vmatprep.mubr.f32.mxu0 0.0
        %1633 = vmatmul.mubr.f32.gmra.mxu0 %v1500
        %v1634 = vpop.f32.mrf.mxu0
        %v1635 = vadd.f32 0.0, %v1634
        %v1636 = vpop.f32.mrf.mxu0
        %1637 = vmatprep.mubr.f32.mxu0 0.0
        %1638 = vmatmul.mubr.f32.gmra.mxu0 %v1501
        %v1639 = vpop.f32.mrf.mxu0
        %v1640 = vadd.f32 0.0, %v1639
        %v1641 = vpop.f32.mrf.mxu0
        %1642 = vmatprep.mubr.f32.mxu0 0.0
        %1643 = vmatmul.mubr.f32.gmra.mxu0 %v1502
        %v1644 = vpop.f32.mrf.mxu0
        %v1645 = vadd.f32 0.0, %v1644
        %v1646 = vpop.f32.mrf.mxu0
        %1647 = vmatprep.mubr.f32.mxu0 0.0
        %1648 = vmatmul.mubr.f32.gmra.mxu0 %v1503
        %v1649 = vpop.f32.mrf.mxu0
        %v1650 = vadd.f32 0.0, %v1649
        %v1651 = vpop.f32.mrf.mxu0
        %1652 = vmatprep.mubr.f32.mxu0 0.0
        %1653 = vmatmul.mubr.f32.gmra.mxu0 %v1504
        %v1654 = vpop.f32.mrf.mxu0
        %v1655 = vadd.f32 0.0, %v1654
        %v1656 = vpop.f32.mrf.mxu0
        %1657 = vmatprep.mubr.f32.mxu0 0.0
        %1658 = vmatmul.mubr.f32.gmra.mxu0 %v1505
        %v1659 = vpop.f32.mrf.mxu0
        %v1660 = vadd.f32 0.0, %v1659
        %v1661 = vpop.f32.mrf.mxu0
        %1662 = vmatprep.mubr.f32.mxu0 0.0
        %1663 = vmatmul.mubr.f32.gmra.mxu0 %v1506
        %v1664 = vpop.f32.mrf.mxu0
        %v1665 = vadd.f32 0.0, %v1664
        %v1666 = vpop.f32.mrf.mxu0
        %1667 = vmatprep.mubr.f32.mxu0 0.0
        %1668 = vmatmul.mubr.f32.gmra.mxu0 %v1507
        %v1669 = vpop.f32.mrf.mxu0
        %v1670 = vadd.f32 0.0, %v1669
        %v1671 = vpop.f32.mrf.mxu0
        %1672 = vmatprep.mubr.f32.mxu0 0.0
        %1673 = vmatmul.mubr.f32.gmra.mxu0 %v1508
        %v1674 = vpop.f32.mrf.mxu0
        %v1675 = vadd.f32 0.0, %v1674
        %v1676 = vpop.f32.mrf.mxu0
        %1677 = vmatprep.mubr.f32.mxu0 0.0
        %1678 = vmatmul.mubr.f32.gmra.mxu0 %v1509
        %v1679 = vpop.f32.mrf.mxu0
        %v1680 = vadd.f32 0.0, %v1679
        %v1681 = vpop.f32.mrf.mxu0
        %1682 = vmatprep.mubr.f32.mxu0 0.0
        %1683 = vmatmul.mubr.f32.gmra.mxu0 %v1510
        %v1684 = vpop.f32.mrf.mxu0
        %v1685 = vadd.f32 0.0, %v1684
        %v1686 = vpop.f32.mrf.mxu0
        %1687 = vmatprep.mubr.f32.mxu0 0.0
        %1688 = vmatmul.mubr.f32.gmra.mxu0 %v1511
        %v1689 = vpop.f32.mrf.mxu0
        %v1690 = vadd.f32 0.0, %v1689
        %v1691 = vpop.f32.mrf.mxu0
        %1692 = vmatprep.mubr.f32.mxu0 0.0
        %1693 = vmatmul.mubr.f32.gmra.mxu0 %v1512
        %v1694 = vpop.f32.mrf.mxu0
        %v1695 = vadd.f32 0.0, %v1694
        %v1696 = vpop.f32.mrf.mxu0
        %1697 = vmatprep.mubr.f32.mxu0 0.0
        %1698 = vmatmul.mubr.f32.gmra.mxu0 %v1513
        %v1699 = vpop.f32.mrf.mxu0
        %v1700 = vadd.f32 0.0, %v1699
        %v1701 = vpop.f32.mrf.mxu0
        %1702 = vmatprep.mubr.f32.mxu0 0.0
        %1703 = vmatmul.mubr.f32.gmra.mxu0 %v1514
        %v1704 = vpop.f32.mrf.mxu0
        %v1705 = vadd.f32 0.0, %v1704
        %v1706 = vpop.f32.mrf.mxu0
        %1707 = vmatprep.mubr.f32.mxu0 0.0
        %1708 = vmatmul.mubr.f32.gmra.mxu0 %v1515
        %v1709 = vpop.f32.mrf.mxu0
        %v1710 = vadd.f32 0.0, %v1709
        %v1711 = vpop.f32.mrf.mxu0
        %1712 = vdwg.mxu0
        %v1713 = vadd.f32 %v1470, %v1600
        %v1714 = vadd.f32 %v1471, %v1605
        %v1715 = vadd.f32 %v1472, %v1610
        %v1716 = vadd.f32 %v1473, %v1615
        %v1717 = vadd.f32 %v1474, %v1620
        %v1718 = vadd.f32 %v1475, %v1625
        %v1719 = vadd.f32 %v1476, %v1630
        %v1720 = vadd.f32 %v1477, %v1635
        %v1721 = vadd.f32 %v1478, %v1640
        %v1722 = vadd.f32 %v1479, %v1645
        %v1723 = vadd.f32 %v1480, %v1650
        %v1724 = vadd.f32 %v1481, %v1655
        %v1725 = vadd.f32 %v1482, %v1660
        %v1726 = vadd.f32 %v1483, %v1665
        %v1727 = vadd.f32 %v1484, %v1670
        %v1728 = vadd.f32 %v1485, %v1675
        %v1729 = vadd.f32 %v1486, %v1680
        %v1730 = vadd.f32 %v1487, %v1685
        %v1731 = vadd.f32 %v1488, %v1690
        %v1732 = vadd.f32 %v1489, %v1695
        %v1733 = vadd.f32 %v1490, %v1700
        %v1734 = vadd.f32 %v1491, %v1705
        %v1735 = vadd.f32 %v1492, %v1710
        %v1736 = vld [vmem:[%s284 + $0x2b] sm:$0xff]
        %v1737 = vld [vmem:[%s284 + $0x33] sm:$0xff]
        %v1738 = vld [vmem:[%s284 + $0x3b] sm:$0xff]
        %v1739 = vld [vmem:[%s284 + $0x43] sm:$0xff]
        %v1740 = vld [vmem:[%s284 + $0x4b] sm:$0xff]
        %v1741 = vld [vmem:[%s284 + $0x53] sm:$0xff]
        %v1742 = vld [vmem:[%s284 + $0x5b] sm:$0xff]
        %v1743 = vld [vmem:[%s284 + $0x63] sm:$0xff]
        %v1744 = vld [vmem:[%s284 + $0x6b] sm:$0xff]
        %v1745 = vld [vmem:[%s284 + $0x73] sm:$0xff]
        %v1746 = vld [vmem:[%s284 + $0x7b] sm:$0xff]
        %v1747 = vld [vmem:[%s284 + $0x83] sm:$0xff]
        %v1748 = vld [vmem:[%s284 + $0x8b] sm:$0xff]
        %v1749 = vld [vmem:[%s284 + $0x93] sm:$0xff]
        %v1750 = vld [vmem:[%s284 + $0x9b] sm:$0xff]
        %v1751 = vld [vmem:[%s284 + $0xa3] sm:$0xff]
        %v1752 = vld [vmem:[%s284 + $0xab] sm:$0xff]
        %v1753 = vld [vmem:[%s284 + $0xb3] sm:$0xff]
        %v1754 = vld [vmem:[%s284 + $0xbb] sm:$0xff]
        %v1755 = vld [vmem:[%s284 + $0xc3] sm:$0xff]
        %v1756 = vld [vmem:[%s284 + $0xcb] sm:$0xff]
        %v1757 = vld [vmem:[%s284 + $0xd3] sm:$0xff]
        %v1758 = vld [vmem:[%s284 + $0xdb] sm:$0xf]
        %s1759 = scalar_lea.vmem [#allocation6], 768
        %v1760 = vld [vmem:[%s1759] sm:$0xff]
        %v1761 = vld [vmem:[%s1759 + $0x8] sm:$0xff]
        %v1762 = vld [vmem:[%s1759 + $0x10] sm:$0xff]
        %v1763 = vld [vmem:[%s1759 + $0x18] sm:$0xff]
        %v1764 = vld [vmem:[%s1759 + $0x20] sm:$0xff]
        %v1765 = vld [vmem:[%s1759 + $0x28] sm:$0xff]
        %v1766 = vld [vmem:[%s1759 + $0x30] sm:$0xff]
        %v1767 = vld [vmem:[%s1759 + $0x38] sm:$0xff]
        %v1768 = vld [vmem:[%s1759 + $0x40] sm:$0xff]
        %v1769 = vld [vmem:[%s1759 + $0x48] sm:$0xff]
        %v1770 = vld [vmem:[%s1759 + $0x50] sm:$0xff]
        %v1771 = vld [vmem:[%s1759 + $0x58] sm:$0xff]
        %v1772 = vld [vmem:[%s1759 + $0x60] sm:$0xff]
        %v1773 = vld [vmem:[%s1759 + $0x68] sm:$0xff]
        %v1774 = vld [vmem:[%s1759 + $0x70] sm:$0xff]
        %v1775 = vld [vmem:[%s1759 + $0x78] sm:$0xff]
        %1776 = vmatprep.subr.mxu0 0.0
        %1777 = vmatpush1.msra.mxu0 %v1775
        %1778 = vmatprep.subr.mxu0 0.0
        %1779 = vmatpush1.msra.mxu0 %v1774
        %1780 = vmatprep.subr.mxu0 0.0
        %1781 = vmatpush1.msra.mxu0 %v1773
        %1782 = vmatprep.subr.mxu0 0.0
        %1783 = vmatpush1.msra.mxu0 %v1772
        %1784 = vmatprep.subr.mxu0 0.0
        %1785 = vmatpush1.msra.mxu0 %v1771
        %1786 = vmatprep.subr.mxu0 0.0
        %1787 = vmatpush1.msra.mxu0 %v1770
        %1788 = vmatprep.subr.mxu0 0.0
        %1789 = vmatpush1.msra.mxu0 %v1769
        %1790 = vmatprep.subr.mxu0 0.0
        %1791 = vmatpush1.msra.mxu0 %v1768
        %1792 = vmatprep.subr.mxu0 0.0
        %1793 = vmatpush1.msra.mxu0 %v1767
        %1794 = vmatprep.subr.mxu0 0.0
        %1795 = vmatpush1.msra.mxu0 %v1766
        %1796 = vmatprep.subr.mxu0 0.0
        %1797 = vmatpush1.msra.mxu0 %v1765
        %1798 = vmatprep.subr.mxu0 0.0
        %1799 = vmatpush1.msra.mxu0 %v1764
        %1800 = vmatprep.subr.mxu0 0.0
        %1801 = vmatpush1.msra.mxu0 %v1763
        %1802 = vmatprep.subr.mxu0 0.0
        %1803 = vmatpush1.msra.mxu0 %v1762
        %1804 = vmatprep.subr.mxu0 0.0
        %1805 = vmatpush1.msra.mxu0 %v1761
        %1806 = vmatprep.subr.mxu0 0.0
        %1807 = vmatpush1.msra.mxu0 %v1760
        %1808 = vmatprep.subr.mxu0 0.0
        %1809 = vmatpush2.msra.mxu0 0.0
        %1810 = vmatprep.subr.mxu0 0.0
        %1811 = vmatpush2.msra.mxu0 0.0
        %1812 = vmatprep.subr.mxu0 0.0
        %1813 = vmatpush2.msra.mxu0 0.0
        %1814 = vmatprep.subr.mxu0 0.0
        %1815 = vmatpush2.msra.mxu0 0.0
        %1816 = vmatprep.subr.mxu0 0.0
        %1817 = vmatpush2.msra.mxu0 0.0
        %1818 = vmatprep.subr.mxu0 0.0
        %1819 = vmatpush2.msra.mxu0 0.0
        %1820 = vmatprep.subr.mxu0 0.0
        %1821 = vmatpush2.msra.mxu0 0.0
        %1822 = vmatprep.subr.mxu0 0.0
        %1823 = vmatpush2.msra.mxu0 0.0
        %1824 = vmatprep.subr.mxu0 0.0
        %1825 = vmatpush2.msra.mxu0 0.0
        %1826 = vmatprep.subr.mxu0 0.0
        %1827 = vmatpush2.msra.mxu0 0.0
        %1828 = vmatprep.subr.mxu0 0.0
        %1829 = vmatpush2.msra.mxu0 0.0
        %1830 = vmatprep.subr.mxu0 0.0
        %1831 = vmatpush2.msra.mxu0 0.0
        %1832 = vmatprep.subr.mxu0 0.0
        %1833 = vmatpush2.msra.mxu0 0.0
        %1834 = vmatprep.subr.mxu0 0.0
        %1835 = vmatpush2.msra.mxu0 0.0
        %1836 = vmatprep.subr.mxu0 0.0
        %1837 = vmatpush2.msra.mxu0 0.0
        %1838 = vmatprep.subr.mxu0 0.0
        %1839 = vmatpush2.msra.mxu0 0.0
        %1840 = vmatprep.mubr.f32.mxu0 0.0
        %1841 = vmatmul.mubr.f32.gmra.mxu0 %v1736
        %v1842 = vpop.f32.mrf.mxu0
        %v1843 = vadd.f32 0.0, %v1842
        %v1844 = vpop.f32.mrf.mxu0
        %1845 = vmatprep.mubr.f32.mxu0 0.0
        %1846 = vmatmul.mubr.f32.gmra.mxu0 %v1737
        %v1847 = vpop.f32.mrf.mxu0
        %v1848 = vadd.f32 0.0, %v1847
        %v1849 = vpop.f32.mrf.mxu0
        %1850 = vmatprep.mubr.f32.mxu0 0.0
        %1851 = vmatmul.mubr.f32.gmra.mxu0 %v1738
        %v1852 = vpop.f32.mrf.mxu0
        %v1853 = vadd.f32 0.0, %v1852
        %v1854 = vpop.f32.mrf.mxu0
        %1855 = vmatprep.mubr.f32.mxu0 0.0
        %1856 = vmatmul.mubr.f32.gmra.mxu0 %v1739
        %v1857 = vpop.f32.mrf.mxu0
        %v1858 = vadd.f32 0.0, %v1857
        %v1859 = vpop.f32.mrf.mxu0
        %1860 = vmatprep.mubr.f32.mxu0 0.0
        %1861 = vmatmul.mubr.f32.gmra.mxu0 %v1740
        %v1862 = vpop.f32.mrf.mxu0
        %v1863 = vadd.f32 0.0, %v1862
        %v1864 = vpop.f32.mrf.mxu0
        %1865 = vmatprep.mubr.f32.mxu0 0.0
        %1866 = vmatmul.mubr.f32.gmra.mxu0 %v1741
        %v1867 = vpop.f32.mrf.mxu0
        %v1868 = vadd.f32 0.0, %v1867
        %v1869 = vpop.f32.mrf.mxu0
        %1870 = vmatprep.mubr.f32.mxu0 0.0
        %1871 = vmatmul.mubr.f32.gmra.mxu0 %v1742
        %v1872 = vpop.f32.mrf.mxu0
        %v1873 = vadd.f32 0.0, %v1872
        %v1874 = vpop.f32.mrf.mxu0
        %1875 = vmatprep.mubr.f32.mxu0 0.0
        %1876 = vmatmul.mubr.f32.gmra.mxu0 %v1743
        %v1877 = vpop.f32.mrf.mxu0
        %v1878 = vadd.f32 0.0, %v1877
        %v1879 = vpop.f32.mrf.mxu0
        %1880 = vmatprep.mubr.f32.mxu0 0.0
        %1881 = vmatmul.mubr.f32.gmra.mxu0 %v1744
        %v1882 = vpop.f32.mrf.mxu0
        %v1883 = vadd.f32 0.0, %v1882
        %v1884 = vpop.f32.mrf.mxu0
        %1885 = vmatprep.mubr.f32.mxu0 0.0
        %1886 = vmatmul.mubr.f32.gmra.mxu0 %v1745
        %v1887 = vpop.f32.mrf.mxu0
        %v1888 = vadd.f32 0.0, %v1887
        %v1889 = vpop.f32.mrf.mxu0
        %1890 = vmatprep.mubr.f32.mxu0 0.0
        %1891 = vmatmul.mubr.f32.gmra.mxu0 %v1746
        %v1892 = vpop.f32.mrf.mxu0
        %v1893 = vadd.f32 0.0, %v1892
        %v1894 = vpop.f32.mrf.mxu0
        %1895 = vmatprep.mubr.f32.mxu0 0.0
        %1896 = vmatmul.mubr.f32.gmra.mxu0 %v1747
        %v1897 = vpop.f32.mrf.mxu0
        %v1898 = vadd.f32 0.0, %v1897
        %v1899 = vpop.f32.mrf.mxu0
        %1900 = vmatprep.mubr.f32.mxu0 0.0
        %1901 = vmatmul.mubr.f32.gmra.mxu0 %v1748
        %v1902 = vpop.f32.mrf.mxu0
        %v1903 = vadd.f32 0.0, %v1902
        %v1904 = vpop.f32.mrf.mxu0
        %1905 = vmatprep.mubr.f32.mxu0 0.0
        %1906 = vmatmul.mubr.f32.gmra.mxu0 %v1749
        %v1907 = vpop.f32.mrf.mxu0
        %v1908 = vadd.f32 0.0, %v1907
        %v1909 = vpop.f32.mrf.mxu0
        %1910 = vmatprep.mubr.f32.mxu0 0.0
        %1911 = vmatmul.mubr.f32.gmra.mxu0 %v1750
        %v1912 = vpop.f32.mrf.mxu0
        %v1913 = vadd.f32 0.0, %v1912
        %v1914 = vpop.f32.mrf.mxu0
        %1915 = vmatprep.mubr.f32.mxu0 0.0
        %1916 = vmatmul.mubr.f32.gmra.mxu0 %v1751
        %v1917 = vpop.f32.mrf.mxu0
        %v1918 = vadd.f32 0.0, %v1917
        %v1919 = vpop.f32.mrf.mxu0
        %1920 = vmatprep.mubr.f32.mxu0 0.0
        %1921 = vmatmul.mubr.f32.gmra.mxu0 %v1752
        %v1922 = vpop.f32.mrf.mxu0
        %v1923 = vadd.f32 0.0, %v1922
        %v1924 = vpop.f32.mrf.mxu0
        %1925 = vmatprep.mubr.f32.mxu0 0.0
        %1926 = vmatmul.mubr.f32.gmra.mxu0 %v1753
        %v1927 = vpop.f32.mrf.mxu0
        %v1928 = vadd.f32 0.0, %v1927
        %v1929 = vpop.f32.mrf.mxu0
        %1930 = vmatprep.mubr.f32.mxu0 0.0
        %1931 = vmatmul.mubr.f32.gmra.mxu0 %v1754
        %v1932 = vpop.f32.mrf.mxu0
        %v1933 = vadd.f32 0.0, %v1932
        %v1934 = vpop.f32.mrf.mxu0
        %1935 = vmatprep.mubr.f32.mxu0 0.0
        %1936 = vmatmul.mubr.f32.gmra.mxu0 %v1755
        %v1937 = vpop.f32.mrf.mxu0
        %v1938 = vadd.f32 0.0, %v1937
        %v1939 = vpop.f32.mrf.mxu0
        %1940 = vmatprep.mubr.f32.mxu0 0.0
        %1941 = vmatmul.mubr.f32.gmra.mxu0 %v1756
        %v1942 = vpop.f32.mrf.mxu0
        %v1943 = vadd.f32 0.0, %v1942
        %v1944 = vpop.f32.mrf.mxu0
        %1945 = vmatprep.mubr.f32.mxu0 0.0
        %1946 = vmatmul.mubr.f32.gmra.mxu0 %v1757
        %v1947 = vpop.f32.mrf.mxu0
        %v1948 = vadd.f32 0.0, %v1947
        %v1949 = vpop.f32.mrf.mxu0
        %1950 = vmatprep.mubr.f32.mxu0 0.0
        %1951 = vmatmul.mubr.f32.gmra.mxu0 %v1758
        %v1952 = vpop.f32.mrf.mxu0
        %v1953 = vadd.f32 0.0, %v1952
        %v1954 = vpop.f32.mrf.mxu0
        %1955 = vdwg.mxu0
        %v1956 = vadd.f32 %v1713, %v1843
        %v1957 = vadd.f32 %v1714, %v1848
        %v1958 = vadd.f32 %v1715, %v1853
        %v1959 = vadd.f32 %v1716, %v1858
        %v1960 = vadd.f32 %v1717, %v1863
        %v1961 = vadd.f32 %v1718, %v1868
        %v1962 = vadd.f32 %v1719, %v1873
        %v1963 = vadd.f32 %v1720, %v1878
        %v1964 = vadd.f32 %v1721, %v1883
        %v1965 = vadd.f32 %v1722, %v1888
        %v1966 = vadd.f32 %v1723, %v1893
        %v1967 = vadd.f32 %v1724, %v1898
        %v1968 = vadd.f32 %v1725, %v1903
        %v1969 = vadd.f32 %v1726, %v1908
        %v1970 = vadd.f32 %v1727, %v1913
        %v1971 = vadd.f32 %v1728, %v1918
        %v1972 = vadd.f32 %v1729, %v1923
        %v1973 = vadd.f32 %v1730, %v1928
        %v1974 = vadd.f32 %v1731, %v1933
        %v1975 = vadd.f32 %v1732, %v1938
        %v1976 = vadd.f32 %v1733, %v1943
        %v1977 = vadd.f32 %v1734, %v1948
        %v1978 = vadd.f32 %v1735, %v1953
        %v1979 = vld [vmem:[%s284 + $0x2c] sm:$0xff]
        %v1980 = vld [vmem:[%s284 + $0x34] sm:$0xff]
        %v1981 = vld [vmem:[%s284 + $0x3c] sm:$0xff]
        %v1982 = vld [vmem:[%s284 + $0x44] sm:$0xff]
        %v1983 = vld [vmem:[%s284 + $0x4c] sm:$0xff]
        %v1984 = vld [vmem:[%s284 + $0x54] sm:$0xff]
        %v1985 = vld [vmem:[%s284 + $0x5c] sm:$0xff]
        %v1986 = vld [vmem:[%s284 + $0x64] sm:$0xff]
        %v1987 = vld [vmem:[%s284 + $0x6c] sm:$0xff]
        %v1988 = vld [vmem:[%s284 + $0x74] sm:$0xff]
        %v1989 = vld [vmem:[%s284 + $0x7c] sm:$0xff]
        %v1990 = vld [vmem:[%s284 + $0x84] sm:$0xff]
        %v1991 = vld [vmem:[%s284 + $0x8c] sm:$0xff]
        %v1992 = vld [vmem:[%s284 + $0x94] sm:$0xff]
        %v1993 = vld [vmem:[%s284 + $0x9c] sm:$0xff]
        %v1994 = vld [vmem:[%s284 + $0xa4] sm:$0xff]
        %v1995 = vld [vmem:[%s284 + $0xac] sm:$0xff]
        %v1996 = vld [vmem:[%s284 + $0xb4] sm:$0xff]
        %v1997 = vld [vmem:[%s284 + $0xbc] sm:$0xff]
        %v1998 = vld [vmem:[%s284 + $0xc4] sm:$0xff]
        %v1999 = vld [vmem:[%s284 + $0xcc] sm:$0xff]
        %v2000 = vld [vmem:[%s284 + $0xd4] sm:$0xff]
        %v2001 = vld [vmem:[%s284 + $0xdc] sm:$0xf]
        %s2002 = scalar_lea.vmem [#allocation6], 896
        %v2003 = vld [vmem:[%s2002] sm:$0xff]
        %v2004 = vld [vmem:[%s2002 + $0x8] sm:$0xff]
        %v2005 = vld [vmem:[%s2002 + $0x10] sm:$0xff]
        %v2006 = vld [vmem:[%s2002 + $0x18] sm:$0xff]
        %v2007 = vld [vmem:[%s2002 + $0x20] sm:$0xff]
        %v2008 = vld [vmem:[%s2002 + $0x28] sm:$0xff]
        %v2009 = vld [vmem:[%s2002 + $0x30] sm:$0xff]
        %v2010 = vld [vmem:[%s2002 + $0x38] sm:$0xff]
        %v2011 = vld [vmem:[%s2002 + $0x40] sm:$0xff]
        %v2012 = vld [vmem:[%s2002 + $0x48] sm:$0xff]
        %v2013 = vld [vmem:[%s2002 + $0x50] sm:$0xff]
        %v2014 = vld [vmem:[%s2002 + $0x58] sm:$0xff]
        %v2015 = vld [vmem:[%s2002 + $0x60] sm:$0xff]
        %v2016 = vld [vmem:[%s2002 + $0x68] sm:$0xff]
        %v2017 = vld [vmem:[%s2002 + $0x70] sm:$0xff]
        %v2018 = vld [vmem:[%s2002 + $0x78] sm:$0xff]
        %2019 = vmatprep.subr.mxu0 0.0
        %2020 = vmatpush1.msra.mxu0 %v2018
        %2021 = vmatprep.subr.mxu0 0.0
        %2022 = vmatpush1.msra.mxu0 %v2017
        %2023 = vmatprep.subr.mxu0 0.0
        %2024 = vmatpush1.msra.mxu0 %v2016
        %2025 = vmatprep.subr.mxu0 0.0
        %2026 = vmatpush1.msra.mxu0 %v2015
        %2027 = vmatprep.subr.mxu0 0.0
        %2028 = vmatpush1.msra.mxu0 %v2014
        %2029 = vmatprep.subr.mxu0 0.0
        %2030 = vmatpush1.msra.mxu0 %v2013
        %2031 = vmatprep.subr.mxu0 0.0
        %2032 = vmatpush1.msra.mxu0 %v2012
        %2033 = vmatprep.subr.mxu0 0.0
        %2034 = vmatpush1.msra.mxu0 %v2011
        %2035 = vmatprep.subr.mxu0 0.0
        %2036 = vmatpush1.msra.mxu0 %v2010
        %2037 = vmatprep.subr.mxu0 0.0
        %2038 = vmatpush1.msra.mxu0 %v2009
        %2039 = vmatprep.subr.mxu0 0.0
        %2040 = vmatpush1.msra.mxu0 %v2008
        %2041 = vmatprep.subr.mxu0 0.0
        %2042 = vmatpush1.msra.mxu0 %v2007
        %2043 = vmatprep.subr.mxu0 0.0
        %2044 = vmatpush1.msra.mxu0 %v2006
        %2045 = vmatprep.subr.mxu0 0.0
        %2046 = vmatpush1.msra.mxu0 %v2005
        %2047 = vmatprep.subr.mxu0 0.0
        %2048 = vmatpush1.msra.mxu0 %v2004
        %2049 = vmatprep.subr.mxu0 0.0
        %2050 = vmatpush1.msra.mxu0 %v2003
        %2051 = vmatprep.subr.mxu0 0.0
        %2052 = vmatpush2.msra.mxu0 0.0
        %2053 = vmatprep.subr.mxu0 0.0
        %2054 = vmatpush2.msra.mxu0 0.0
        %2055 = vmatprep.subr.mxu0 0.0
        %2056 = vmatpush2.msra.mxu0 0.0
        %2057 = vmatprep.subr.mxu0 0.0
        %2058 = vmatpush2.msra.mxu0 0.0
        %2059 = vmatprep.subr.mxu0 0.0
        %2060 = vmatpush2.msra.mxu0 0.0
        %2061 = vmatprep.subr.mxu0 0.0
        %2062 = vmatpush2.msra.mxu0 0.0
        %2063 = vmatprep.subr.mxu0 0.0
        %2064 = vmatpush2.msra.mxu0 0.0
        %2065 = vmatprep.subr.mxu0 0.0
        %2066 = vmatpush2.msra.mxu0 0.0
        %2067 = vmatprep.subr.mxu0 0.0
        %2068 = vmatpush2.msra.mxu0 0.0
        %2069 = vmatprep.subr.mxu0 0.0
        %2070 = vmatpush2.msra.mxu0 0.0
        %2071 = vmatprep.subr.mxu0 0.0
        %2072 = vmatpush2.msra.mxu0 0.0
        %2073 = vmatprep.subr.mxu0 0.0
        %2074 = vmatpush2.msra.mxu0 0.0
        %2075 = vmatprep.subr.mxu0 0.0
        %2076 = vmatpush2.msra.mxu0 0.0
        %2077 = vmatprep.subr.mxu0 0.0
        %2078 = vmatpush2.msra.mxu0 0.0
        %2079 = vmatprep.subr.mxu0 0.0
        %2080 = vmatpush2.msra.mxu0 0.0
        %2081 = vmatprep.subr.mxu0 0.0
        %2082 = vmatpush2.msra.mxu0 0.0
        %2083 = vmatprep.mubr.f32.mxu0 0.0
        %2084 = vmatmul.mubr.f32.gmra.mxu0 %v1979
        %v2085 = vpop.f32.mrf.mxu0
        %v2086 = vadd.f32 0.0, %v2085
        %v2087 = vpop.f32.mrf.mxu0
        %2088 = vmatprep.mubr.f32.mxu0 0.0
        %2089 = vmatmul.mubr.f32.gmra.mxu0 %v1980
        %v2090 = vpop.f32.mrf.mxu0
        %v2091 = vadd.f32 0.0, %v2090
        %v2092 = vpop.f32.mrf.mxu0
        %2093 = vmatprep.mubr.f32.mxu0 0.0
        %2094 = vmatmul.mubr.f32.gmra.mxu0 %v1981
        %v2095 = vpop.f32.mrf.mxu0
        %v2096 = vadd.f32 0.0, %v2095
        %v2097 = vpop.f32.mrf.mxu0
        %2098 = vmatprep.mubr.f32.mxu0 0.0
        %2099 = vmatmul.mubr.f32.gmra.mxu0 %v1982
        %v2100 = vpop.f32.mrf.mxu0
        %v2101 = vadd.f32 0.0, %v2100
        %v2102 = vpop.f32.mrf.mxu0
        %2103 = vmatprep.mubr.f32.mxu0 0.0
        %2104 = vmatmul.mubr.f32.gmra.mxu0 %v1983
        %v2105 = vpop.f32.mrf.mxu0
        %v2106 = vadd.f32 0.0, %v2105
        %v2107 = vpop.f32.mrf.mxu0
        %2108 = vmatprep.mubr.f32.mxu0 0.0
        %2109 = vmatmul.mubr.f32.gmra.mxu0 %v1984
        %v2110 = vpop.f32.mrf.mxu0
        %v2111 = vadd.f32 0.0, %v2110
        %v2112 = vpop.f32.mrf.mxu0
        %2113 = vmatprep.mubr.f32.mxu0 0.0
        %2114 = vmatmul.mubr.f32.gmra.mxu0 %v1985
        %v2115 = vpop.f32.mrf.mxu0
        %v2116 = vadd.f32 0.0, %v2115
        %v2117 = vpop.f32.mrf.mxu0
        %2118 = vmatprep.mubr.f32.mxu0 0.0
        %2119 = vmatmul.mubr.f32.gmra.mxu0 %v1986
        %v2120 = vpop.f32.mrf.mxu0
        %v2121 = vadd.f32 0.0, %v2120
        %v2122 = vpop.f32.mrf.mxu0
        %2123 = vmatprep.mubr.f32.mxu0 0.0
        %2124 = vmatmul.mubr.f32.gmra.mxu0 %v1987
        %v2125 = vpop.f32.mrf.mxu0
        %v2126 = vadd.f32 0.0, %v2125
        %v2127 = vpop.f32.mrf.mxu0
        %2128 = vmatprep.mubr.f32.mxu0 0.0
        %2129 = vmatmul.mubr.f32.gmra.mxu0 %v1988
        %v2130 = vpop.f32.mrf.mxu0
        %v2131 = vadd.f32 0.0, %v2130
        %v2132 = vpop.f32.mrf.mxu0
        %2133 = vmatprep.mubr.f32.mxu0 0.0
        %2134 = vmatmul.mubr.f32.gmra.mxu0 %v1989
        %v2135 = vpop.f32.mrf.mxu0
        %v2136 = vadd.f32 0.0, %v2135
        %v2137 = vpop.f32.mrf.mxu0
        %2138 = vmatprep.mubr.f32.mxu0 0.0
        %2139 = vmatmul.mubr.f32.gmra.mxu0 %v1990
        %v2140 = vpop.f32.mrf.mxu0
        %v2141 = vadd.f32 0.0, %v2140
        %v2142 = vpop.f32.mrf.mxu0
        %2143 = vmatprep.mubr.f32.mxu0 0.0
        %2144 = vmatmul.mubr.f32.gmra.mxu0 %v1991
        %v2145 = vpop.f32.mrf.mxu0
        %v2146 = vadd.f32 0.0, %v2145
        %v2147 = vpop.f32.mrf.mxu0
        %2148 = vmatprep.mubr.f32.mxu0 0.0
        %2149 = vmatmul.mubr.f32.gmra.mxu0 %v1992
        %v2150 = vpop.f32.mrf.mxu0
        %v2151 = vadd.f32 0.0, %v2150
        %v2152 = vpop.f32.mrf.mxu0
        %2153 = vmatprep.mubr.f32.mxu0 0.0
        %2154 = vmatmul.mubr.f32.gmra.mxu0 %v1993
        %v2155 = vpop.f32.mrf.mxu0
        %v2156 = vadd.f32 0.0, %v2155
        %v2157 = vpop.f32.mrf.mxu0
        %2158 = vmatprep.mubr.f32.mxu0 0.0
        %2159 = vmatmul.mubr.f32.gmra.mxu0 %v1994
        %v2160 = vpop.f32.mrf.mxu0
        %v2161 = vadd.f32 0.0, %v2160
        %v2162 = vpop.f32.mrf.mxu0
        %2163 = vmatprep.mubr.f32.mxu0 0.0
        %2164 = vmatmul.mubr.f32.gmra.mxu0 %v1995
        %v2165 = vpop.f32.mrf.mxu0
        %v2166 = vadd.f32 0.0, %v2165
        %v2167 = vpop.f32.mrf.mxu0
        %2168 = vmatprep.mubr.f32.mxu0 0.0
        %2169 = vmatmul.mubr.f32.gmra.mxu0 %v1996
        %v2170 = vpop.f32.mrf.mxu0
        %v2171 = vadd.f32 0.0, %v2170
        %v2172 = vpop.f32.mrf.mxu0
        %2173 = vmatprep.mubr.f32.mxu0 0.0
        %2174 = vmatmul.mubr.f32.gmra.mxu0 %v1997
        %v2175 = vpop.f32.mrf.mxu0
        %v2176 = vadd.f32 0.0, %v2175
        %v2177 = vpop.f32.mrf.mxu0
        %2178 = vmatprep.mubr.f32.mxu0 0.0
        %2179 = vmatmul.mubr.f32.gmra.mxu0 %v1998
        %v2180 = vpop.f32.mrf.mxu0
        %v2181 = vadd.f32 0.0, %v2180
        %v2182 = vpop.f32.mrf.mxu0
        %2183 = vmatprep.mubr.f32.mxu0 0.0
        %2184 = vmatmul.mubr.f32.gmra.mxu0 %v1999
        %v2185 = vpop.f32.mrf.mxu0
        %v2186 = vadd.f32 0.0, %v2185
        %v2187 = vpop.f32.mrf.mxu0
        %2188 = vmatprep.mubr.f32.mxu0 0.0
        %2189 = vmatmul.mubr.f32.gmra.mxu0 %v2000
        %v2190 = vpop.f32.mrf.mxu0
        %v2191 = vadd.f32 0.0, %v2190
        %v2192 = vpop.f32.mrf.mxu0
        %2193 = vmatprep.mubr.f32.mxu0 0.0
        %2194 = vmatmul.mubr.f32.gmra.mxu0 %v2001
        %v2195 = vpop.f32.mrf.mxu0
        %v2196 = vadd.f32 0.0, %v2195
        %v2197 = vpop.f32.mrf.mxu0
        %2198 = vdwg.mxu0
        %v2199 = vadd.f32 %v1956, %v2086
        %v2200 = vadd.f32 %v1957, %v2091
        %v2201 = vadd.f32 %v1958, %v2096
        %v2202 = vadd.f32 %v1959, %v2101
        %v2203 = vadd.f32 %v1960, %v2106
        %v2204 = vadd.f32 %v1961, %v2111
        %v2205 = vadd.f32 %v1962, %v2116
        %v2206 = vadd.f32 %v1963, %v2121
        %v2207 = vadd.f32 %v1964, %v2126
        %v2208 = vadd.f32 %v1965, %v2131
        %v2209 = vadd.f32 %v1966, %v2136
        %v2210 = vadd.f32 %v1967, %v2141
        %v2211 = vadd.f32 %v1968, %v2146
        %v2212 = vadd.f32 %v1969, %v2151
        %v2213 = vadd.f32 %v1970, %v2156
        %v2214 = vadd.f32 %v1971, %v2161
        %v2215 = vadd.f32 %v1972, %v2166
        %v2216 = vadd.f32 %v1973, %v2171
        %v2217 = vadd.f32 %v1974, %v2176
        %v2218 = vadd.f32 %v1975, %v2181
        %v2219 = vadd.f32 %v1976, %v2186
        %v2220 = vadd.f32 %v1977, %v2191
        %v2221 = vadd.f32 %v1978, %v2196
        %v2222 = vld [vmem:[%s284 + $0x2d] sm:$0xff]
        %v2223 = vld [vmem:[%s284 + $0x35] sm:$0xff]
        %v2224 = vld [vmem:[%s284 + $0x3d] sm:$0xff]
        %v2225 = vld [vmem:[%s284 + $0x45] sm:$0xff]
        %v2226 = vld [vmem:[%s284 + $0x4d] sm:$0xff]
        %v2227 = vld [vmem:[%s284 + $0x55] sm:$0xff]
        %v2228 = vld [vmem:[%s284 + $0x5d] sm:$0xff]
        %v2229 = vld [vmem:[%s284 + $0x65] sm:$0xff]
        %v2230 = vld [vmem:[%s284 + $0x6d] sm:$0xff]
        %v2231 = vld [vmem:[%s284 + $0x75] sm:$0xff]
        %v2232 = vld [vmem:[%s284 + $0x7d] sm:$0xff]
        %v2233 = vld [vmem:[%s284 + $0x85] sm:$0xff]
        %v2234 = vld [vmem:[%s284 + $0x8d] sm:$0xff]
        %v2235 = vld [vmem:[%s284 + $0x95] sm:$0xff]
        %v2236 = vld [vmem:[%s284 + $0x9d] sm:$0xff]
        %v2237 = vld [vmem:[%s284 + $0xa5] sm:$0xff]
        %v2238 = vld [vmem:[%s284 + $0xad] sm:$0xff]
        %v2239 = vld [vmem:[%s284 + $0xb5] sm:$0xff]
        %v2240 = vld [vmem:[%s284 + $0xbd] sm:$0xff]
        %v2241 = vld [vmem:[%s284 + $0xc5] sm:$0xff]
        %v2242 = vld [vmem:[%s284 + $0xcd] sm:$0xff]
        %v2243 = vld [vmem:[%s284 + $0xd5] sm:$0xff]
        %v2244 = vld [vmem:[%s284 + $0xdd] sm:$0xf]
        %s2245 = scalar_lea.vmem [#allocation6], 1024
        %v2246 = vld [vmem:[%s2245] sm:$0xff]
        %v2247 = vld [vmem:[%s2245 + $0x8] sm:$0xff]
        %v2248 = vld [vmem:[%s2245 + $0x10] sm:$0xff]
        %v2249 = vld [vmem:[%s2245 + $0x18] sm:$0xff]
        %v2250 = vld [vmem:[%s2245 + $0x20] sm:$0xff]
        %v2251 = vld [vmem:[%s2245 + $0x28] sm:$0xff]
        %v2252 = vld [vmem:[%s2245 + $0x30] sm:$0xff]
        %v2253 = vld [vmem:[%s2245 + $0x38] sm:$0xff]
        %v2254 = vld [vmem:[%s2245 + $0x40] sm:$0xff]
        %v2255 = vld [vmem:[%s2245 + $0x48] sm:$0xff]
        %v2256 = vld [vmem:[%s2245 + $0x50] sm:$0xff]
        %v2257 = vld [vmem:[%s2245 + $0x58] sm:$0xff]
        %v2258 = vld [vmem:[%s2245 + $0x60] sm:$0xff]
        %v2259 = vld [vmem:[%s2245 + $0x68] sm:$0xff]
        %v2260 = vld [vmem:[%s2245 + $0x70] sm:$0xff]
        %v2261 = vld [vmem:[%s2245 + $0x78] sm:$0xff]
        %2262 = vmatprep.subr.mxu0 0.0
        %2263 = vmatpush1.msra.mxu0 %v2261
        %2264 = vmatprep.subr.mxu0 0.0
        %2265 = vmatpush1.msra.mxu0 %v2260
        %2266 = vmatprep.subr.mxu0 0.0
        %2267 = vmatpush1.msra.mxu0 %v2259
        %2268 = vmatprep.subr.mxu0 0.0
        %2269 = vmatpush1.msra.mxu0 %v2258
        %2270 = vmatprep.subr.mxu0 0.0
        %2271 = vmatpush1.msra.mxu0 %v2257
        %2272 = vmatprep.subr.mxu0 0.0
        %2273 = vmatpush1.msra.mxu0 %v2256
        %2274 = vmatprep.subr.mxu0 0.0
        %2275 = vmatpush1.msra.mxu0 %v2255
        %2276 = vmatprep.subr.mxu0 0.0
        %2277 = vmatpush1.msra.mxu0 %v2254
        %2278 = vmatprep.subr.mxu0 0.0
        %2279 = vmatpush1.msra.mxu0 %v2253
        %2280 = vmatprep.subr.mxu0 0.0
        %2281 = vmatpush1.msra.mxu0 %v2252
        %2282 = vmatprep.subr.mxu0 0.0
        %2283 = vmatpush1.msra.mxu0 %v2251
        %2284 = vmatprep.subr.mxu0 0.0
        %2285 = vmatpush1.msra.mxu0 %v2250
        %2286 = vmatprep.subr.mxu0 0.0
        %2287 = vmatpush1.msra.mxu0 %v2249
        %2288 = vmatprep.subr.mxu0 0.0
        %2289 = vmatpush1.msra.mxu0 %v2248
        %2290 = vmatprep.subr.mxu0 0.0
        %2291 = vmatpush1.msra.mxu0 %v2247
        %2292 = vmatprep.subr.mxu0 0.0
        %2293 = vmatpush1.msra.mxu0 %v2246
        %2294 = vmatprep.subr.mxu0 0.0
        %2295 = vmatpush2.msra.mxu0 0.0
        %2296 = vmatprep.subr.mxu0 0.0
        %2297 = vmatpush2.msra.mxu0 0.0
        %2298 = vmatprep.subr.mxu0 0.0
        %2299 = vmatpush2.msra.mxu0 0.0
        %2300 = vmatprep.subr.mxu0 0.0
        %2301 = vmatpush2.msra.mxu0 0.0
        %2302 = vmatprep.subr.mxu0 0.0
        %2303 = vmatpush2.msra.mxu0 0.0
        %2304 = vmatprep.subr.mxu0 0.0
        %2305 = vmatpush2.msra.mxu0 0.0
        %2306 = vmatprep.subr.mxu0 0.0
        %2307 = vmatpush2.msra.mxu0 0.0
        %2308 = vmatprep.subr.mxu0 0.0
        %2309 = vmatpush2.msra.mxu0 0.0
        %2310 = vmatprep.subr.mxu0 0.0
        %2311 = vmatpush2.msra.mxu0 0.0
        %2312 = vmatprep.subr.mxu0 0.0
        %2313 = vmatpush2.msra.mxu0 0.0
        %2314 = vmatprep.subr.mxu0 0.0
        %2315 = vmatpush2.msra.mxu0 0.0
        %2316 = vmatprep.subr.mxu0 0.0
        %2317 = vmatpush2.msra.mxu0 0.0
        %2318 = vmatprep.subr.mxu0 0.0
        %2319 = vmatpush2.msra.mxu0 0.0
        %2320 = vmatprep.subr.mxu0 0.0
        %2321 = vmatpush2.msra.mxu0 0.0
        %2322 = vmatprep.subr.mxu0 0.0
        %2323 = vmatpush2.msra.mxu0 0.0
        %2324 = vmatprep.subr.mxu0 0.0
        %2325 = vmatpush2.msra.mxu0 0.0
        %2326 = vmatprep.mubr.f32.mxu0 0.0
        %2327 = vmatmul.mubr.f32.gmra.mxu0 %v2222
        %v2328 = vpop.f32.mrf.mxu0
        %v2329 = vadd.f32 0.0, %v2328
        %v2330 = vpop.f32.mrf.mxu0
        %2331 = vmatprep.mubr.f32.mxu0 0.0
        %2332 = vmatmul.mubr.f32.gmra.mxu0 %v2223
        %v2333 = vpop.f32.mrf.mxu0
        %v2334 = vadd.f32 0.0, %v2333
        %v2335 = vpop.f32.mrf.mxu0
        %2336 = vmatprep.mubr.f32.mxu0 0.0
        %2337 = vmatmul.mubr.f32.gmra.mxu0 %v2224
        %v2338 = vpop.f32.mrf.mxu0
        %v2339 = vadd.f32 0.0, %v2338
        %v2340 = vpop.f32.mrf.mxu0
        %2341 = vmatprep.mubr.f32.mxu0 0.0
        %2342 = vmatmul.mubr.f32.gmra.mxu0 %v2225
        %v2343 = vpop.f32.mrf.mxu0
        %v2344 = vadd.f32 0.0, %v2343
        %v2345 = vpop.f32.mrf.mxu0
        %2346 = vmatprep.mubr.f32.mxu0 0.0
        %2347 = vmatmul.mubr.f32.gmra.mxu0 %v2226
        %v2348 = vpop.f32.mrf.mxu0
        %v2349 = vadd.f32 0.0, %v2348
        %v2350 = vpop.f32.mrf.mxu0
        %2351 = vmatprep.mubr.f32.mxu0 0.0
        %2352 = vmatmul.mubr.f32.gmra.mxu0 %v2227
        %v2353 = vpop.f32.mrf.mxu0
        %v2354 = vadd.f32 0.0, %v2353
        %v2355 = vpop.f32.mrf.mxu0
        %2356 = vmatprep.mubr.f32.mxu0 0.0
        %2357 = vmatmul.mubr.f32.gmra.mxu0 %v2228
        %v2358 = vpop.f32.mrf.mxu0
        %v2359 = vadd.f32 0.0, %v2358
        %v2360 = vpop.f32.mrf.mxu0
        %2361 = vmatprep.mubr.f32.mxu0 0.0
        %2362 = vmatmul.mubr.f32.gmra.mxu0 %v2229
        %v2363 = vpop.f32.mrf.mxu0
        %v2364 = vadd.f32 0.0, %v2363
        %v2365 = vpop.f32.mrf.mxu0
        %2366 = vmatprep.mubr.f32.mxu0 0.0
        %2367 = vmatmul.mubr.f32.gmra.mxu0 %v2230
        %v2368 = vpop.f32.mrf.mxu0
        %v2369 = vadd.f32 0.0, %v2368
        %v2370 = vpop.f32.mrf.mxu0
        %2371 = vmatprep.mubr.f32.mxu0 0.0
        %2372 = vmatmul.mubr.f32.gmra.mxu0 %v2231
        %v2373 = vpop.f32.mrf.mxu0
        %v2374 = vadd.f32 0.0, %v2373
        %v2375 = vpop.f32.mrf.mxu0
        %2376 = vmatprep.mubr.f32.mxu0 0.0
        %2377 = vmatmul.mubr.f32.gmra.mxu0 %v2232
        %v2378 = vpop.f32.mrf.mxu0
        %v2379 = vadd.f32 0.0, %v2378
        %v2380 = vpop.f32.mrf.mxu0
        %2381 = vmatprep.mubr.f32.mxu0 0.0
        %2382 = vmatmul.mubr.f32.gmra.mxu0 %v2233
        %v2383 = vpop.f32.mrf.mxu0
        %v2384 = vadd.f32 0.0, %v2383
        %v2385 = vpop.f32.mrf.mxu0
        %2386 = vmatprep.mubr.f32.mxu0 0.0
        %2387 = vmatmul.mubr.f32.gmra.mxu0 %v2234
        %v2388 = vpop.f32.mrf.mxu0
        %v2389 = vadd.f32 0.0, %v2388
        %v2390 = vpop.f32.mrf.mxu0
        %2391 = vmatprep.mubr.f32.mxu0 0.0
        %2392 = vmatmul.mubr.f32.gmra.mxu0 %v2235
        %v2393 = vpop.f32.mrf.mxu0
        %v2394 = vadd.f32 0.0, %v2393
        %v2395 = vpop.f32.mrf.mxu0
        %2396 = vmatprep.mubr.f32.mxu0 0.0
        %2397 = vmatmul.mubr.f32.gmra.mxu0 %v2236
        %v2398 = vpop.f32.mrf.mxu0
        %v2399 = vadd.f32 0.0, %v2398
        %v2400 = vpop.f32.mrf.mxu0
        %2401 = vmatprep.mubr.f32.mxu0 0.0
        %2402 = vmatmul.mubr.f32.gmra.mxu0 %v2237
        %v2403 = vpop.f32.mrf.mxu0
        %v2404 = vadd.f32 0.0, %v2403
        %v2405 = vpop.f32.mrf.mxu0
        %2406 = vmatprep.mubr.f32.mxu0 0.0
        %2407 = vmatmul.mubr.f32.gmra.mxu0 %v2238
        %v2408 = vpop.f32.mrf.mxu0
        %v2409 = vadd.f32 0.0, %v2408
        %v2410 = vpop.f32.mrf.mxu0
        %2411 = vmatprep.mubr.f32.mxu0 0.0
        %2412 = vmatmul.mubr.f32.gmra.mxu0 %v2239
        %v2413 = vpop.f32.mrf.mxu0
        %v2414 = vadd.f32 0.0, %v2413
        %v2415 = vpop.f32.mrf.mxu0
        %2416 = vmatprep.mubr.f32.mxu0 0.0
        %2417 = vmatmul.mubr.f32.gmra.mxu0 %v2240
        %v2418 = vpop.f32.mrf.mxu0
        %v2419 = vadd.f32 0.0, %v2418
        %v2420 = vpop.f32.mrf.mxu0
        %2421 = vmatprep.mubr.f32.mxu0 0.0
        %2422 = vmatmul.mubr.f32.gmra.mxu0 %v2241
        %v2423 = vpop.f32.mrf.mxu0
        %v2424 = vadd.f32 0.0, %v2423
        %v2425 = vpop.f32.mrf.mxu0
        %2426 = vmatprep.mubr.f32.mxu0 0.0
        %2427 = vmatmul.mubr.f32.gmra.mxu0 %v2242
        %v2428 = vpop.f32.mrf.mxu0
        %v2429 = vadd.f32 0.0, %v2428
        %v2430 = vpop.f32.mrf.mxu0
        %2431 = vmatprep.mubr.f32.mxu0 0.0
        %2432 = vmatmul.mubr.f32.gmra.mxu0 %v2243
        %v2433 = vpop.f32.mrf.mxu0
        %v2434 = vadd.f32 0.0, %v2433
        %v2435 = vpop.f32.mrf.mxu0
        %2436 = vmatprep.mubr.f32.mxu0 0.0
        %2437 = vmatmul.mubr.f32.gmra.mxu0 %v2244
        %v2438 = vpop.f32.mrf.mxu0
        %v2439 = vadd.f32 0.0, %v2438
        %v2440 = vpop.f32.mrf.mxu0
        %2441 = vdwg.mxu0
        %v2442 = vadd.f32 %v2199, %v2329
        %v2443 = vadd.f32 %v2200, %v2334
        %v2444 = vadd.f32 %v2201, %v2339
        %v2445 = vadd.f32 %v2202, %v2344
        %v2446 = vadd.f32 %v2203, %v2349
        %v2447 = vadd.f32 %v2204, %v2354
        %v2448 = vadd.f32 %v2205, %v2359
        %v2449 = vadd.f32 %v2206, %v2364
        %v2450 = vadd.f32 %v2207, %v2369
        %v2451 = vadd.f32 %v2208, %v2374
        %v2452 = vadd.f32 %v2209, %v2379
        %v2453 = vadd.f32 %v2210, %v2384
        %v2454 = vadd.f32 %v2211, %v2389
        %v2455 = vadd.f32 %v2212, %v2394
        %v2456 = vadd.f32 %v2213, %v2399
        %v2457 = vadd.f32 %v2214, %v2404
        %v2458 = vadd.f32 %v2215, %v2409
        %v2459 = vadd.f32 %v2216, %v2414
        %v2460 = vadd.f32 %v2217, %v2419
        %v2461 = vadd.f32 %v2218, %v2424
        %v2462 = vadd.f32 %v2219, %v2429
        %v2463 = vadd.f32 %v2220, %v2434
        %v2464 = vadd.f32 %v2221, %v2439
        %v2465 = vld [vmem:[%s3] sm:$0x1]
        %v2467 = vlaneseq
        %v2468 = vshrl.u32 %v2467, 7
        %v2469 = vsub.s32 0, %v2468
        %v2470 = vrot.slane %v2465, %v2469
        %v2472 = vadd.f32 %v2442, %v2470
        %v2473 = vadd.f32 %v2443, %v2470
        %v2474 = vadd.f32 %v2444, %v2470
        %v2475 = vadd.f32 %v2445, %v2470
        %v2476 = vadd.f32 %v2446, %v2470
        %v2477 = vadd.f32 %v2447, %v2470
        %v2478 = vadd.f32 %v2448, %v2470
        %v2479 = vadd.f32 %v2449, %v2470
        %v2480 = vadd.f32 %v2450, %v2470
        %v2481 = vadd.f32 %v2451, %v2470
        %v2482 = vadd.f32 %v2452, %v2470
        %v2483 = vadd.f32 %v2453, %v2470
        %v2484 = vadd.f32 %v2454, %v2470
        %v2485 = vadd.f32 %v2455, %v2470
        %v2486 = vadd.f32 %v2456, %v2470
        %v2487 = vadd.f32 %v2457, %v2470
        %v2488 = vadd.f32 %v2458, %v2470
        %v2489 = vadd.f32 %v2459, %v2470
        %v2490 = vadd.f32 %v2460, %v2470
        %v2491 = vadd.f32 %v2461, %v2470
        %v2492 = vadd.f32 %v2462, %v2470
        %v2493 = vadd.f32 %v2463, %v2470
        %v2494 = vadd.f32 %v2464, %v2470
        %v2495 = vmax.f32 %v2472, 0.0
        %v2496 = vmax.f32 %v2473, 0.0
        %v2497 = vmax.f32 %v2474, 0.0
        %v2498 = vmax.f32 %v2475, 0.0
        %v2499 = vmax.f32 %v2476, 0.0
        %v2500 = vmax.f32 %v2477, 0.0
        %v2501 = vmax.f32 %v2478, 0.0
        %v2502 = vmax.f32 %v2479, 0.0
        %v2503 = vmax.f32 %v2480, 0.0
        %v2504 = vmax.f32 %v2481, 0.0
        %v2505 = vmax.f32 %v2482, 0.0
        %v2506 = vmax.f32 %v2483, 0.0
        %v2507 = vmax.f32 %v2484, 0.0
        %v2508 = vmax.f32 %v2485, 0.0
        %v2509 = vmax.f32 %v2486, 0.0
        %v2510 = vmax.f32 %v2487, 0.0
        %v2511 = vmax.f32 %v2488, 0.0
        %v2512 = vmax.f32 %v2489, 0.0
        %v2513 = vmax.f32 %v2490, 0.0
        %v2514 = vmax.f32 %v2491, 0.0
        %v2515 = vmax.f32 %v2492, 0.0
        %v2516 = vmax.f32 %v2493, 0.0
        %v2517 = vmax.f32 %v2494, 0.0
        %v2518 = vld [vmem:[%s1] sm:$0xff]
        %v2519 = vld [vmem:[%s1 + $0x8] sm:$0xff]
        %v2520 = vld [vmem:[%s1 + $0x10] sm:$0xff]
        %v2521 = vld [vmem:[%s1 + $0x18] sm:$0xff]
        %v2522 = vld [vmem:[%s1 + $0x20] sm:$0xff]
        %v2523 = vld [vmem:[%s1 + $0x28] sm:$0xff]
        %v2524 = vld [vmem:[%s1 + $0x30] sm:$0xff]
        %v2525 = vld [vmem:[%s1 + $0x38] sm:$0xff]
        %v2526 = vld [vmem:[%s1 + $0x40] sm:$0xff]
        %v2527 = vld [vmem:[%s1 + $0x48] sm:$0xff]
        %v2528 = vld [vmem:[%s1 + $0x50] sm:$0xff]
        %v2529 = vld [vmem:[%s1 + $0x58] sm:$0xff]
        %v2530 = vld [vmem:[%s1 + $0x60] sm:$0xff]
        %v2531 = vld [vmem:[%s1 + $0x68] sm:$0xff]
        %v2532 = vld [vmem:[%s1 + $0x70] sm:$0xff]
        %v2533 = vld [vmem:[%s1 + $0x78] sm:$0xff]
        %v2534 = vld [vmem:[%s1 + $0x80] sm:$0xff]
        %v2535 = vld [vmem:[%s1 + $0x88] sm:$0xff]
        %v2536 = vld [vmem:[%s1 + $0x90] sm:$0xff]
        %v2537 = vld [vmem:[%s1 + $0x98] sm:$0xff]
        %v2538 = vld [vmem:[%s1 + $0xa0] sm:$0xff]
        %v2539 = vld [vmem:[%s1 + $0xa8] sm:$0xff]
        %v2540 = vld [vmem:[%s1 + $0xb0] sm:$0xf]
        %vm2541 = vcmp.gt.f32.partialorder %v2518, 0.5
        %vm2542 = vcmp.gt.f32.partialorder %v2519, 0.5
        %vm2543 = vcmp.gt.f32.partialorder %v2520, 0.5
        %vm2544 = vcmp.gt.f32.partialorder %v2521, 0.5
        %vm2545 = vcmp.gt.f32.partialorder %v2522, 0.5
        %vm2546 = vcmp.gt.f32.partialorder %v2523, 0.5
        %vm2547 = vcmp.gt.f32.partialorder %v2524, 0.5
        %vm2548 = vcmp.gt.f32.partialorder %v2525, 0.5
        %vm2549 = vcmp.gt.f32.partialorder %v2526, 0.5
        %vm2550 = vcmp.gt.f32.partialorder %v2527, 0.5
        %vm2551 = vcmp.gt.f32.partialorder %v2528, 0.5
        %vm2552 = vcmp.gt.f32.partialorder %v2529, 0.5
        %vm2553 = vcmp.gt.f32.partialorder %v2530, 0.5
        %vm2554 = vcmp.gt.f32.partialorder %v2531, 0.5
        %vm2555 = vcmp.gt.f32.partialorder %v2532, 0.5
        %vm2556 = vcmp.gt.f32.partialorder %v2533, 0.5
        %vm2557 = vcmp.gt.f32.partialorder %v2534, 0.5
        %vm2558 = vcmp.gt.f32.partialorder %v2535, 0.5
        %vm2559 = vcmp.gt.f32.partialorder %v2536, 0.5
        %vm2560 = vcmp.gt.f32.partialorder %v2537, 0.5
        %vm2561 = vcmp.gt.f32.partialorder %v2538, 0.5
        %vm2562 = vcmp.gt.f32.partialorder %v2539, 0.5
        %vm2563 = vcmp.gt.f32.partialorder %v2540, 0.5
        %v2564 = vsel %vm2541, 1, 0
        %v2565 = vsel %vm2542, 1, 0
        %v2566 = vsel %vm2543, 1, 0
        %v2567 = vsel %vm2544, 1, 0
        %v2568 = vsel %vm2545, 1, 0
        %v2569 = vsel %vm2546, 1, 0
        %v2570 = vsel %vm2547, 1, 0
        %v2571 = vsel %vm2548, 1, 0
        %v2572 = vsel %vm2549, 1, 0
        %v2573 = vsel %vm2550, 1, 0
        %v2574 = vsel %vm2551, 1, 0
        %v2575 = vsel %vm2552, 1, 0
        %v2576 = vsel %vm2553, 1, 0
        %v2577 = vsel %vm2554, 1, 0
        %v2578 = vsel %vm2555, 1, 0
        %v2579 = vsel %vm2556, 1, 0
        %v2580 = vsel %vm2557, 1, 0
        %v2581 = vsel %vm2558, 1, 0
        %v2582 = vsel %vm2559, 1, 0
        %v2583 = vsel %vm2560, 1, 0
        %v2584 = vsel %vm2561, 1, 0
        %v2585 = vsel %vm2562, 1, 0
        %v2586 = vsel %vm2563, 1, 0
        %2587 = vset.pattern.permute.xlu0 0
        %2588 = vperm.xlu0 %2587, %v2564
        %v2589 = vpop.permute.xlu0 %2588
        %2590 = vset.pattern.permute.xlu0 0
        %2591 = vperm.xlu0 %2590, %v2565
        %v2592 = vpop.permute.xlu0 %2591
        %2593 = vset.pattern.permute.xlu0 0
        %2594 = vperm.xlu0 %2593, %v2566
        %v2595 = vpop.permute.xlu0 %2594
        %2596 = vset.pattern.permute.xlu0 0
        %2597 = vperm.xlu0 %2596, %v2567
        %v2598 = vpop.permute.xlu0 %2597
        %2599 = vset.pattern.permute.xlu0 0
        %2600 = vperm.xlu0 %2599, %v2568
        %v2601 = vpop.permute.xlu0 %2600
        %2602 = vset.pattern.permute.xlu0 0
        %2603 = vperm.xlu0 %2602, %v2569
        %v2604 = vpop.permute.xlu0 %2603
        %2605 = vset.pattern.permute.xlu0 0
        %2606 = vperm.xlu0 %2605, %v2570
        %v2607 = vpop.permute.xlu0 %2606
        %2608 = vset.pattern.permute.xlu0 0
        %2609 = vperm.xlu0 %2608, %v2571
        %v2610 = vpop.permute.xlu0 %2609
        %2611 = vset.pattern.permute.xlu0 0
        %2612 = vperm.xlu0 %2611, %v2572
        %v2613 = vpop.permute.xlu0 %2612
        %2614 = vset.pattern.permute.xlu0 0
        %2615 = vperm.xlu0 %2614, %v2573
        %v2616 = vpop.permute.xlu0 %2615
        %2617 = vset.pattern.permute.xlu0 0
        %2618 = vperm.xlu0 %2617, %v2574
        %v2619 = vpop.permute.xlu0 %2618
        %2620 = vset.pattern.permute.xlu0 0
        %2621 = vperm.xlu0 %2620, %v2575
        %v2622 = vpop.permute.xlu0 %2621
        %2623 = vset.pattern.permute.xlu0 0
        %2624 = vperm.xlu0 %2623, %v2576
        %v2625 = vpop.permute.xlu0 %2624
        %2626 = vset.pattern.permute.xlu0 0
        %2627 = vperm.xlu0 %2626, %v2577
        %v2628 = vpop.permute.xlu0 %2627
        %2629 = vset.pattern.permute.xlu0 0
        %2630 = vperm.xlu0 %2629, %v2578
        %v2631 = vpop.permute.xlu0 %2630
        %2632 = vset.pattern.permute.xlu0 0
        %2633 = vperm.xlu0 %2632, %v2579
        %v2634 = vpop.permute.xlu0 %2633
        %2635 = vset.pattern.permute.xlu0 0
        %2636 = vperm.xlu0 %2635, %v2580
        %v2637 = vpop.permute.xlu0 %2636
        %2638 = vset.pattern.permute.xlu0 0
        %2639 = vperm.xlu0 %2638, %v2581
        %v2640 = vpop.permute.xlu0 %2639
        %2641 = vset.pattern.permute.xlu0 0
        %2642 = vperm.xlu0 %2641, %v2582
        %v2643 = vpop.permute.xlu0 %2642
        %2644 = vset.pattern.permute.xlu0 0
        %2645 = vperm.xlu0 %2644, %v2583
        %v2646 = vpop.permute.xlu0 %2645
        %2647 = vset.pattern.permute.xlu0 0
        %2648 = vperm.xlu0 %2647, %v2584
        %v2649 = vpop.permute.xlu0 %2648
        %2650 = vset.pattern.permute.xlu0 0
        %2651 = vperm.xlu0 %2650, %v2585
        %v2652 = vpop.permute.xlu0 %2651
        %2653 = vset.pattern.permute.xlu0 0
        %2654 = vperm.xlu0 %2653, %v2586
        %v2655 = vpop.permute.xlu0 %2654
        %vm2656 = vcmp.eq.s32.totalorder %v2589, 1
        %vm2657 = vcmp.eq.s32.totalorder %v2592, 1
        %vm2658 = vcmp.eq.s32.totalorder %v2595, 1
        %vm2659 = vcmp.eq.s32.totalorder %v2598, 1
        %vm2660 = vcmp.eq.s32.totalorder %v2601, 1
        %vm2661 = vcmp.eq.s32.totalorder %v2604, 1
        %vm2662 = vcmp.eq.s32.totalorder %v2607, 1
        %vm2663 = vcmp.eq.s32.totalorder %v2610, 1
        %vm2664 = vcmp.eq.s32.totalorder %v2613, 1
        %vm2665 = vcmp.eq.s32.totalorder %v2616, 1
        %vm2666 = vcmp.eq.s32.totalorder %v2619, 1
        %vm2667 = vcmp.eq.s32.totalorder %v2622, 1
        %vm2668 = vcmp.eq.s32.totalorder %v2625, 1
        %vm2669 = vcmp.eq.s32.totalorder %v2628, 1
        %vm2670 = vcmp.eq.s32.totalorder %v2631, 1
        %vm2671 = vcmp.eq.s32.totalorder %v2634, 1
        %vm2672 = vcmp.eq.s32.totalorder %v2637, 1
        %vm2673 = vcmp.eq.s32.totalorder %v2640, 1
        %vm2674 = vcmp.eq.s32.totalorder %v2643, 1
        %vm2675 = vcmp.eq.s32.totalorder %v2646, 1
        %vm2676 = vcmp.eq.s32.totalorder %v2649, 1
        %vm2677 = vcmp.eq.s32.totalorder %v2652, 1
        %vm2678 = vcmp.eq.s32.totalorder %v2655, 1
        %v2679 = vsel %vm2656, %v2495, 0.0
        %v2680 = vsel %vm2657, %v2496, 0.0
        %v2681 = vsel %vm2658, %v2497, 0.0
        %v2682 = vsel %vm2659, %v2498, 0.0
        %v2683 = vsel %vm2660, %v2499, 0.0
        %v2684 = vsel %vm2661, %v2500, 0.0
        %v2685 = vsel %vm2662, %v2501, 0.0
        %v2686 = vsel %vm2663, %v2502, 0.0
        %v2687 = vsel %vm2664, %v2503, 0.0
        %v2688 = vsel %vm2665, %v2504, 0.0
        %v2689 = vsel %vm2666, %v2505, 0.0
        %v2690 = vsel %vm2667, %v2506, 0.0
        %v2691 = vsel %vm2668, %v2507, 0.0
        %v2692 = vsel %vm2669, %v2508, 0.0
        %v2693 = vsel %vm2670, %v2509, 0.0
        %v2694 = vsel %vm2671, %v2510, 0.0
        %v2695 = vsel %vm2672, %v2511, 0.0
        %v2696 = vsel %vm2673, %v2512, 0.0
        %v2697 = vsel %vm2674, %v2513, 0.0
        %v2698 = vsel %vm2675, %v2514, 0.0
        %v2699 = vsel %vm2676, %v2515, 0.0
        %v2700 = vsel %vm2677, %v2516, 0.0
        %v2701 = vsel %vm2678, %v2517, 0.0
        %2702 = vst [vmem:[#allocation2 + $0x8] sm:$0xff] %v2679
        %2703 = vst [vmem:[#allocation2 + $0x10] sm:$0xff] %v2680
        %2704 = vst [vmem:[#allocation2 + $0x18] sm:$0xff] %v2681
        %2705 = vst [vmem:[#allocation2 + $0x20] sm:$0xff] %v2682
        %2706 = vst [vmem:[#allocation2 + $0x28] sm:$0xff] %v2683
        %2707 = vst [vmem:[#allocation2 + $0x30] sm:$0xff] %v2684
        %2708 = vst [vmem:[#allocation2 + $0x38] sm:$0xff] %v2685
        %2709 = vst [vmem:[#allocation2 + $0x40] sm:$0xff] %v2686
        %2710 = vst [vmem:[#allocation2 + $0x48] sm:$0xff] %v2687
        %2711 = vst [vmem:[#allocation2 + $0x50] sm:$0xff] %v2688
        %2712 = vst [vmem:[#allocation2 + $0x58] sm:$0xff] %v2689
        %2713 = vst [vmem:[#allocation2 + $0x60] sm:$0xff] %v2690
        %2714 = vst [vmem:[#allocation2 + $0x68] sm:$0xff] %v2691
        %2715 = vst [vmem:[#allocation2 + $0x70] sm:$0xff] %v2692
        %2716 = vst [vmem:[#allocation2 + $0x78] sm:$0xff] %v2693
        %2717 = vst [vmem:[#allocation2 + $0x80] sm:$0xff] %v2694
        %2718 = vst [vmem:[#allocation2 + $0x88] sm:$0xff] %v2695
        %2719 = vst [vmem:[#allocation2 + $0x90] sm:$0xff] %v2696
        %2720 = vst [vmem:[#allocation2 + $0x98] sm:$0xff] %v2697
        %2721 = vst [vmem:[#allocation2 + $0xa0] sm:$0xff] %v2698
        %2722 = vst [vmem:[#allocation2 + $0xa8] sm:$0xff] %v2699
        %2723 = vst [vmem:[#allocation2 + $0xb0] sm:$0xff] %v2700
        %2724 = vst [vmem:[#allocation2 + $0xb8] sm:$0xf] %v2701
        %p2725 = scmp.eq.s32.totalorder %s29, 0
        // Predicated region
        $region57: #{tpu_custom_call.1} parent=43 // pred_check
          %p2726 = pneg %p2725
        $region58: #{tpu_custom_call.1} parent=43 // pred_check_branch
          %2728 = sbr.rel (%p2726) target = $region60
        $region59: #{tpu_custom_call.1} parent=43 // pred_region
          %2729 = vst [vmem:[#allocation2 + $0x8] sm:$0xff] 0.0
          %2730 = vst [vmem:[#allocation2 + $0x10] sm:$0xff] 0.0
          %2731 = vst [vmem:[#allocation2 + $0x18] sm:$0x3] 0.0
        $region60: #{tpu_custom_call.1} parent=43 // pred_fallthru
          _
        %p2732 = scmp.eq.s32.totalorder %s29, 1
        // Predicated region
        $region61: #{tpu_custom_call.1} parent=43 // pred_check
          %p2733 = pneg %p2732
        $region62: #{tpu_custom_call.1} parent=43 // pred_check_branch
          %2735 = sbr.rel (%p2733) target = $region64
        $region63: #{tpu_custom_call.1} parent=43 // pred_region
          %2736 = vst [vmem:[#allocation2 + $0xaa] sm:$0xff] 0.0
          %2737 = vst [vmem:[#allocation2 + $0xb2] sm:$0xff] 0.0
          %2738 = vst [vmem:[#allocation2 + $0xba] sm:$0x3] 0.0
        $region64: #{tpu_custom_call.1} parent=43 // pred_fallthru
          _
        %v2739 = vld [vmem:[#allocation2 + $0x7] sm:$0xff]
        %v2740 = vld [vmem:[#allocation2 + $0xf] sm:$0xff]
        %v2741 = vld [vmem:[#allocation2 + $0x17] sm:$0xff]
        %v2742 = vld [vmem:[#allocation2 + $0x1f] sm:$0xff]
        %v2743 = vld [vmem:[#allocation2 + $0x27] sm:$0xff]
        %v2744 = vld [vmem:[#allocation2 + $0x2f] sm:$0xff]
        %v2745 = vld [vmem:[#allocation2 + $0x37] sm:$0xff]
        %v2746 = vld [vmem:[#allocation2 + $0x3f] sm:$0xff]
        %v2747 = vld [vmem:[#allocation2 + $0x47] sm:$0xff]
        %v2748 = vld [vmem:[#allocation2 + $0x4f] sm:$0xff]
        %v2749 = vld [vmem:[#allocation2 + $0x57] sm:$0xff]
        %v2750 = vld [vmem:[#allocation2 + $0x5f] sm:$0xff]
        %v2751 = vld [vmem:[#allocation2 + $0x67] sm:$0xff]
        %v2752 = vld [vmem:[#allocation2 + $0x6f] sm:$0xff]
        %v2753 = vld [vmem:[#allocation2 + $0x77] sm:$0xff]
        %v2754 = vld [vmem:[#allocation2 + $0x7f] sm:$0xff]
        %v2755 = vld [vmem:[#allocation2 + $0x87] sm:$0xff]
        %v2756 = vld [vmem:[#allocation2 + $0x8f] sm:$0xff]
        %v2757 = vld [vmem:[#allocation8] sm:$0xff]
        %v2758 = vld [vmem:[#allocation8 + $0x8] sm:$0xff]
        %v2759 = vld [vmem:[#allocation8 + $0x10] sm:$0xff]
        %v2760 = vld [vmem:[#allocation8 + $0x18] sm:$0xff]
        %v2761 = vld [vmem:[#allocation8 + $0x20] sm:$0xff]
        %v2762 = vld [vmem:[#allocation8 + $0x28] sm:$0xff]
        %v2763 = vld [vmem:[#allocation8 + $0x30] sm:$0xff]
        %v2764 = vld [vmem:[#allocation8 + $0x38] sm:$0xff]
        %v2765 = vld [vmem:[#allocation8 + $0x40] sm:$0xff]
        %v2766 = vld [vmem:[#allocation8 + $0x48] sm:$0xff]
        %v2767 = vld [vmem:[#allocation8 + $0x50] sm:$0xff]
        %v2768 = vld [vmem:[#allocation8 + $0x58] sm:$0xff]
        %v2769 = vld [vmem:[#allocation8 + $0x60] sm:$0xff]
        %v2770 = vld [vmem:[#allocation8 + $0x68] sm:$0xff]
        %v2771 = vld [vmem:[#allocation8 + $0x70] sm:$0xff]
        %v2772 = vld [vmem:[#allocation8 + $0x78] sm:$0xff]
        %v2773 = vld [vmem:[#allocation2 + $0x8] sm:$0xff]
        %v2774 = vld [vmem:[#allocation2 + $0x10] sm:$0xff]
        %v2775 = vld [vmem:[#allocation2 + $0x18] sm:$0xff]
        %v2776 = vld [vmem:[#allocation2 + $0x20] sm:$0xff]
        %v2777 = vld [vmem:[#allocation2 + $0x28] sm:$0xff]
        %v2778 = vld [vmem:[#allocation2 + $0x30] sm:$0xff]
        %v2779 = vld [vmem:[#allocation2 + $0x38] sm:$0xff]
        %v2780 = vld [vmem:[#allocation2 + $0x40] sm:$0xff]
        %v2781 = vld [vmem:[#allocation2 + $0x48] sm:$0xff]
        %v2782 = vld [vmem:[#allocation2 + $0x50] sm:$0xff]
        %v2783 = vld [vmem:[#allocation2 + $0x58] sm:$0xff]
        %v2784 = vld [vmem:[#allocation2 + $0x60] sm:$0xff]
        %v2785 = vld [vmem:[#allocation2 + $0x68] sm:$0xff]
        %v2786 = vld [vmem:[#allocation2 + $0x70] sm:$0xff]
        %v2787 = vld [vmem:[#allocation2 + $0x78] sm:$0xff]
        %v2788 = vld [vmem:[#allocation2 + $0x80] sm:$0xff]
        %v2789 = vld [vmem:[#allocation2 + $0x88] sm:$0xff]
        %v2790 = vld [vmem:[#allocation2 + $0x90] sm:$0xff]
        %s2791 = scalar_lea.vmem [#allocation8], 128
        %v2792 = vld [vmem:[%s2791] sm:$0xff]
        %v2793 = vld [vmem:[%s2791 + $0x8] sm:$0xff]
        %v2794 = vld [vmem:[%s2791 + $0x10] sm:$0xff]
        %v2795 = vld [vmem:[%s2791 + $0x18] sm:$0xff]
        %v2796 = vld [vmem:[%s2791 + $0x20] sm:$0xff]
        %v2797 = vld [vmem:[%s2791 + $0x28] sm:$0xff]
        %v2798 = vld [vmem:[%s2791 + $0x30] sm:$0xff]
        %v2799 = vld [vmem:[%s2791 + $0x38] sm:$0xff]
        %v2800 = vld [vmem:[%s2791 + $0x40] sm:$0xff]
        %v2801 = vld [vmem:[%s2791 + $0x48] sm:$0xff]
        %v2802 = vld [vmem:[%s2791 + $0x50] sm:$0xff]
        %v2803 = vld [vmem:[%s2791 + $0x58] sm:$0xff]
        %v2804 = vld [vmem:[%s2791 + $0x60] sm:$0xff]
        %v2805 = vld [vmem:[%s2791 + $0x68] sm:$0xff]
        %v2806 = vld [vmem:[%s2791 + $0x70] sm:$0xff]
        %v2807 = vld [vmem:[%s2791 + $0x78] sm:$0xff]
        %2808 = vmatprep.subr.mxu0 0.0
        %2809 = vmatpush1.msra.mxu0 %v2807
        %2810 = vmatprep.subr.mxu0 0.0
        %2811 = vmatpush1.msra.mxu0 %v2806
        %2812 = vmatprep.subr.mxu0 0.0
        %2813 = vmatpush1.msra.mxu0 %v2805
        %2814 = vmatprep.subr.mxu0 0.0
        %2815 = vmatpush1.msra.mxu0 %v2804
        %2816 = vmatprep.subr.mxu0 0.0
        %2817 = vmatpush1.msra.mxu0 %v2803
        %2818 = vmatprep.subr.mxu0 0.0
        %2819 = vmatpush1.msra.mxu0 %v2802
        %2820 = vmatprep.subr.mxu0 0.0
        %2821 = vmatpush1.msra.mxu0 %v2801
        %2822 = vmatprep.subr.mxu0 0.0
        %2823 = vmatpush1.msra.mxu0 %v2800
        %2824 = vmatprep.subr.mxu0 0.0
        %2825 = vmatpush1.msra.mxu0 %v2799
        %2826 = vmatprep.subr.mxu0 0.0
        %2827 = vmatpush1.msra.mxu0 %v2798
        %2828 = vmatprep.subr.mxu0 0.0
        %2829 = vmatpush1.msra.mxu0 %v2797
        %2830 = vmatprep.subr.mxu0 0.0
        %2831 = vmatpush1.msra.mxu0 %v2796
        %2832 = vmatprep.subr.mxu0 0.0
        %2833 = vmatpush1.msra.mxu0 %v2795
        %2834 = vmatprep.subr.mxu0 0.0
        %2835 = vmatpush1.msra.mxu0 %v2794
        %2836 = vmatprep.subr.mxu0 0.0
        %2837 = vmatpush1.msra.mxu0 %v2793
        %2838 = vmatprep.subr.mxu0 0.0
        %2839 = vmatpush1.msra.mxu0 %v2792
        %2840 = vmatprep.subr.mxu0 0.0
        %2841 = vmatpush2.msra.mxu0 0.0
        %2842 = vmatprep.subr.mxu0 0.0
        %2843 = vmatpush2.msra.mxu0 0.0
        %2844 = vmatprep.subr.mxu0 0.0
        %2845 = vmatpush2.msra.mxu0 0.0
        %2846 = vmatprep.subr.mxu0 0.0
        %2847 = vmatpush2.msra.mxu0 0.0
        %2848 = vmatprep.subr.mxu0 0.0
        %2849 = vmatpush2.msra.mxu0 0.0
        %2850 = vmatprep.subr.mxu0 0.0
        %2851 = vmatpush2.msra.mxu0 0.0
        %2852 = vmatprep.subr.mxu0 0.0
        %2853 = vmatpush2.msra.mxu0 0.0
        %2854 = vmatprep.subr.mxu0 0.0
        %2855 = vmatpush2.msra.mxu0 0.0
        %2856 = vmatprep.subr.mxu0 0.0
        %2857 = vmatpush2.msra.mxu0 0.0
        %2858 = vmatprep.subr.mxu0 0.0
        %2859 = vmatpush2.msra.mxu0 0.0
        %2860 = vmatprep.subr.mxu0 0.0
        %2861 = vmatpush2.msra.mxu0 0.0
        %2862 = vmatprep.subr.mxu0 0.0
        %2863 = vmatpush2.msra.mxu0 0.0
        %2864 = vmatprep.subr.mxu0 0.0
        %2865 = vmatpush2.msra.mxu0 0.0
        %2866 = vmatprep.subr.mxu0 0.0
        %2867 = vmatpush2.msra.mxu0 0.0
        %2868 = vmatprep.subr.mxu0 0.0
        %2869 = vmatpush2.msra.mxu0 0.0
        %2870 = vmatprep.subr.mxu0 0.0
        %2871 = vmatpush2.msra.mxu0 0.0
        %2872 = vmatprep.mubr.f32.mxu0 0.0
        %2873 = vmatmul.mubr.f32.gmra.mxu0 %v2773
        %v2874 = vpop.f32.mrf.mxu0
        %v2875 = vadd.f32 0.0, %v2874
        %v2876 = vpop.f32.mrf.mxu0
        %2877 = vmatprep.mubr.f32.mxu0 0.0
        %2878 = vmatmul.mubr.f32.gmra.mxu0 %v2774
        %v2879 = vpop.f32.mrf.mxu0
        %v2880 = vadd.f32 0.0, %v2879
        %v2881 = vpop.f32.mrf.mxu0
        %2882 = vmatprep.mubr.f32.mxu0 0.0
        %2883 = vmatmul.mubr.f32.gmra.mxu0 %v2775
        %v2884 = vpop.f32.mrf.mxu0
        %v2885 = vadd.f32 0.0, %v2884
        %v2886 = vpop.f32.mrf.mxu0
        %2887 = vmatprep.mubr.f32.mxu0 0.0
        %2888 = vmatmul.mubr.f32.gmra.mxu0 %v2776
        %v2889 = vpop.f32.mrf.mxu0
        %v2890 = vadd.f32 0.0, %v2889
        %v2891 = vpop.f32.mrf.mxu0
        %2892 = vmatprep.mubr.f32.mxu0 0.0
        %2893 = vmatmul.mubr.f32.gmra.mxu0 %v2777
        %v2894 = vpop.f32.mrf.mxu0
        %v2895 = vadd.f32 0.0, %v2894
        %v2896 = vpop.f32.mrf.mxu0
        %2897 = vmatprep.mubr.f32.mxu0 0.0
        %2898 = vmatmul.mubr.f32.gmra.mxu0 %v2778
        %v2899 = vpop.f32.mrf.mxu0
        %v2900 = vadd.f32 0.0, %v2899
        %v2901 = vpop.f32.mrf.mxu0
        %2902 = vmatprep.mubr.f32.mxu0 0.0
        %2903 = vmatmul.mubr.f32.gmra.mxu0 %v2779
        %v2904 = vpop.f32.mrf.mxu0
        %v2905 = vadd.f32 0.0, %v2904
        %v2906 = vpop.f32.mrf.mxu0
        %2907 = vmatprep.mubr.f32.mxu0 0.0
        %2908 = vmatmul.mubr.f32.gmra.mxu0 %v2780
        %v2909 = vpop.f32.mrf.mxu0
        %v2910 = vadd.f32 0.0, %v2909
        %v2911 = vpop.f32.mrf.mxu0
        %2912 = vmatprep.mubr.f32.mxu0 0.0
        %2913 = vmatmul.mubr.f32.gmra.mxu0 %v2781
        %v2914 = vpop.f32.mrf.mxu0
        %v2915 = vadd.f32 0.0, %v2914
        %v2916 = vpop.f32.mrf.mxu0
        %2917 = vmatprep.mubr.f32.mxu0 0.0
        %2918 = vmatmul.mubr.f32.gmra.mxu0 %v2782
        %v2919 = vpop.f32.mrf.mxu0
        %v2920 = vadd.f32 0.0, %v2919
        %v2921 = vpop.f32.mrf.mxu0
        %2922 = vmatprep.mubr.f32.mxu0 0.0
        %2923 = vmatmul.mubr.f32.gmra.mxu0 %v2783
        %v2924 = vpop.f32.mrf.mxu0
        %v2925 = vadd.f32 0.0, %v2924
        %v2926 = vpop.f32.mrf.mxu0
        %2927 = vmatprep.mubr.f32.mxu0 0.0
        %2928 = vmatmul.mubr.f32.gmra.mxu0 %v2784
        %v2929 = vpop.f32.mrf.mxu0
        %v2930 = vadd.f32 0.0, %v2929
        %v2931 = vpop.f32.mrf.mxu0
        %2932 = vmatprep.mubr.f32.mxu0 0.0
        %2933 = vmatmul.mubr.f32.gmra.mxu0 %v2785
        %v2934 = vpop.f32.mrf.mxu0
        %v2935 = vadd.f32 0.0, %v2934
        %v2936 = vpop.f32.mrf.mxu0
        %2937 = vmatprep.mubr.f32.mxu0 0.0
        %2938 = vmatmul.mubr.f32.gmra.mxu0 %v2786
        %v2939 = vpop.f32.mrf.mxu0
        %v2940 = vadd.f32 0.0, %v2939
        %v2941 = vpop.f32.mrf.mxu0
        %2942 = vmatprep.mubr.f32.mxu0 0.0
        %2943 = vmatmul.mubr.f32.gmra.mxu0 %v2787
        %v2944 = vpop.f32.mrf.mxu0
        %v2945 = vadd.f32 0.0, %v2944
        %v2946 = vpop.f32.mrf.mxu0
        %2947 = vmatprep.mubr.f32.mxu0 0.0
        %2948 = vmatmul.mubr.f32.gmra.mxu0 %v2788
        %v2949 = vpop.f32.mrf.mxu0
        %v2950 = vadd.f32 0.0, %v2949
        %v2951 = vpop.f32.mrf.mxu0
        %2952 = vmatprep.mubr.f32.mxu0 0.0
        %2953 = vmatmul.mubr.f32.gmra.mxu0 %v2789
        %v2954 = vpop.f32.mrf.mxu0
        %v2955 = vadd.f32 0.0, %v2954
        %v2956 = vpop.f32.mrf.mxu0
        %2957 = vmatprep.mubr.f32.mxu0 0.0
        %2958 = vmatmul.mubr.f32.gmra.mxu0 %v2790
        %v2959 = vpop.f32.mrf.mxu0
        %v2960 = vadd.f32 0.0, %v2959
        %v2961 = vpop.f32.mrf.mxu0
        %2962 = vdwg.mxu0
        %2963 = vmatprep.subr.mxu0 0.0
        %2964 = vmatpush1.msra.mxu0 %v2772
        %2965 = vmatprep.subr.mxu0 0.0
        %2966 = vmatpush1.msra.mxu0 %v2771
        %2967 = vmatprep.subr.mxu0 0.0
        %2968 = vmatpush1.msra.mxu0 %v2770
        %2969 = vmatprep.subr.mxu0 0.0
        %2970 = vmatpush1.msra.mxu0 %v2769
        %2971 = vmatprep.subr.mxu0 0.0
        %2972 = vmatpush1.msra.mxu0 %v2768
        %2973 = vmatprep.subr.mxu0 0.0
        %2974 = vmatpush1.msra.mxu0 %v2767
        %2975 = vmatprep.subr.mxu0 0.0
        %2976 = vmatpush1.msra.mxu0 %v2766
        %2977 = vmatprep.subr.mxu0 0.0
        %2978 = vmatpush1.msra.mxu0 %v2765
        %2979 = vmatprep.subr.mxu0 0.0
        %2980 = vmatpush1.msra.mxu0 %v2764
        %2981 = vmatprep.subr.mxu0 0.0
        %2982 = vmatpush1.msra.mxu0 %v2763
        %2983 = vmatprep.subr.mxu0 0.0
        %2984 = vmatpush1.msra.mxu0 %v2762
        %2985 = vmatprep.subr.mxu0 0.0
        %2986 = vmatpush1.msra.mxu0 %v2761
        %2987 = vmatprep.subr.mxu0 0.0
        %2988 = vmatpush1.msra.mxu0 %v2760
        %2989 = vmatprep.subr.mxu0 0.0
        %2990 = vmatpush1.msra.mxu0 %v2759
        %2991 = vmatprep.subr.mxu0 0.0
        %2992 = vmatpush1.msra.mxu0 %v2758
        %2993 = vmatprep.subr.mxu0 0.0
        %2994 = vmatpush1.msra.mxu0 %v2757
        %2995 = vmatprep.subr.mxu0 0.0
        %2996 = vmatpush2.msra.mxu0 0.0
        %2997 = vmatprep.subr.mxu0 0.0
        %2998 = vmatpush2.msra.mxu0 0.0
        %2999 = vmatprep.subr.mxu0 0.0
        %3000 = vmatpush2.msra.mxu0 0.0
        %3001 = vmatprep.subr.mxu0 0.0
        %3002 = vmatpush2.msra.mxu0 0.0
        %3003 = vmatprep.subr.mxu0 0.0
        %3004 = vmatpush2.msra.mxu0 0.0
        %3005 = vmatprep.subr.mxu0 0.0
        %3006 = vmatpush2.msra.mxu0 0.0
        %3007 = vmatprep.subr.mxu0 0.0
        %3008 = vmatpush2.msra.mxu0 0.0
        %3009 = vmatprep.subr.mxu0 0.0
        %3010 = vmatpush2.msra.mxu0 0.0
        %3011 = vmatprep.subr.mxu0 0.0
        %3012 = vmatpush2.msra.mxu0 0.0
        %3013 = vmatprep.subr.mxu0 0.0
        %3014 = vmatpush2.msra.mxu0 0.0
        %3015 = vmatprep.subr.mxu0 0.0
        %3016 = vmatpush2.msra.mxu0 0.0
        %3017 = vmatprep.subr.mxu0 0.0
        %3018 = vmatpush2.msra.mxu0 0.0
        %3019 = vmatprep.subr.mxu0 0.0
        %3020 = vmatpush2.msra.mxu0 0.0
        %3021 = vmatprep.subr.mxu0 0.0
        %3022 = vmatpush2.msra.mxu0 0.0
        %3023 = vmatprep.subr.mxu0 0.0
        %3024 = vmatpush2.msra.mxu0 0.0
        %3025 = vmatprep.subr.mxu0 0.0
        %3026 = vmatpush2.msra.mxu0 0.0
        %3027 = vmatprep.mubr.f32.mxu0 0.0
        %3028 = vmatmul.mubr.f32.gmra.mxu0 %v2739
        %v3029 = vpop.f32.mrf.mxu0
        %v3030 = vadd.f32 %v2875, %v3029
        %v3031 = vpop.f32.mrf.mxu0
        %3032 = vmatprep.mubr.f32.mxu0 0.0
        %3033 = vmatmul.mubr.f32.gmra.mxu0 %v2740
        %v3034 = vpop.f32.mrf.mxu0
        %v3035 = vadd.f32 %v2880, %v3034
        %v3036 = vpop.f32.mrf.mxu0
        %3037 = vmatprep.mubr.f32.mxu0 0.0
        %3038 = vmatmul.mubr.f32.gmra.mxu0 %v2741
        %v3039 = vpop.f32.mrf.mxu0
        %v3040 = vadd.f32 %v2885, %v3039
        %v3041 = vpop.f32.mrf.mxu0
        %3042 = vmatprep.mubr.f32.mxu0 0.0
        %3043 = vmatmul.mubr.f32.gmra.mxu0 %v2742
        %v3044 = vpop.f32.mrf.mxu0
        %v3045 = vadd.f32 %v2890, %v3044
        %v3046 = vpop.f32.mrf.mxu0
        %3047 = vmatprep.mubr.f32.mxu0 0.0
        %3048 = vmatmul.mubr.f32.gmra.mxu0 %v2743
        %v3049 = vpop.f32.mrf.mxu0
        %v3050 = vadd.f32 %v2895, %v3049
        %v3051 = vpop.f32.mrf.mxu0
        %3052 = vmatprep.mubr.f32.mxu0 0.0
        %3053 = vmatmul.mubr.f32.gmra.mxu0 %v2744
        %v3054 = vpop.f32.mrf.mxu0
        %v3055 = vadd.f32 %v2900, %v3054
        %v3056 = vpop.f32.mrf.mxu0
        %3057 = vmatprep.mubr.f32.mxu0 0.0
        %3058 = vmatmul.mubr.f32.gmra.mxu0 %v2745
        %v3059 = vpop.f32.mrf.mxu0
        %v3060 = vadd.f32 %v2905, %v3059
        %v3061 = vpop.f32.mrf.mxu0
        %3062 = vmatprep.mubr.f32.mxu0 0.0
        %3063 = vmatmul.mubr.f32.gmra.mxu0 %v2746
        %v3064 = vpop.f32.mrf.mxu0
        %v3065 = vadd.f32 %v2910, %v3064
        %v3066 = vpop.f32.mrf.mxu0
        %3067 = vmatprep.mubr.f32.mxu0 0.0
        %3068 = vmatmul.mubr.f32.gmra.mxu0 %v2747
        %v3069 = vpop.f32.mrf.mxu0
        %v3070 = vadd.f32 %v2915, %v3069
        %v3071 = vpop.f32.mrf.mxu0
        %3072 = vmatprep.mubr.f32.mxu0 0.0
        %3073 = vmatmul.mubr.f32.gmra.mxu0 %v2748
        %v3074 = vpop.f32.mrf.mxu0
        %v3075 = vadd.f32 %v2920, %v3074
        %v3076 = vpop.f32.mrf.mxu0
        %3077 = vmatprep.mubr.f32.mxu0 0.0
        %3078 = vmatmul.mubr.f32.gmra.mxu0 %v2749
        %v3079 = vpop.f32.mrf.mxu0
        %v3080 = vadd.f32 %v2925, %v3079
        %v3081 = vpop.f32.mrf.mxu0
        %3082 = vmatprep.mubr.f32.mxu0 0.0
        %3083 = vmatmul.mubr.f32.gmra.mxu0 %v2750
        %v3084 = vpop.f32.mrf.mxu0
        %v3085 = vadd.f32 %v2930, %v3084
        %v3086 = vpop.f32.mrf.mxu0
        %3087 = vmatprep.mubr.f32.mxu0 0.0
        %3088 = vmatmul.mubr.f32.gmra.mxu0 %v2751
        %v3089 = vpop.f32.mrf.mxu0
        %v3090 = vadd.f32 %v2935, %v3089
        %v3091 = vpop.f32.mrf.mxu0
        %3092 = vmatprep.mubr.f32.mxu0 0.0
        %3093 = vmatmul.mubr.f32.gmra.mxu0 %v2752
        %v3094 = vpop.f32.mrf.mxu0
        %v3095 = vadd.f32 %v2940, %v3094
        %v3096 = vpop.f32.mrf.mxu0
        %3097 = vmatprep.mubr.f32.mxu0 0.0
        %3098 = vmatmul.mubr.f32.gmra.mxu0 %v2753
        %v3099 = vpop.f32.mrf.mxu0
        %v3100 = vadd.f32 %v2945, %v3099
        %v3101 = vpop.f32.mrf.mxu0
        %3102 = vmatprep.mubr.f32.mxu0 0.0
        %3103 = vmatmul.mubr.f32.gmra.mxu0 %v2754
        %v3104 = vpop.f32.mrf.mxu0
        %v3105 = vadd.f32 %v2950, %v3104
        %v3106 = vpop.f32.mrf.mxu0
        %3107 = vmatprep.mubr.f32.mxu0 0.0
        %3108 = vmatmul.mubr.f32.gmra.mxu0 %v2755
        %v3109 = vpop.f32.mrf.mxu0
        %v3110 = vadd.f32 %v2955, %v3109
        %v3111 = vpop.f32.mrf.mxu0
        %3112 = vmatprep.mubr.f32.mxu0 0.0
        %3113 = vmatmul.mubr.f32.gmra.mxu0 %v2756
        %v3114 = vpop.f32.mrf.mxu0
        %v3115 = vadd.f32 %v2960, %v3114
        %v3116 = vpop.f32.mrf.mxu0
        %3117 = vdwg.mxu0
        %v3118 = vld [vmem:[#allocation2 + $0x9] sm:$0xff]
        %v3119 = vld [vmem:[#allocation2 + $0x11] sm:$0xff]
        %v3120 = vld [vmem:[#allocation2 + $0x19] sm:$0xff]
        %v3121 = vld [vmem:[#allocation2 + $0x21] sm:$0xff]
        %v3122 = vld [vmem:[#allocation2 + $0x29] sm:$0xff]
        %v3123 = vld [vmem:[#allocation2 + $0x31] sm:$0xff]
        %v3124 = vld [vmem:[#allocation2 + $0x39] sm:$0xff]
        %v3125 = vld [vmem:[#allocation2 + $0x41] sm:$0xff]
        %v3126 = vld [vmem:[#allocation2 + $0x49] sm:$0xff]
        %v3127 = vld [vmem:[#allocation2 + $0x51] sm:$0xff]
        %v3128 = vld [vmem:[#allocation2 + $0x59] sm:$0xff]
        %v3129 = vld [vmem:[#allocation2 + $0x61] sm:$0xff]
        %v3130 = vld [vmem:[#allocation2 + $0x69] sm:$0xff]
        %v3131 = vld [vmem:[#allocation2 + $0x71] sm:$0xff]
        %v3132 = vld [vmem:[#allocation2 + $0x79] sm:$0xff]
        %v3133 = vld [vmem:[#allocation2 + $0x81] sm:$0xff]
        %v3134 = vld [vmem:[#allocation2 + $0x89] sm:$0xff]
        %v3135 = vld [vmem:[#allocation2 + $0x91] sm:$0xff]
        %s3136 = scalar_lea.vmem [#allocation8], 256
        %v3137 = vld [vmem:[%s3136] sm:$0xff]
        %v3138 = vld [vmem:[%s3136 + $0x8] sm:$0xff]
        %v3139 = vld [vmem:[%s3136 + $0x10] sm:$0xff]
        %v3140 = vld [vmem:[%s3136 + $0x18] sm:$0xff]
        %v3141 = vld [vmem:[%s3136 + $0x20] sm:$0xff]
        %v3142 = vld [vmem:[%s3136 + $0x28] sm:$0xff]
        %v3143 = vld [vmem:[%s3136 + $0x30] sm:$0xff]
        %v3144 = vld [vmem:[%s3136 + $0x38] sm:$0xff]
        %v3145 = vld [vmem:[%s3136 + $0x40] sm:$0xff]
        %v3146 = vld [vmem:[%s3136 + $0x48] sm:$0xff]
        %v3147 = vld [vmem:[%s3136 + $0x50] sm:$0xff]
        %v3148 = vld [vmem:[%s3136 + $0x58] sm:$0xff]
        %v3149 = vld [vmem:[%s3136 + $0x60] sm:$0xff]
        %v3150 = vld [vmem:[%s3136 + $0x68] sm:$0xff]
        %v3151 = vld [vmem:[%s3136 + $0x70] sm:$0xff]
        %v3152 = vld [vmem:[%s3136 + $0x78] sm:$0xff]
        %3153 = vmatprep.subr.mxu0 0.0
        %3154 = vmatpush1.msra.mxu0 %v3152
        %3155 = vmatprep.subr.mxu0 0.0
        %3156 = vmatpush1.msra.mxu0 %v3151
        %3157 = vmatprep.subr.mxu0 0.0
        %3158 = vmatpush1.msra.mxu0 %v3150
        %3159 = vmatprep.subr.mxu0 0.0
        %3160 = vmatpush1.msra.mxu0 %v3149
        %3161 = vmatprep.subr.mxu0 0.0
        %3162 = vmatpush1.msra.mxu0 %v3148
        %3163 = vmatprep.subr.mxu0 0.0
        %3164 = vmatpush1.msra.mxu0 %v3147
        %3165 = vmatprep.subr.mxu0 0.0
        %3166 = vmatpush1.msra.mxu0 %v3146
        %3167 = vmatprep.subr.mxu0 0.0
        %3168 = vmatpush1.msra.mxu0 %v3145
        %3169 = vmatprep.subr.mxu0 0.0
        %3170 = vmatpush1.msra.mxu0 %v3144
        %3171 = vmatprep.subr.mxu0 0.0
        %3172 = vmatpush1.msra.mxu0 %v3143
        %3173 = vmatprep.subr.mxu0 0.0
        %3174 = vmatpush1.msra.mxu0 %v3142
        %3175 = vmatprep.subr.mxu0 0.0
        %3176 = vmatpush1.msra.mxu0 %v3141
        %3177 = vmatprep.subr.mxu0 0.0
        %3178 = vmatpush1.msra.mxu0 %v3140
        %3179 = vmatprep.subr.mxu0 0.0
        %3180 = vmatpush1.msra.mxu0 %v3139
        %3181 = vmatprep.subr.mxu0 0.0
        %3182 = vmatpush1.msra.mxu0 %v3138
        %3183 = vmatprep.subr.mxu0 0.0
        %3184 = vmatpush1.msra.mxu0 %v3137
        %3185 = vmatprep.subr.mxu0 0.0
        %3186 = vmatpush2.msra.mxu0 0.0
        %3187 = vmatprep.subr.mxu0 0.0
        %3188 = vmatpush2.msra.mxu0 0.0
        %3189 = vmatprep.subr.mxu0 0.0
        %3190 = vmatpush2.msra.mxu0 0.0
        %3191 = vmatprep.subr.mxu0 0.0
        %3192 = vmatpush2.msra.mxu0 0.0
        %3193 = vmatprep.subr.mxu0 0.0
        %3194 = vmatpush2.msra.mxu0 0.0
        %3195 = vmatprep.subr.mxu0 0.0
        %3196 = vmatpush2.msra.mxu0 0.0
        %3197 = vmatprep.subr.mxu0 0.0
        %3198 = vmatpush2.msra.mxu0 0.0
        %3199 = vmatprep.subr.mxu0 0.0
        %3200 = vmatpush2.msra.mxu0 0.0
        %3201 = vmatprep.subr.mxu0 0.0
        %3202 = vmatpush2.msra.mxu0 0.0
        %3203 = vmatprep.subr.mxu0 0.0
        %3204 = vmatpush2.msra.mxu0 0.0
        %3205 = vmatprep.subr.mxu0 0.0
        %3206 = vmatpush2.msra.mxu0 0.0
        %3207 = vmatprep.subr.mxu0 0.0
        %3208 = vmatpush2.msra.mxu0 0.0
        %3209 = vmatprep.subr.mxu0 0.0
        %3210 = vmatpush2.msra.mxu0 0.0
        %3211 = vmatprep.subr.mxu0 0.0
        %3212 = vmatpush2.msra.mxu0 0.0
        %3213 = vmatprep.subr.mxu0 0.0
        %3214 = vmatpush2.msra.mxu0 0.0
        %3215 = vmatprep.subr.mxu0 0.0
        %3216 = vmatpush2.msra.mxu0 0.0
        %3217 = vmatprep.mubr.f32.mxu0 0.0
        %3218 = vmatmul.mubr.f32.gmra.mxu0 %v3118
        %v3219 = vpop.f32.mrf.mxu0
        %v3220 = vadd.f32 0.0, %v3219
        %v3221 = vpop.f32.mrf.mxu0
        %3222 = vmatprep.mubr.f32.mxu0 0.0
        %3223 = vmatmul.mubr.f32.gmra.mxu0 %v3119
        %v3224 = vpop.f32.mrf.mxu0
        %v3225 = vadd.f32 0.0, %v3224
        %v3226 = vpop.f32.mrf.mxu0
        %3227 = vmatprep.mubr.f32.mxu0 0.0
        %3228 = vmatmul.mubr.f32.gmra.mxu0 %v3120
        %v3229 = vpop.f32.mrf.mxu0
        %v3230 = vadd.f32 0.0, %v3229
        %v3231 = vpop.f32.mrf.mxu0
        %3232 = vmatprep.mubr.f32.mxu0 0.0
        %3233 = vmatmul.mubr.f32.gmra.mxu0 %v3121
        %v3234 = vpop.f32.mrf.mxu0
        %v3235 = vadd.f32 0.0, %v3234
        %v3236 = vpop.f32.mrf.mxu0
        %3237 = vmatprep.mubr.f32.mxu0 0.0
        %3238 = vmatmul.mubr.f32.gmra.mxu0 %v3122
        %v3239 = vpop.f32.mrf.mxu0
        %v3240 = vadd.f32 0.0, %v3239
        %v3241 = vpop.f32.mrf.mxu0
        %3242 = vmatprep.mubr.f32.mxu0 0.0
        %3243 = vmatmul.mubr.f32.gmra.mxu0 %v3123
        %v3244 = vpop.f32.mrf.mxu0
        %v3245 = vadd.f32 0.0, %v3244
        %v3246 = vpop.f32.mrf.mxu0
        %3247 = vmatprep.mubr.f32.mxu0 0.0
        %3248 = vmatmul.mubr.f32.gmra.mxu0 %v3124
        %v3249 = vpop.f32.mrf.mxu0
        %v3250 = vadd.f32 0.0, %v3249
        %v3251 = vpop.f32.mrf.mxu0
        %3252 = vmatprep.mubr.f32.mxu0 0.0
        %3253 = vmatmul.mubr.f32.gmra.mxu0 %v3125
        %v3254 = vpop.f32.mrf.mxu0
        %v3255 = vadd.f32 0.0, %v3254
        %v3256 = vpop.f32.mrf.mxu0
        %3257 = vmatprep.mubr.f32.mxu0 0.0
        %3258 = vmatmul.mubr.f32.gmra.mxu0 %v3126
        %v3259 = vpop.f32.mrf.mxu0
        %v3260 = vadd.f32 0.0, %v3259
        %v3261 = vpop.f32.mrf.mxu0
        %3262 = vmatprep.mubr.f32.mxu0 0.0
        %3263 = vmatmul.mubr.f32.gmra.mxu0 %v3127
        %v3264 = vpop.f32.mrf.mxu0
        %v3265 = vadd.f32 0.0, %v3264
        %v3266 = vpop.f32.mrf.mxu0
        %3267 = vmatprep.mubr.f32.mxu0 0.0
        %3268 = vmatmul.mubr.f32.gmra.mxu0 %v3128
        %v3269 = vpop.f32.mrf.mxu0
        %v3270 = vadd.f32 0.0, %v3269
        %v3271 = vpop.f32.mrf.mxu0
        %3272 = vmatprep.mubr.f32.mxu0 0.0
        %3273 = vmatmul.mubr.f32.gmra.mxu0 %v3129
        %v3274 = vpop.f32.mrf.mxu0
        %v3275 = vadd.f32 0.0, %v3274
        %v3276 = vpop.f32.mrf.mxu0
        %3277 = vmatprep.mubr.f32.mxu0 0.0
        %3278 = vmatmul.mubr.f32.gmra.mxu0 %v3130
        %v3279 = vpop.f32.mrf.mxu0
        %v3280 = vadd.f32 0.0, %v3279
        %v3281 = vpop.f32.mrf.mxu0
        %3282 = vmatprep.mubr.f32.mxu0 0.0
        %3283 = vmatmul.mubr.f32.gmra.mxu0 %v3131
        %v3284 = vpop.f32.mrf.mxu0
        %v3285 = vadd.f32 0.0, %v3284
        %v3286 = vpop.f32.mrf.mxu0
        %3287 = vmatprep.mubr.f32.mxu0 0.0
        %3288 = vmatmul.mubr.f32.gmra.mxu0 %v3132
        %v3289 = vpop.f32.mrf.mxu0
        %v3290 = vadd.f32 0.0, %v3289
        %v3291 = vpop.f32.mrf.mxu0
        %3292 = vmatprep.mubr.f32.mxu0 0.0
        %3293 = vmatmul.mubr.f32.gmra.mxu0 %v3133
        %v3294 = vpop.f32.mrf.mxu0
        %v3295 = vadd.f32 0.0, %v3294
        %v3296 = vpop.f32.mrf.mxu0
        %3297 = vmatprep.mubr.f32.mxu0 0.0
        %3298 = vmatmul.mubr.f32.gmra.mxu0 %v3134
        %v3299 = vpop.f32.mrf.mxu0
        %v3300 = vadd.f32 0.0, %v3299
        %v3301 = vpop.f32.mrf.mxu0
        %3302 = vmatprep.mubr.f32.mxu0 0.0
        %3303 = vmatmul.mubr.f32.gmra.mxu0 %v3135
        %v3304 = vpop.f32.mrf.mxu0
        %v3305 = vadd.f32 0.0, %v3304
        %v3306 = vpop.f32.mrf.mxu0
        %3307 = vdwg.mxu0
        %v3308 = vadd.f32 %v3030, %v3220
        %v3309 = vadd.f32 %v3035, %v3225
        %v3310 = vadd.f32 %v3040, %v3230
        %v3311 = vadd.f32 %v3045, %v3235
        %v3312 = vadd.f32 %v3050, %v3240
        %v3313 = vadd.f32 %v3055, %v3245
        %v3314 = vadd.f32 %v3060, %v3250
        %v3315 = vadd.f32 %v3065, %v3255
        %v3316 = vadd.f32 %v3070, %v3260
        %v3317 = vadd.f32 %v3075, %v3265
        %v3318 = vadd.f32 %v3080, %v3270
        %v3319 = vadd.f32 %v3085, %v3275
        %v3320 = vadd.f32 %v3090, %v3280
        %v3321 = vadd.f32 %v3095, %v3285
        %v3322 = vadd.f32 %v3100, %v3290
        %v3323 = vadd.f32 %v3105, %v3295
        %v3324 = vadd.f32 %v3110, %v3300
        %v3325 = vadd.f32 %v3115, %v3305
        %v3326 = vld [vmem:[#allocation2 + $0x19] sm:$0xff]
        %v3327 = vld [vmem:[#allocation2 + $0x21] sm:$0xff]
        %v3328 = vld [vmem:[#allocation2 + $0x29] sm:$0xff]
        %v3329 = vld [vmem:[#allocation2 + $0x31] sm:$0xff]
        %v3330 = vld [vmem:[#allocation2 + $0x39] sm:$0xff]
        %v3331 = vld [vmem:[#allocation2 + $0x41] sm:$0xff]
        %v3332 = vld [vmem:[#allocation2 + $0x49] sm:$0xff]
        %v3333 = vld [vmem:[#allocation2 + $0x51] sm:$0xff]
        %v3334 = vld [vmem:[#allocation2 + $0x59] sm:$0xff]
        %v3335 = vld [vmem:[#allocation2 + $0x61] sm:$0xff]
        %v3336 = vld [vmem:[#allocation2 + $0x69] sm:$0xff]
        %v3337 = vld [vmem:[#allocation2 + $0x71] sm:$0xff]
        %v3338 = vld [vmem:[#allocation2 + $0x79] sm:$0xff]
        %v3339 = vld [vmem:[#allocation2 + $0x81] sm:$0xff]
        %v3340 = vld [vmem:[#allocation2 + $0x89] sm:$0xff]
        %v3341 = vld [vmem:[#allocation2 + $0x91] sm:$0xff]
        %v3342 = vld [vmem:[#allocation2 + $0x99] sm:$0xff]
        %v3343 = vld [vmem:[#allocation2 + $0xa1] sm:$0xff]
        %s3344 = scalar_lea.vmem [#allocation8], 384
        %v3345 = vld [vmem:[%s3344] sm:$0xff]
        %v3346 = vld [vmem:[%s3344 + $0x8] sm:$0xff]
        %v3347 = vld [vmem:[%s3344 + $0x10] sm:$0xff]
        %v3348 = vld [vmem:[%s3344 + $0x18] sm:$0xff]
        %v3349 = vld [vmem:[%s3344 + $0x20] sm:$0xff]
        %v3350 = vld [vmem:[%s3344 + $0x28] sm:$0xff]
        %v3351 = vld [vmem:[%s3344 + $0x30] sm:$0xff]
        %v3352 = vld [vmem:[%s3344 + $0x38] sm:$0xff]
        %v3353 = vld [vmem:[%s3344 + $0x40] sm:$0xff]
        %v3354 = vld [vmem:[%s3344 + $0x48] sm:$0xff]
        %v3355 = vld [vmem:[%s3344 + $0x50] sm:$0xff]
        %v3356 = vld [vmem:[%s3344 + $0x58] sm:$0xff]
        %v3357 = vld [vmem:[%s3344 + $0x60] sm:$0xff]
        %v3358 = vld [vmem:[%s3344 + $0x68] sm:$0xff]
        %v3359 = vld [vmem:[%s3344 + $0x70] sm:$0xff]
        %v3360 = vld [vmem:[%s3344 + $0x78] sm:$0xff]
        %3361 = vmatprep.subr.mxu0 0.0
        %3362 = vmatpush1.msra.mxu0 %v3360
        %3363 = vmatprep.subr.mxu0 0.0
        %3364 = vmatpush1.msra.mxu0 %v3359
        %3365 = vmatprep.subr.mxu0 0.0
        %3366 = vmatpush1.msra.mxu0 %v3358
        %3367 = vmatprep.subr.mxu0 0.0
        %3368 = vmatpush1.msra.mxu0 %v3357
        %3369 = vmatprep.subr.mxu0 0.0
        %3370 = vmatpush1.msra.mxu0 %v3356
        %3371 = vmatprep.subr.mxu0 0.0
        %3372 = vmatpush1.msra.mxu0 %v3355
        %3373 = vmatprep.subr.mxu0 0.0
        %3374 = vmatpush1.msra.mxu0 %v3354
        %3375 = vmatprep.subr.mxu0 0.0
        %3376 = vmatpush1.msra.mxu0 %v3353
        %3377 = vmatprep.subr.mxu0 0.0
        %3378 = vmatpush1.msra.mxu0 %v3352
        %3379 = vmatprep.subr.mxu0 0.0
        %3380 = vmatpush1.msra.mxu0 %v3351
        %3381 = vmatprep.subr.mxu0 0.0
        %3382 = vmatpush1.msra.mxu0 %v3350
        %3383 = vmatprep.subr.mxu0 0.0
        %3384 = vmatpush1.msra.mxu0 %v3349
        %3385 = vmatprep.subr.mxu0 0.0
        %3386 = vmatpush1.msra.mxu0 %v3348
        %3387 = vmatprep.subr.mxu0 0.0
        %3388 = vmatpush1.msra.mxu0 %v3347
        %3389 = vmatprep.subr.mxu0 0.0
        %3390 = vmatpush1.msra.mxu0 %v3346
        %3391 = vmatprep.subr.mxu0 0.0
        %3392 = vmatpush1.msra.mxu0 %v3345
        %3393 = vmatprep.subr.mxu0 0.0
        %3394 = vmatpush2.msra.mxu0 0.0
        %3395 = vmatprep.subr.mxu0 0.0
        %3396 = vmatpush2.msra.mxu0 0.0
        %3397 = vmatprep.subr.mxu0 0.0
        %3398 = vmatpush2.msra.mxu0 0.0
        %3399 = vmatprep.subr.mxu0 0.0
        %3400 = vmatpush2.msra.mxu0 0.0
        %3401 = vmatprep.subr.mxu0 0.0
        %3402 = vmatpush2.msra.mxu0 0.0
        %3403 = vmatprep.subr.mxu0 0.0
        %3404 = vmatpush2.msra.mxu0 0.0
        %3405 = vmatprep.subr.mxu0 0.0
        %3406 = vmatpush2.msra.mxu0 0.0
        %3407 = vmatprep.subr.mxu0 0.0
        %3408 = vmatpush2.msra.mxu0 0.0
        %3409 = vmatprep.subr.mxu0 0.0
        %3410 = vmatpush2.msra.mxu0 0.0
        %3411 = vmatprep.subr.mxu0 0.0
        %3412 = vmatpush2.msra.mxu0 0.0
        %3413 = vmatprep.subr.mxu0 0.0
        %3414 = vmatpush2.msra.mxu0 0.0
        %3415 = vmatprep.subr.mxu0 0.0
        %3416 = vmatpush2.msra.mxu0 0.0
        %3417 = vmatprep.subr.mxu0 0.0
        %3418 = vmatpush2.msra.mxu0 0.0
        %3419 = vmatprep.subr.mxu0 0.0
        %3420 = vmatpush2.msra.mxu0 0.0
        %3421 = vmatprep.subr.mxu0 0.0
        %3422 = vmatpush2.msra.mxu0 0.0
        %3423 = vmatprep.subr.mxu0 0.0
        %3424 = vmatpush2.msra.mxu0 0.0
        %3425 = vmatprep.mubr.f32.mxu0 0.0
        %3426 = vmatmul.mubr.f32.gmra.mxu0 %v3326
        %v3427 = vpop.f32.mrf.mxu0
        %v3428 = vadd.f32 0.0, %v3427
        %v3429 = vpop.f32.mrf.mxu0
        %3430 = vmatprep.mubr.f32.mxu0 0.0
        %3431 = vmatmul.mubr.f32.gmra.mxu0 %v3327
        %v3432 = vpop.f32.mrf.mxu0
        %v3433 = vadd.f32 0.0, %v3432
        %v3434 = vpop.f32.mrf.mxu0
        %3435 = vmatprep.mubr.f32.mxu0 0.0
        %3436 = vmatmul.mubr.f32.gmra.mxu0 %v3328
        %v3437 = vpop.f32.mrf.mxu0
        %v3438 = vadd.f32 0.0, %v3437
        %v3439 = vpop.f32.mrf.mxu0
        %3440 = vmatprep.mubr.f32.mxu0 0.0
        %3441 = vmatmul.mubr.f32.gmra.mxu0 %v3329
        %v3442 = vpop.f32.mrf.mxu0
        %v3443 = vadd.f32 0.0, %v3442
        %v3444 = vpop.f32.mrf.mxu0
        %3445 = vmatprep.mubr.f32.mxu0 0.0
        %3446 = vmatmul.mubr.f32.gmra.mxu0 %v3330
        %v3447 = vpop.f32.mrf.mxu0
        %v3448 = vadd.f32 0.0, %v3447
        %v3449 = vpop.f32.mrf.mxu0
        %3450 = vmatprep.mubr.f32.mxu0 0.0
        %3451 = vmatmul.mubr.f32.gmra.mxu0 %v3331
        %v3452 = vpop.f32.mrf.mxu0
        %v3453 = vadd.f32 0.0, %v3452
        %v3454 = vpop.f32.mrf.mxu0
        %3455 = vmatprep.mubr.f32.mxu0 0.0
        %3456 = vmatmul.mubr.f32.gmra.mxu0 %v3332
        %v3457 = vpop.f32.mrf.mxu0
        %v3458 = vadd.f32 0.0, %v3457
        %v3459 = vpop.f32.mrf.mxu0
        %3460 = vmatprep.mubr.f32.mxu0 0.0
        %3461 = vmatmul.mubr.f32.gmra.mxu0 %v3333
        %v3462 = vpop.f32.mrf.mxu0
        %v3463 = vadd.f32 0.0, %v3462
        %v3464 = vpop.f32.mrf.mxu0
        %3465 = vmatprep.mubr.f32.mxu0 0.0
        %3466 = vmatmul.mubr.f32.gmra.mxu0 %v3334
        %v3467 = vpop.f32.mrf.mxu0
        %v3468 = vadd.f32 0.0, %v3467
        %v3469 = vpop.f32.mrf.mxu0
        %3470 = vmatprep.mubr.f32.mxu0 0.0
        %3471 = vmatmul.mubr.f32.gmra.mxu0 %v3335
        %v3472 = vpop.f32.mrf.mxu0
        %v3473 = vadd.f32 0.0, %v3472
        %v3474 = vpop.f32.mrf.mxu0
        %3475 = vmatprep.mubr.f32.mxu0 0.0
        %3476 = vmatmul.mubr.f32.gmra.mxu0 %v3336
        %v3477 = vpop.f32.mrf.mxu0
        %v3478 = vadd.f32 0.0, %v3477
        %v3479 = vpop.f32.mrf.mxu0
        %3480 = vmatprep.mubr.f32.mxu0 0.0
        %3481 = vmatmul.mubr.f32.gmra.mxu0 %v3337
        %v3482 = vpop.f32.mrf.mxu0
        %v3483 = vadd.f32 0.0, %v3482
        %v3484 = vpop.f32.mrf.mxu0
        %3485 = vmatprep.mubr.f32.mxu0 0.0
        %3486 = vmatmul.mubr.f32.gmra.mxu0 %v3338
        %v3487 = vpop.f32.mrf.mxu0
        %v3488 = vadd.f32 0.0, %v3487
        %v3489 = vpop.f32.mrf.mxu0
        %3490 = vmatprep.mubr.f32.mxu0 0.0
        %3491 = vmatmul.mubr.f32.gmra.mxu0 %v3339
        %v3492 = vpop.f32.mrf.mxu0
        %v3493 = vadd.f32 0.0, %v3492
        %v3494 = vpop.f32.mrf.mxu0
        %3495 = vmatprep.mubr.f32.mxu0 0.0
        %3496 = vmatmul.mubr.f32.gmra.mxu0 %v3340
        %v3497 = vpop.f32.mrf.mxu0
        %v3498 = vadd.f32 0.0, %v3497
        %v3499 = vpop.f32.mrf.mxu0
        %3500 = vmatprep.mubr.f32.mxu0 0.0
        %3501 = vmatmul.mubr.f32.gmra.mxu0 %v3341
        %v3502 = vpop.f32.mrf.mxu0
        %v3503 = vadd.f32 0.0, %v3502
        %v3504 = vpop.f32.mrf.mxu0
        %3505 = vmatprep.mubr.f32.mxu0 0.0
        %3506 = vmatmul.mubr.f32.gmra.mxu0 %v3342
        %v3507 = vpop.f32.mrf.mxu0
        %v3508 = vadd.f32 0.0, %v3507
        %v3509 = vpop.f32.mrf.mxu0
        %3510 = vmatprep.mubr.f32.mxu0 0.0
        %3511 = vmatmul.mubr.f32.gmra.mxu0 %v3343
        %v3512 = vpop.f32.mrf.mxu0
        %v3513 = vadd.f32 0.0, %v3512
        %v3514 = vpop.f32.mrf.mxu0
        %3515 = vdwg.mxu0
        %v3516 = vadd.f32 %v3308, %v3428
        %v3517 = vadd.f32 %v3309, %v3433
        %v3518 = vadd.f32 %v3310, %v3438
        %v3519 = vadd.f32 %v3311, %v3443
        %v3520 = vadd.f32 %v3312, %v3448
        %v3521 = vadd.f32 %v3313, %v3453
        %v3522 = vadd.f32 %v3314, %v3458
        %v3523 = vadd.f32 %v3315, %v3463
        %v3524 = vadd.f32 %v3316, %v3468
        %v3525 = vadd.f32 %v3317, %v3473
        %v3526 = vadd.f32 %v3318, %v3478
        %v3527 = vadd.f32 %v3319, %v3483
        %v3528 = vadd.f32 %v3320, %v3488
        %v3529 = vadd.f32 %v3321, %v3493
        %v3530 = vadd.f32 %v3322, %v3498
        %v3531 = vadd.f32 %v3323, %v3503
        %v3532 = vadd.f32 %v3324, %v3508
        %v3533 = vadd.f32 %v3325, %v3513
        %v3534 = vld [vmem:[#allocation2 + $0x1a] sm:$0xff]
        %v3535 = vld [vmem:[#allocation2 + $0x22] sm:$0xff]
        %v3536 = vld [vmem:[#allocation2 + $0x2a] sm:$0xff]
        %v3537 = vld [vmem:[#allocation2 + $0x32] sm:$0xff]
        %v3538 = vld [vmem:[#allocation2 + $0x3a] sm:$0xff]
        %v3539 = vld [vmem:[#allocation2 + $0x42] sm:$0xff]
        %v3540 = vld [vmem:[#allocation2 + $0x4a] sm:$0xff]
        %v3541 = vld [vmem:[#allocation2 + $0x52] sm:$0xff]
        %v3542 = vld [vmem:[#allocation2 + $0x5a] sm:$0xff]
        %v3543 = vld [vmem:[#allocation2 + $0x62] sm:$0xff]
        %v3544 = vld [vmem:[#allocation2 + $0x6a] sm:$0xff]
        %v3545 = vld [vmem:[#allocation2 + $0x72] sm:$0xff]
        %v3546 = vld [vmem:[#allocation2 + $0x7a] sm:$0xff]
        %v3547 = vld [vmem:[#allocation2 + $0x82] sm:$0xff]
        %v3548 = vld [vmem:[#allocation2 + $0x8a] sm:$0xff]
        %v3549 = vld [vmem:[#allocation2 + $0x92] sm:$0xff]
        %v3550 = vld [vmem:[#allocation2 + $0x9a] sm:$0xff]
        %v3551 = vld [vmem:[#allocation2 + $0xa2] sm:$0xff]
        %s3552 = scalar_lea.vmem [#allocation8], 512
        %v3553 = vld [vmem:[%s3552] sm:$0xff]
        %v3554 = vld [vmem:[%s3552 + $0x8] sm:$0xff]
        %v3555 = vld [vmem:[%s3552 + $0x10] sm:$0xff]
        %v3556 = vld [vmem:[%s3552 + $0x18] sm:$0xff]
        %v3557 = vld [vmem:[%s3552 + $0x20] sm:$0xff]
        %v3558 = vld [vmem:[%s3552 + $0x28] sm:$0xff]
        %v3559 = vld [vmem:[%s3552 + $0x30] sm:$0xff]
        %v3560 = vld [vmem:[%s3552 + $0x38] sm:$0xff]
        %v3561 = vld [vmem:[%s3552 + $0x40] sm:$0xff]
        %v3562 = vld [vmem:[%s3552 + $0x48] sm:$0xff]
        %v3563 = vld [vmem:[%s3552 + $0x50] sm:$0xff]
        %v3564 = vld [vmem:[%s3552 + $0x58] sm:$0xff]
        %v3565 = vld [vmem:[%s3552 + $0x60] sm:$0xff]
        %v3566 = vld [vmem:[%s3552 + $0x68] sm:$0xff]
        %v3567 = vld [vmem:[%s3552 + $0x70] sm:$0xff]
        %v3568 = vld [vmem:[%s3552 + $0x78] sm:$0xff]
        %3569 = vmatprep.subr.mxu0 0.0
        %3570 = vmatpush1.msra.mxu0 %v3568
        %3571 = vmatprep.subr.mxu0 0.0
        %3572 = vmatpush1.msra.mxu0 %v3567
        %3573 = vmatprep.subr.mxu0 0.0
        %3574 = vmatpush1.msra.mxu0 %v3566
        %3575 = vmatprep.subr.mxu0 0.0
        %3576 = vmatpush1.msra.mxu0 %v3565
        %3577 = vmatprep.subr.mxu0 0.0
        %3578 = vmatpush1.msra.mxu0 %v3564
        %3579 = vmatprep.subr.mxu0 0.0
        %3580 = vmatpush1.msra.mxu0 %v3563
        %3581 = vmatprep.subr.mxu0 0.0
        %3582 = vmatpush1.msra.mxu0 %v3562
        %3583 = vmatprep.subr.mxu0 0.0
        %3584 = vmatpush1.msra.mxu0 %v3561
        %3585 = vmatprep.subr.mxu0 0.0
        %3586 = vmatpush1.msra.mxu0 %v3560
        %3587 = vmatprep.subr.mxu0 0.0
        %3588 = vmatpush1.msra.mxu0 %v3559
        %3589 = vmatprep.subr.mxu0 0.0
        %3590 = vmatpush1.msra.mxu0 %v3558
        %3591 = vmatprep.subr.mxu0 0.0
        %3592 = vmatpush1.msra.mxu0 %v3557
        %3593 = vmatprep.subr.mxu0 0.0
        %3594 = vmatpush1.msra.mxu0 %v3556
        %3595 = vmatprep.subr.mxu0 0.0
        %3596 = vmatpush1.msra.mxu0 %v3555
        %3597 = vmatprep.subr.mxu0 0.0
        %3598 = vmatpush1.msra.mxu0 %v3554
        %3599 = vmatprep.subr.mxu0 0.0
        %3600 = vmatpush1.msra.mxu0 %v3553
        %3601 = vmatprep.subr.mxu0 0.0
        %3602 = vmatpush2.msra.mxu0 0.0
        %3603 = vmatprep.subr.mxu0 0.0
        %3604 = vmatpush2.msra.mxu0 0.0
        %3605 = vmatprep.subr.mxu0 0.0
        %3606 = vmatpush2.msra.mxu0 0.0
        %3607 = vmatprep.subr.mxu0 0.0
        %3608 = vmatpush2.msra.mxu0 0.0
        %3609 = vmatprep.subr.mxu0 0.0
        %3610 = vmatpush2.msra.mxu0 0.0
        %3611 = vmatprep.subr.mxu0 0.0
        %3612 = vmatpush2.msra.mxu0 0.0
        %3613 = vmatprep.subr.mxu0 0.0
        %3614 = vmatpush2.msra.mxu0 0.0
        %3615 = vmatprep.subr.mxu0 0.0
        %3616 = vmatpush2.msra.mxu0 0.0
        %3617 = vmatprep.subr.mxu0 0.0
        %3618 = vmatpush2.msra.mxu0 0.0
        %3619 = vmatprep.subr.mxu0 0.0
        %3620 = vmatpush2.msra.mxu0 0.0
        %3621 = vmatprep.subr.mxu0 0.0
        %3622 = vmatpush2.msra.mxu0 0.0
        %3623 = vmatprep.subr.mxu0 0.0
        %3624 = vmatpush2.msra.mxu0 0.0
        %3625 = vmatprep.subr.mxu0 0.0
        %3626 = vmatpush2.msra.mxu0 0.0
        %3627 = vmatprep.subr.mxu0 0.0
        %3628 = vmatpush2.msra.mxu0 0.0
        %3629 = vmatprep.subr.mxu0 0.0
        %3630 = vmatpush2.msra.mxu0 0.0
        %3631 = vmatprep.subr.mxu0 0.0
        %3632 = vmatpush2.msra.mxu0 0.0
        %3633 = vmatprep.mubr.f32.mxu0 0.0
        %3634 = vmatmul.mubr.f32.gmra.mxu0 %v3534
        %v3635 = vpop.f32.mrf.mxu0
        %v3636 = vadd.f32 0.0, %v3635
        %v3637 = vpop.f32.mrf.mxu0
        %3638 = vmatprep.mubr.f32.mxu0 0.0
        %3639 = vmatmul.mubr.f32.gmra.mxu0 %v3535
        %v3640 = vpop.f32.mrf.mxu0
        %v3641 = vadd.f32 0.0, %v3640
        %v3642 = vpop.f32.mrf.mxu0
        %3643 = vmatprep.mubr.f32.mxu0 0.0
        %3644 = vmatmul.mubr.f32.gmra.mxu0 %v3536
        %v3645 = vpop.f32.mrf.mxu0
        %v3646 = vadd.f32 0.0, %v3645
        %v3647 = vpop.f32.mrf.mxu0
        %3648 = vmatprep.mubr.f32.mxu0 0.0
        %3649 = vmatmul.mubr.f32.gmra.mxu0 %v3537
        %v3650 = vpop.f32.mrf.mxu0
        %v3651 = vadd.f32 0.0, %v3650
        %v3652 = vpop.f32.mrf.mxu0
        %3653 = vmatprep.mubr.f32.mxu0 0.0
        %3654 = vmatmul.mubr.f32.gmra.mxu0 %v3538
        %v3655 = vpop.f32.mrf.mxu0
        %v3656 = vadd.f32 0.0, %v3655
        %v3657 = vpop.f32.mrf.mxu0
        %3658 = vmatprep.mubr.f32.mxu0 0.0
        %3659 = vmatmul.mubr.f32.gmra.mxu0 %v3539
        %v3660 = vpop.f32.mrf.mxu0
        %v3661 = vadd.f32 0.0, %v3660
        %v3662 = vpop.f32.mrf.mxu0
        %3663 = vmatprep.mubr.f32.mxu0 0.0
        %3664 = vmatmul.mubr.f32.gmra.mxu0 %v3540
        %v3665 = vpop.f32.mrf.mxu0
        %v3666 = vadd.f32 0.0, %v3665
        %v3667 = vpop.f32.mrf.mxu0
        %3668 = vmatprep.mubr.f32.mxu0 0.0
        %3669 = vmatmul.mubr.f32.gmra.mxu0 %v3541
        %v3670 = vpop.f32.mrf.mxu0
        %v3671 = vadd.f32 0.0, %v3670
        %v3672 = vpop.f32.mrf.mxu0
        %3673 = vmatprep.mubr.f32.mxu0 0.0
        %3674 = vmatmul.mubr.f32.gmra.mxu0 %v3542
        %v3675 = vpop.f32.mrf.mxu0
        %v3676 = vadd.f32 0.0, %v3675
        %v3677 = vpop.f32.mrf.mxu0
        %3678 = vmatprep.mubr.f32.mxu0 0.0
        %3679 = vmatmul.mubr.f32.gmra.mxu0 %v3543
        %v3680 = vpop.f32.mrf.mxu0
        %v3681 = vadd.f32 0.0, %v3680
        %v3682 = vpop.f32.mrf.mxu0
        %3683 = vmatprep.mubr.f32.mxu0 0.0
        %3684 = vmatmul.mubr.f32.gmra.mxu0 %v3544
        %v3685 = vpop.f32.mrf.mxu0
        %v3686 = vadd.f32 0.0, %v3685
        %v3687 = vpop.f32.mrf.mxu0
        %3688 = vmatprep.mubr.f32.mxu0 0.0
        %3689 = vmatmul.mubr.f32.gmra.mxu0 %v3545
        %v3690 = vpop.f32.mrf.mxu0
        %v3691 = vadd.f32 0.0, %v3690
        %v3692 = vpop.f32.mrf.mxu0
        %3693 = vmatprep.mubr.f32.mxu0 0.0
        %3694 = vmatmul.mubr.f32.gmra.mxu0 %v3546
        %v3695 = vpop.f32.mrf.mxu0
        %v3696 = vadd.f32 0.0, %v3695
        %v3697 = vpop.f32.mrf.mxu0
        %3698 = vmatprep.mubr.f32.mxu0 0.0
        %3699 = vmatmul.mubr.f32.gmra.mxu0 %v3547
        %v3700 = vpop.f32.mrf.mxu0
        %v3701 = vadd.f32 0.0, %v3700
        %v3702 = vpop.f32.mrf.mxu0
        %3703 = vmatprep.mubr.f32.mxu0 0.0
        %3704 = vmatmul.mubr.f32.gmra.mxu0 %v3548
        %v3705 = vpop.f32.mrf.mxu0
        %v3706 = vadd.f32 0.0, %v3705
        %v3707 = vpop.f32.mrf.mxu0
        %3708 = vmatprep.mubr.f32.mxu0 0.0
        %3709 = vmatmul.mubr.f32.gmra.mxu0 %v3549
        %v3710 = vpop.f32.mrf.mxu0
        %v3711 = vadd.f32 0.0, %v3710
        %v3712 = vpop.f32.mrf.mxu0
        %3713 = vmatprep.mubr.f32.mxu0 0.0
        %3714 = vmatmul.mubr.f32.gmra.mxu0 %v3550
        %v3715 = vpop.f32.mrf.mxu0
        %v3716 = vadd.f32 0.0, %v3715
        %v3717 = vpop.f32.mrf.mxu0
        %3718 = vmatprep.mubr.f32.mxu0 0.0
        %3719 = vmatmul.mubr.f32.gmra.mxu0 %v3551
        %v3720 = vpop.f32.mrf.mxu0
        %v3721 = vadd.f32 0.0, %v3720
        %v3722 = vpop.f32.mrf.mxu0
        %3723 = vdwg.mxu0
        %v3724 = vadd.f32 %v3516, %v3636
        %v3725 = vadd.f32 %v3517, %v3641
        %v3726 = vadd.f32 %v3518, %v3646
        %v3727 = vadd.f32 %v3519, %v3651
        %v3728 = vadd.f32 %v3520, %v3656
        %v3729 = vadd.f32 %v3521, %v3661
        %v3730 = vadd.f32 %v3522, %v3666
        %v3731 = vadd.f32 %v3523, %v3671
        %v3732 = vadd.f32 %v3524, %v3676
        %v3733 = vadd.f32 %v3525, %v3681
        %v3734 = vadd.f32 %v3526, %v3686
        %v3735 = vadd.f32 %v3527, %v3691
        %v3736 = vadd.f32 %v3528, %v3696
        %v3737 = vadd.f32 %v3529, %v3701
        %v3738 = vadd.f32 %v3530, %v3706
        %v3739 = vadd.f32 %v3531, %v3711
        %v3740 = vadd.f32 %v3532, %v3716
        %v3741 = vadd.f32 %v3533, %v3721
        %v3742 = vld [vmem:[#allocation2 + $0x1b] sm:$0xff]
        %v3743 = vld [vmem:[#allocation2 + $0x23] sm:$0xff]
        %v3744 = vld [vmem:[#allocation2 + $0x2b] sm:$0xff]
        %v3745 = vld [vmem:[#allocation2 + $0x33] sm:$0xff]
        %v3746 = vld [vmem:[#allocation2 + $0x3b] sm:$0xff]
        %v3747 = vld [vmem:[#allocation2 + $0x43] sm:$0xff]
        %v3748 = vld [vmem:[#allocation2 + $0x4b] sm:$0xff]
        %v3749 = vld [vmem:[#allocation2 + $0x53] sm:$0xff]
        %v3750 = vld [vmem:[#allocation2 + $0x5b] sm:$0xff]
        %v3751 = vld [vmem:[#allocation2 + $0x63] sm:$0xff]
        %v3752 = vld [vmem:[#allocation2 + $0x6b] sm:$0xff]
        %v3753 = vld [vmem:[#allocation2 + $0x73] sm:$0xff]
        %v3754 = vld [vmem:[#allocation2 + $0x7b] sm:$0xff]
        %v3755 = vld [vmem:[#allocation2 + $0x83] sm:$0xff]
        %v3756 = vld [vmem:[#allocation2 + $0x8b] sm:$0xff]
        %v3757 = vld [vmem:[#allocation2 + $0x93] sm:$0xff]
        %v3758 = vld [vmem:[#allocation2 + $0x9b] sm:$0xff]
        %v3759 = vld [vmem:[#allocation2 + $0xa3] sm:$0xff]
        %s3760 = scalar_lea.vmem [#allocation8], 640
        %v3761 = vld [vmem:[%s3760] sm:$0xff]
        %v3762 = vld [vmem:[%s3760 + $0x8] sm:$0xff]
        %v3763 = vld [vmem:[%s3760 + $0x10] sm:$0xff]
        %v3764 = vld [vmem:[%s3760 + $0x18] sm:$0xff]
        %v3765 = vld [vmem:[%s3760 + $0x20] sm:$0xff]
        %v3766 = vld [vmem:[%s3760 + $0x28] sm:$0xff]
        %v3767 = vld [vmem:[%s3760 + $0x30] sm:$0xff]
        %v3768 = vld [vmem:[%s3760 + $0x38] sm:$0xff]
        %v3769 = vld [vmem:[%s3760 + $0x40] sm:$0xff]
        %v3770 = vld [vmem:[%s3760 + $0x48] sm:$0xff]
        %v3771 = vld [vmem:[%s3760 + $0x50] sm:$0xff]
        %v3772 = vld [vmem:[%s3760 + $0x58] sm:$0xff]
        %v3773 = vld [vmem:[%s3760 + $0x60] sm:$0xff]
        %v3774 = vld [vmem:[%s3760 + $0x68] sm:$0xff]
        %v3775 = vld [vmem:[%s3760 + $0x70] sm:$0xff]
        %v3776 = vld [vmem:[%s3760 + $0x78] sm:$0xff]
        %3777 = vmatprep.subr.mxu0 0.0
        %3778 = vmatpush1.msra.mxu0 %v3776
        %3779 = vmatprep.subr.mxu0 0.0
        %3780 = vmatpush1.msra.mxu0 %v3775
        %3781 = vmatprep.subr.mxu0 0.0
        %3782 = vmatpush1.msra.mxu0 %v3774
        %3783 = vmatprep.subr.mxu0 0.0
        %3784 = vmatpush1.msra.mxu0 %v3773
        %3785 = vmatprep.subr.mxu0 0.0
        %3786 = vmatpush1.msra.mxu0 %v3772
        %3787 = vmatprep.subr.mxu0 0.0
        %3788 = vmatpush1.msra.mxu0 %v3771
        %3789 = vmatprep.subr.mxu0 0.0
        %3790 = vmatpush1.msra.mxu0 %v3770
        %3791 = vmatprep.subr.mxu0 0.0
        %3792 = vmatpush1.msra.mxu0 %v3769
        %3793 = vmatprep.subr.mxu0 0.0
        %3794 = vmatpush1.msra.mxu0 %v3768
        %3795 = vmatprep.subr.mxu0 0.0
        %3796 = vmatpush1.msra.mxu0 %v3767
        %3797 = vmatprep.subr.mxu0 0.0
        %3798 = vmatpush1.msra.mxu0 %v3766
        %3799 = vmatprep.subr.mxu0 0.0
        %3800 = vmatpush1.msra.mxu0 %v3765
        %3801 = vmatprep.subr.mxu0 0.0
        %3802 = vmatpush1.msra.mxu0 %v3764
        %3803 = vmatprep.subr.mxu0 0.0
        %3804 = vmatpush1.msra.mxu0 %v3763
        %3805 = vmatprep.subr.mxu0 0.0
        %3806 = vmatpush1.msra.mxu0 %v3762
        %3807 = vmatprep.subr.mxu0 0.0
        %3808 = vmatpush1.msra.mxu0 %v3761
        %3809 = vmatprep.subr.mxu0 0.0
        %3810 = vmatpush2.msra.mxu0 0.0
        %3811 = vmatprep.subr.mxu0 0.0
        %3812 = vmatpush2.msra.mxu0 0.0
        %3813 = vmatprep.subr.mxu0 0.0
        %3814 = vmatpush2.msra.mxu0 0.0
        %3815 = vmatprep.subr.mxu0 0.0
        %3816 = vmatpush2.msra.mxu0 0.0
        %3817 = vmatprep.subr.mxu0 0.0
        %3818 = vmatpush2.msra.mxu0 0.0
        %3819 = vmatprep.subr.mxu0 0.0
        %3820 = vmatpush2.msra.mxu0 0.0
        %3821 = vmatprep.subr.mxu0 0.0
        %3822 = vmatpush2.msra.mxu0 0.0
        %3823 = vmatprep.subr.mxu0 0.0
        %3824 = vmatpush2.msra.mxu0 0.0
        %3825 = vmatprep.subr.mxu0 0.0
        %3826 = vmatpush2.msra.mxu0 0.0
        %3827 = vmatprep.subr.mxu0 0.0
        %3828 = vmatpush2.msra.mxu0 0.0
        %3829 = vmatprep.subr.mxu0 0.0
        %3830 = vmatpush2.msra.mxu0 0.0
        %3831 = vmatprep.subr.mxu0 0.0
        %3832 = vmatpush2.msra.mxu0 0.0
        %3833 = vmatprep.subr.mxu0 0.0
        %3834 = vmatpush2.msra.mxu0 0.0
        %3835 = vmatprep.subr.mxu0 0.0
        %3836 = vmatpush2.msra.mxu0 0.0
        %3837 = vmatprep.subr.mxu0 0.0
        %3838 = vmatpush2.msra.mxu0 0.0
        %3839 = vmatprep.subr.mxu0 0.0
        %3840 = vmatpush2.msra.mxu0 0.0
        %3841 = vmatprep.mubr.f32.mxu0 0.0
        %3842 = vmatmul.mubr.f32.gmra.mxu0 %v3742
        %v3843 = vpop.f32.mrf.mxu0
        %v3844 = vadd.f32 0.0, %v3843
        %v3845 = vpop.f32.mrf.mxu0
        %3846 = vmatprep.mubr.f32.mxu0 0.0
        %3847 = vmatmul.mubr.f32.gmra.mxu0 %v3743
        %v3848 = vpop.f32.mrf.mxu0
        %v3849 = vadd.f32 0.0, %v3848
        %v3850 = vpop.f32.mrf.mxu0
        %3851 = vmatprep.mubr.f32.mxu0 0.0
        %3852 = vmatmul.mubr.f32.gmra.mxu0 %v3744
        %v3853 = vpop.f32.mrf.mxu0
        %v3854 = vadd.f32 0.0, %v3853
        %v3855 = vpop.f32.mrf.mxu0
        %3856 = vmatprep.mubr.f32.mxu0 0.0
        %3857 = vmatmul.mubr.f32.gmra.mxu0 %v3745
        %v3858 = vpop.f32.mrf.mxu0
        %v3859 = vadd.f32 0.0, %v3858
        %v3860 = vpop.f32.mrf.mxu0
        %3861 = vmatprep.mubr.f32.mxu0 0.0
        %3862 = vmatmul.mubr.f32.gmra.mxu0 %v3746
        %v3863 = vpop.f32.mrf.mxu0
        %v3864 = vadd.f32 0.0, %v3863
        %v3865 = vpop.f32.mrf.mxu0
        %3866 = vmatprep.mubr.f32.mxu0 0.0
        %3867 = vmatmul.mubr.f32.gmra.mxu0 %v3747
        %v3868 = vpop.f32.mrf.mxu0
        %v3869 = vadd.f32 0.0, %v3868
        %v3870 = vpop.f32.mrf.mxu0
        %3871 = vmatprep.mubr.f32.mxu0 0.0
        %3872 = vmatmul.mubr.f32.gmra.mxu0 %v3748
        %v3873 = vpop.f32.mrf.mxu0
        %v3874 = vadd.f32 0.0, %v3873
        %v3875 = vpop.f32.mrf.mxu0
        %3876 = vmatprep.mubr.f32.mxu0 0.0
        %3877 = vmatmul.mubr.f32.gmra.mxu0 %v3749
        %v3878 = vpop.f32.mrf.mxu0
        %v3879 = vadd.f32 0.0, %v3878
        %v3880 = vpop.f32.mrf.mxu0
        %3881 = vmatprep.mubr.f32.mxu0 0.0
        %3882 = vmatmul.mubr.f32.gmra.mxu0 %v3750
        %v3883 = vpop.f32.mrf.mxu0
        %v3884 = vadd.f32 0.0, %v3883
        %v3885 = vpop.f32.mrf.mxu0
        %3886 = vmatprep.mubr.f32.mxu0 0.0
        %3887 = vmatmul.mubr.f32.gmra.mxu0 %v3751
        %v3888 = vpop.f32.mrf.mxu0
        %v3889 = vadd.f32 0.0, %v3888
        %v3890 = vpop.f32.mrf.mxu0
        %3891 = vmatprep.mubr.f32.mxu0 0.0
        %3892 = vmatmul.mubr.f32.gmra.mxu0 %v3752
        %v3893 = vpop.f32.mrf.mxu0
        %v3894 = vadd.f32 0.0, %v3893
        %v3895 = vpop.f32.mrf.mxu0
        %3896 = vmatprep.mubr.f32.mxu0 0.0
        %3897 = vmatmul.mubr.f32.gmra.mxu0 %v3753
        %v3898 = vpop.f32.mrf.mxu0
        %v3899 = vadd.f32 0.0, %v3898
        %v3900 = vpop.f32.mrf.mxu0
        %3901 = vmatprep.mubr.f32.mxu0 0.0
        %3902 = vmatmul.mubr.f32.gmra.mxu0 %v3754
        %v3903 = vpop.f32.mrf.mxu0
        %v3904 = vadd.f32 0.0, %v3903
        %v3905 = vpop.f32.mrf.mxu0
        %3906 = vmatprep.mubr.f32.mxu0 0.0
        %3907 = vmatmul.mubr.f32.gmra.mxu0 %v3755
        %v3908 = vpop.f32.mrf.mxu0
        %v3909 = vadd.f32 0.0, %v3908
        %v3910 = vpop.f32.mrf.mxu0
        %3911 = vmatprep.mubr.f32.mxu0 0.0
        %3912 = vmatmul.mubr.f32.gmra.mxu0 %v3756
        %v3913 = vpop.f32.mrf.mxu0
        %v3914 = vadd.f32 0.0, %v3913
        %v3915 = vpop.f32.mrf.mxu0
        %3916 = vmatprep.mubr.f32.mxu0 0.0
        %3917 = vmatmul.mubr.f32.gmra.mxu0 %v3757
        %v3918 = vpop.f32.mrf.mxu0
        %v3919 = vadd.f32 0.0, %v3918
        %v3920 = vpop.f32.mrf.mxu0
        %3921 = vmatprep.mubr.f32.mxu0 0.0
        %3922 = vmatmul.mubr.f32.gmra.mxu0 %v3758
        %v3923 = vpop.f32.mrf.mxu0
        %v3924 = vadd.f32 0.0, %v3923
        %v3925 = vpop.f32.mrf.mxu0
        %3926 = vmatprep.mubr.f32.mxu0 0.0
        %3927 = vmatmul.mubr.f32.gmra.mxu0 %v3759
        %v3928 = vpop.f32.mrf.mxu0
        %v3929 = vadd.f32 0.0, %v3928
        %v3930 = vpop.f32.mrf.mxu0
        %3931 = vdwg.mxu0
        %v3932 = vadd.f32 %v3724, %v3844
        %v3933 = vadd.f32 %v3725, %v3849
        %v3934 = vadd.f32 %v3726, %v3854
        %v3935 = vadd.f32 %v3727, %v3859
        %v3936 = vadd.f32 %v3728, %v3864
        %v3937 = vadd.f32 %v3729, %v3869
        %v3938 = vadd.f32 %v3730, %v3874
        %v3939 = vadd.f32 %v3731, %v3879
        %v3940 = vadd.f32 %v3732, %v3884
        %v3941 = vadd.f32 %v3733, %v3889
        %v3942 = vadd.f32 %v3734, %v3894
        %v3943 = vadd.f32 %v3735, %v3899
        %v3944 = vadd.f32 %v3736, %v3904
        %v3945 = vadd.f32 %v3737, %v3909
        %v3946 = vadd.f32 %v3738, %v3914
        %v3947 = vadd.f32 %v3739, %v3919
        %v3948 = vadd.f32 %v3740, %v3924
        %v3949 = vadd.f32 %v3741, %v3929
        %v3950 = vld [vmem:[#allocation2 + $0x2b] sm:$0xff]
        %v3951 = vld [vmem:[#allocation2 + $0x33] sm:$0xff]
        %v3952 = vld [vmem:[#allocation2 + $0x3b] sm:$0xff]
        %v3953 = vld [vmem:[#allocation2 + $0x43] sm:$0xff]
        %v3954 = vld [vmem:[#allocation2 + $0x4b] sm:$0xff]
        %v3955 = vld [vmem:[#allocation2 + $0x53] sm:$0xff]
        %v3956 = vld [vmem:[#allocation2 + $0x5b] sm:$0xff]
        %v3957 = vld [vmem:[#allocation2 + $0x63] sm:$0xff]
        %v3958 = vld [vmem:[#allocation2 + $0x6b] sm:$0xff]
        %v3959 = vld [vmem:[#allocation2 + $0x73] sm:$0xff]
        %v3960 = vld [vmem:[#allocation2 + $0x7b] sm:$0xff]
        %v3961 = vld [vmem:[#allocation2 + $0x83] sm:$0xff]
        %v3962 = vld [vmem:[#allocation2 + $0x8b] sm:$0xff]
        %v3963 = vld [vmem:[#allocation2 + $0x93] sm:$0xff]
        %v3964 = vld [vmem:[#allocation2 + $0x9b] sm:$0xff]
        %v3965 = vld [vmem:[#allocation2 + $0xa3] sm:$0xff]
        %v3966 = vld [vmem:[#allocation2 + $0xab] sm:$0xff]
        %v3967 = vld [vmem:[#allocation2 + $0xb3] sm:$0xff]
        %s3968 = scalar_lea.vmem [#allocation8], 768
        %v3969 = vld [vmem:[%s3968] sm:$0xff]
        %v3970 = vld [vmem:[%s3968 + $0x8] sm:$0xff]
        %v3971 = vld [vmem:[%s3968 + $0x10] sm:$0xff]
        %v3972 = vld [vmem:[%s3968 + $0x18] sm:$0xff]
        %v3973 = vld [vmem:[%s3968 + $0x20] sm:$0xff]
        %v3974 = vld [vmem:[%s3968 + $0x28] sm:$0xff]
        %v3975 = vld [vmem:[%s3968 + $0x30] sm:$0xff]
        %v3976 = vld [vmem:[%s3968 + $0x38] sm:$0xff]
        %v3977 = vld [vmem:[%s3968 + $0x40] sm:$0xff]
        %v3978 = vld [vmem:[%s3968 + $0x48] sm:$0xff]
        %v3979 = vld [vmem:[%s3968 + $0x50] sm:$0xff]
        %v3980 = vld [vmem:[%s3968 + $0x58] sm:$0xff]
        %v3981 = vld [vmem:[%s3968 + $0x60] sm:$0xff]
        %v3982 = vld [vmem:[%s3968 + $0x68] sm:$0xff]
        %v3983 = vld [vmem:[%s3968 + $0x70] sm:$0xff]
        %v3984 = vld [vmem:[%s3968 + $0x78] sm:$0xff]
        %3985 = vmatprep.subr.mxu0 0.0
        %3986 = vmatpush1.msra.mxu0 %v3984
        %3987 = vmatprep.subr.mxu0 0.0
        %3988 = vmatpush1.msra.mxu0 %v3983
        %3989 = vmatprep.subr.mxu0 0.0
        %3990 = vmatpush1.msra.mxu0 %v3982
        %3991 = vmatprep.subr.mxu0 0.0
        %3992 = vmatpush1.msra.mxu0 %v3981
        %3993 = vmatprep.subr.mxu0 0.0
        %3994 = vmatpush1.msra.mxu0 %v3980
        %3995 = vmatprep.subr.mxu0 0.0
        %3996 = vmatpush1.msra.mxu0 %v3979
        %3997 = vmatprep.subr.mxu0 0.0
        %3998 = vmatpush1.msra.mxu0 %v3978
        %3999 = vmatprep.subr.mxu0 0.0
        %4000 = vmatpush1.msra.mxu0 %v3977
        %4001 = vmatprep.subr.mxu0 0.0
        %4002 = vmatpush1.msra.mxu0 %v3976
        %4003 = vmatprep.subr.mxu0 0.0
        %4004 = vmatpush1.msra.mxu0 %v3975
        %4005 = vmatprep.subr.mxu0 0.0
        %4006 = vmatpush1.msra.mxu0 %v3974
        %4007 = vmatprep.subr.mxu0 0.0
        %4008 = vmatpush1.msra.mxu0 %v3973
        %4009 = vmatprep.subr.mxu0 0.0
        %4010 = vmatpush1.msra.mxu0 %v3972
        %4011 = vmatprep.subr.mxu0 0.0
        %4012 = vmatpush1.msra.mxu0 %v3971
        %4013 = vmatprep.subr.mxu0 0.0
        %4014 = vmatpush1.msra.mxu0 %v3970
        %4015 = vmatprep.subr.mxu0 0.0
        %4016 = vmatpush1.msra.mxu0 %v3969
        %4017 = vmatprep.subr.mxu0 0.0
        %4018 = vmatpush2.msra.mxu0 0.0
        %4019 = vmatprep.subr.mxu0 0.0
        %4020 = vmatpush2.msra.mxu0 0.0
        %4021 = vmatprep.subr.mxu0 0.0
        %4022 = vmatpush2.msra.mxu0 0.0
        %4023 = vmatprep.subr.mxu0 0.0
        %4024 = vmatpush2.msra.mxu0 0.0
        %4025 = vmatprep.subr.mxu0 0.0
        %4026 = vmatpush2.msra.mxu0 0.0
        %4027 = vmatprep.subr.mxu0 0.0
        %4028 = vmatpush2.msra.mxu0 0.0
        %4029 = vmatprep.subr.mxu0 0.0
        %4030 = vmatpush2.msra.mxu0 0.0
        %4031 = vmatprep.subr.mxu0 0.0
        %4032 = vmatpush2.msra.mxu0 0.0
        %4033 = vmatprep.subr.mxu0 0.0
        %4034 = vmatpush2.msra.mxu0 0.0
        %4035 = vmatprep.subr.mxu0 0.0
        %4036 = vmatpush2.msra.mxu0 0.0
        %4037 = vmatprep.subr.mxu0 0.0
        %4038 = vmatpush2.msra.mxu0 0.0
        %4039 = vmatprep.subr.mxu0 0.0
        %4040 = vmatpush2.msra.mxu0 0.0
        %4041 = vmatprep.subr.mxu0 0.0
        %4042 = vmatpush2.msra.mxu0 0.0
        %4043 = vmatprep.subr.mxu0 0.0
        %4044 = vmatpush2.msra.mxu0 0.0
        %4045 = vmatprep.subr.mxu0 0.0
        %4046 = vmatpush2.msra.mxu0 0.0
        %4047 = vmatprep.subr.mxu0 0.0
        %4048 = vmatpush2.msra.mxu0 0.0
        %4049 = vmatprep.mubr.f32.mxu0 0.0
        %4050 = vmatmul.mubr.f32.gmra.mxu0 %v3950
        %v4051 = vpop.f32.mrf.mxu0
        %v4052 = vadd.f32 0.0, %v4051
        %v4053 = vpop.f32.mrf.mxu0
        %4054 = vmatprep.mubr.f32.mxu0 0.0
        %4055 = vmatmul.mubr.f32.gmra.mxu0 %v3951
        %v4056 = vpop.f32.mrf.mxu0
        %v4057 = vadd.f32 0.0, %v4056
        %v4058 = vpop.f32.mrf.mxu0
        %4059 = vmatprep.mubr.f32.mxu0 0.0
        %4060 = vmatmul.mubr.f32.gmra.mxu0 %v3952
        %v4061 = vpop.f32.mrf.mxu0
        %v4062 = vadd.f32 0.0, %v4061
        %v4063 = vpop.f32.mrf.mxu0
        %4064 = vmatprep.mubr.f32.mxu0 0.0
        %4065 = vmatmul.mubr.f32.gmra.mxu0 %v3953
        %v4066 = vpop.f32.mrf.mxu0
        %v4067 = vadd.f32 0.0, %v4066
        %v4068 = vpop.f32.mrf.mxu0
        %4069 = vmatprep.mubr.f32.mxu0 0.0
        %4070 = vmatmul.mubr.f32.gmra.mxu0 %v3954
        %v4071 = vpop.f32.mrf.mxu0
        %v4072 = vadd.f32 0.0, %v4071
        %v4073 = vpop.f32.mrf.mxu0
        %4074 = vmatprep.mubr.f32.mxu0 0.0
        %4075 = vmatmul.mubr.f32.gmra.mxu0 %v3955
        %v4076 = vpop.f32.mrf.mxu0
        %v4077 = vadd.f32 0.0, %v4076
        %v4078 = vpop.f32.mrf.mxu0
        %4079 = vmatprep.mubr.f32.mxu0 0.0
        %4080 = vmatmul.mubr.f32.gmra.mxu0 %v3956
        %v4081 = vpop.f32.mrf.mxu0
        %v4082 = vadd.f32 0.0, %v4081
        %v4083 = vpop.f32.mrf.mxu0
        %4084 = vmatprep.mubr.f32.mxu0 0.0
        %4085 = vmatmul.mubr.f32.gmra.mxu0 %v3957
        %v4086 = vpop.f32.mrf.mxu0
        %v4087 = vadd.f32 0.0, %v4086
        %v4088 = vpop.f32.mrf.mxu0
        %4089 = vmatprep.mubr.f32.mxu0 0.0
        %4090 = vmatmul.mubr.f32.gmra.mxu0 %v3958
        %v4091 = vpop.f32.mrf.mxu0
        %v4092 = vadd.f32 0.0, %v4091
        %v4093 = vpop.f32.mrf.mxu0
        %4094 = vmatprep.mubr.f32.mxu0 0.0
        %4095 = vmatmul.mubr.f32.gmra.mxu0 %v3959
        %v4096 = vpop.f32.mrf.mxu0
        %v4097 = vadd.f32 0.0, %v4096
        %v4098 = vpop.f32.mrf.mxu0
        %4099 = vmatprep.mubr.f32.mxu0 0.0
        %4100 = vmatmul.mubr.f32.gmra.mxu0 %v3960
        %v4101 = vpop.f32.mrf.mxu0
        %v4102 = vadd.f32 0.0, %v4101
        %v4103 = vpop.f32.mrf.mxu0
        %4104 = vmatprep.mubr.f32.mxu0 0.0
        %4105 = vmatmul.mubr.f32.gmra.mxu0 %v3961
        %v4106 = vpop.f32.mrf.mxu0
        %v4107 = vadd.f32 0.0, %v4106
        %v4108 = vpop.f32.mrf.mxu0
        %4109 = vmatprep.mubr.f32.mxu0 0.0
        %4110 = vmatmul.mubr.f32.gmra.mxu0 %v3962
        %v4111 = vpop.f32.mrf.mxu0
        %v4112 = vadd.f32 0.0, %v4111
        %v4113 = vpop.f32.mrf.mxu0
        %4114 = vmatprep.mubr.f32.mxu0 0.0
        %4115 = vmatmul.mubr.f32.gmra.mxu0 %v3963
        %v4116 = vpop.f32.mrf.mxu0
        %v4117 = vadd.f32 0.0, %v4116
        %v4118 = vpop.f32.mrf.mxu0
        %4119 = vmatprep.mubr.f32.mxu0 0.0
        %4120 = vmatmul.mubr.f32.gmra.mxu0 %v3964
        %v4121 = vpop.f32.mrf.mxu0
        %v4122 = vadd.f32 0.0, %v4121
        %v4123 = vpop.f32.mrf.mxu0
        %4124 = vmatprep.mubr.f32.mxu0 0.0
        %4125 = vmatmul.mubr.f32.gmra.mxu0 %v3965
        %v4126 = vpop.f32.mrf.mxu0
        %v4127 = vadd.f32 0.0, %v4126
        %v4128 = vpop.f32.mrf.mxu0
        %4129 = vmatprep.mubr.f32.mxu0 0.0
        %4130 = vmatmul.mubr.f32.gmra.mxu0 %v3966
        %v4131 = vpop.f32.mrf.mxu0
        %v4132 = vadd.f32 0.0, %v4131
        %v4133 = vpop.f32.mrf.mxu0
        %4134 = vmatprep.mubr.f32.mxu0 0.0
        %4135 = vmatmul.mubr.f32.gmra.mxu0 %v3967
        %v4136 = vpop.f32.mrf.mxu0
        %v4137 = vadd.f32 0.0, %v4136
        %v4138 = vpop.f32.mrf.mxu0
        %4139 = vdwg.mxu0
        %v4140 = vadd.f32 %v3932, %v4052
        %v4141 = vadd.f32 %v3933, %v4057
        %v4142 = vadd.f32 %v3934, %v4062
        %v4143 = vadd.f32 %v3935, %v4067
        %v4144 = vadd.f32 %v3936, %v4072
        %v4145 = vadd.f32 %v3937, %v4077
        %v4146 = vadd.f32 %v3938, %v4082
        %v4147 = vadd.f32 %v3939, %v4087
        %v4148 = vadd.f32 %v3940, %v4092
        %v4149 = vadd.f32 %v3941, %v4097
        %v4150 = vadd.f32 %v3942, %v4102
        %v4151 = vadd.f32 %v3943, %v4107
        %v4152 = vadd.f32 %v3944, %v4112
        %v4153 = vadd.f32 %v3945, %v4117
        %v4154 = vadd.f32 %v3946, %v4122
        %v4155 = vadd.f32 %v3947, %v4127
        %v4156 = vadd.f32 %v3948, %v4132
        %v4157 = vadd.f32 %v3949, %v4137
        %v4158 = vld [vmem:[#allocation2 + $0x2c] sm:$0xff]
        %v4159 = vld [vmem:[#allocation2 + $0x34] sm:$0xff]
        %v4160 = vld [vmem:[#allocation2 + $0x3c] sm:$0xff]
        %v4161 = vld [vmem:[#allocation2 + $0x44] sm:$0xff]
        %v4162 = vld [vmem:[#allocation2 + $0x4c] sm:$0xff]
        %v4163 = vld [vmem:[#allocation2 + $0x54] sm:$0xff]
        %v4164 = vld [vmem:[#allocation2 + $0x5c] sm:$0xff]
        %v4165 = vld [vmem:[#allocation2 + $0x64] sm:$0xff]
        %v4166 = vld [vmem:[#allocation2 + $0x6c] sm:$0xff]
        %v4167 = vld [vmem:[#allocation2 + $0x74] sm:$0xff]
        %v4168 = vld [vmem:[#allocation2 + $0x7c] sm:$0xff]
        %v4169 = vld [vmem:[#allocation2 + $0x84] sm:$0xff]
        %v4170 = vld [vmem:[#allocation2 + $0x8c] sm:$0xff]
        %v4171 = vld [vmem:[#allocation2 + $0x94] sm:$0xff]
        %v4172 = vld [vmem:[#allocation2 + $0x9c] sm:$0xff]
        %v4173 = vld [vmem:[#allocation2 + $0xa4] sm:$0xff]
        %v4174 = vld [vmem:[#allocation2 + $0xac] sm:$0xff]
        %v4175 = vld [vmem:[#allocation2 + $0xb4] sm:$0xff]
        %s4176 = scalar_lea.vmem [#allocation8], 896
        %v4177 = vld [vmem:[%s4176] sm:$0xff]
        %v4178 = vld [vmem:[%s4176 + $0x8] sm:$0xff]
        %v4179 = vld [vmem:[%s4176 + $0x10] sm:$0xff]
        %v4180 = vld [vmem:[%s4176 + $0x18] sm:$0xff]
        %v4181 = vld [vmem:[%s4176 + $0x20] sm:$0xff]
        %v4182 = vld [vmem:[%s4176 + $0x28] sm:$0xff]
        %v4183 = vld [vmem:[%s4176 + $0x30] sm:$0xff]
        %v4184 = vld [vmem:[%s4176 + $0x38] sm:$0xff]
        %v4185 = vld [vmem:[%s4176 + $0x40] sm:$0xff]
        %v4186 = vld [vmem:[%s4176 + $0x48] sm:$0xff]
        %v4187 = vld [vmem:[%s4176 + $0x50] sm:$0xff]
        %v4188 = vld [vmem:[%s4176 + $0x58] sm:$0xff]
        %v4189 = vld [vmem:[%s4176 + $0x60] sm:$0xff]
        %v4190 = vld [vmem:[%s4176 + $0x68] sm:$0xff]
        %v4191 = vld [vmem:[%s4176 + $0x70] sm:$0xff]
        %v4192 = vld [vmem:[%s4176 + $0x78] sm:$0xff]
        %4193 = vmatprep.subr.mxu0 0.0
        %4194 = vmatpush1.msra.mxu0 %v4192
        %4195 = vmatprep.subr.mxu0 0.0
        %4196 = vmatpush1.msra.mxu0 %v4191
        %4197 = vmatprep.subr.mxu0 0.0
        %4198 = vmatpush1.msra.mxu0 %v4190
        %4199 = vmatprep.subr.mxu0 0.0
        %4200 = vmatpush1.msra.mxu0 %v4189
        %4201 = vmatprep.subr.mxu0 0.0
        %4202 = vmatpush1.msra.mxu0 %v4188
        %4203 = vmatprep.subr.mxu0 0.0
        %4204 = vmatpush1.msra.mxu0 %v4187
        %4205 = vmatprep.subr.mxu0 0.0
        %4206 = vmatpush1.msra.mxu0 %v4186
        %4207 = vmatprep.subr.mxu0 0.0
        %4208 = vmatpush1.msra.mxu0 %v4185
        %4209 = vmatprep.subr.mxu0 0.0
        %4210 = vmatpush1.msra.mxu0 %v4184
        %4211 = vmatprep.subr.mxu0 0.0
        %4212 = vmatpush1.msra.mxu0 %v4183
        %4213 = vmatprep.subr.mxu0 0.0
        %4214 = vmatpush1.msra.mxu0 %v4182
        %4215 = vmatprep.subr.mxu0 0.0
        %4216 = vmatpush1.msra.mxu0 %v4181
        %4217 = vmatprep.subr.mxu0 0.0
        %4218 = vmatpush1.msra.mxu0 %v4180
        %4219 = vmatprep.subr.mxu0 0.0
        %4220 = vmatpush1.msra.mxu0 %v4179
        %4221 = vmatprep.subr.mxu0 0.0
        %4222 = vmatpush1.msra.mxu0 %v4178
        %4223 = vmatprep.subr.mxu0 0.0
        %4224 = vmatpush1.msra.mxu0 %v4177
        %4225 = vmatprep.subr.mxu0 0.0
        %4226 = vmatpush2.msra.mxu0 0.0
        %4227 = vmatprep.subr.mxu0 0.0
        %4228 = vmatpush2.msra.mxu0 0.0
        %4229 = vmatprep.subr.mxu0 0.0
        %4230 = vmatpush2.msra.mxu0 0.0
        %4231 = vmatprep.subr.mxu0 0.0
        %4232 = vmatpush2.msra.mxu0 0.0
        %4233 = vmatprep.subr.mxu0 0.0
        %4234 = vmatpush2.msra.mxu0 0.0
        %4235 = vmatprep.subr.mxu0 0.0
        %4236 = vmatpush2.msra.mxu0 0.0
        %4237 = vmatprep.subr.mxu0 0.0
        %4238 = vmatpush2.msra.mxu0 0.0
        %4239 = vmatprep.subr.mxu0 0.0
        %4240 = vmatpush2.msra.mxu0 0.0
        %4241 = vmatprep.subr.mxu0 0.0
        %4242 = vmatpush2.msra.mxu0 0.0
        %4243 = vmatprep.subr.mxu0 0.0
        %4244 = vmatpush2.msra.mxu0 0.0
        %4245 = vmatprep.subr.mxu0 0.0
        %4246 = vmatpush2.msra.mxu0 0.0
        %4247 = vmatprep.subr.mxu0 0.0
        %4248 = vmatpush2.msra.mxu0 0.0
        %4249 = vmatprep.subr.mxu0 0.0
        %4250 = vmatpush2.msra.mxu0 0.0
        %4251 = vmatprep.subr.mxu0 0.0
        %4252 = vmatpush2.msra.mxu0 0.0
        %4253 = vmatprep.subr.mxu0 0.0
        %4254 = vmatpush2.msra.mxu0 0.0
        %4255 = vmatprep.subr.mxu0 0.0
        %4256 = vmatpush2.msra.mxu0 0.0
        %4257 = vmatprep.mubr.f32.mxu0 0.0
        %4258 = vmatmul.mubr.f32.gmra.mxu0 %v4158
        %v4259 = vpop.f32.mrf.mxu0
        %v4260 = vadd.f32 0.0, %v4259
        %v4261 = vpop.f32.mrf.mxu0
        %4262 = vmatprep.mubr.f32.mxu0 0.0
        %4263 = vmatmul.mubr.f32.gmra.mxu0 %v4159
        %v4264 = vpop.f32.mrf.mxu0
        %v4265 = vadd.f32 0.0, %v4264
        %v4266 = vpop.f32.mrf.mxu0
        %4267 = vmatprep.mubr.f32.mxu0 0.0
        %4268 = vmatmul.mubr.f32.gmra.mxu0 %v4160
        %v4269 = vpop.f32.mrf.mxu0
        %v4270 = vadd.f32 0.0, %v4269
        %v4271 = vpop.f32.mrf.mxu0
        %4272 = vmatprep.mubr.f32.mxu0 0.0
        %4273 = vmatmul.mubr.f32.gmra.mxu0 %v4161
        %v4274 = vpop.f32.mrf.mxu0
        %v4275 = vadd.f32 0.0, %v4274
        %v4276 = vpop.f32.mrf.mxu0
        %4277 = vmatprep.mubr.f32.mxu0 0.0
        %4278 = vmatmul.mubr.f32.gmra.mxu0 %v4162
        %v4279 = vpop.f32.mrf.mxu0
        %v4280 = vadd.f32 0.0, %v4279
        %v4281 = vpop.f32.mrf.mxu0
        %4282 = vmatprep.mubr.f32.mxu0 0.0
        %4283 = vmatmul.mubr.f32.gmra.mxu0 %v4163
        %v4284 = vpop.f32.mrf.mxu0
        %v4285 = vadd.f32 0.0, %v4284
        %v4286 = vpop.f32.mrf.mxu0
        %4287 = vmatprep.mubr.f32.mxu0 0.0
        %4288 = vmatmul.mubr.f32.gmra.mxu0 %v4164
        %v4289 = vpop.f32.mrf.mxu0
        %v4290 = vadd.f32 0.0, %v4289
        %v4291 = vpop.f32.mrf.mxu0
        %4292 = vmatprep.mubr.f32.mxu0 0.0
        %4293 = vmatmul.mubr.f32.gmra.mxu0 %v4165
        %v4294 = vpop.f32.mrf.mxu0
        %v4295 = vadd.f32 0.0, %v4294
        %v4296 = vpop.f32.mrf.mxu0
        %4297 = vmatprep.mubr.f32.mxu0 0.0
        %4298 = vmatmul.mubr.f32.gmra.mxu0 %v4166
        %v4299 = vpop.f32.mrf.mxu0
        %v4300 = vadd.f32 0.0, %v4299
        %v4301 = vpop.f32.mrf.mxu0
        %4302 = vmatprep.mubr.f32.mxu0 0.0
        %4303 = vmatmul.mubr.f32.gmra.mxu0 %v4167
        %v4304 = vpop.f32.mrf.mxu0
        %v4305 = vadd.f32 0.0, %v4304
        %v4306 = vpop.f32.mrf.mxu0
        %4307 = vmatprep.mubr.f32.mxu0 0.0
        %4308 = vmatmul.mubr.f32.gmra.mxu0 %v4168
        %v4309 = vpop.f32.mrf.mxu0
        %v4310 = vadd.f32 0.0, %v4309
        %v4311 = vpop.f32.mrf.mxu0
        %4312 = vmatprep.mubr.f32.mxu0 0.0
        %4313 = vmatmul.mubr.f32.gmra.mxu0 %v4169
        %v4314 = vpop.f32.mrf.mxu0
        %v4315 = vadd.f32 0.0, %v4314
        %v4316 = vpop.f32.mrf.mxu0
        %4317 = vmatprep.mubr.f32.mxu0 0.0
        %4318 = vmatmul.mubr.f32.gmra.mxu0 %v4170
        %v4319 = vpop.f32.mrf.mxu0
        %v4320 = vadd.f32 0.0, %v4319
        %v4321 = vpop.f32.mrf.mxu0
        %4322 = vmatprep.mubr.f32.mxu0 0.0
        %4323 = vmatmul.mubr.f32.gmra.mxu0 %v4171
        %v4324 = vpop.f32.mrf.mxu0
        %v4325 = vadd.f32 0.0, %v4324
        %v4326 = vpop.f32.mrf.mxu0
        %4327 = vmatprep.mubr.f32.mxu0 0.0
        %4328 = vmatmul.mubr.f32.gmra.mxu0 %v4172
        %v4329 = vpop.f32.mrf.mxu0
        %v4330 = vadd.f32 0.0, %v4329
        %v4331 = vpop.f32.mrf.mxu0
        %4332 = vmatprep.mubr.f32.mxu0 0.0
        %4333 = vmatmul.mubr.f32.gmra.mxu0 %v4173
        %v4334 = vpop.f32.mrf.mxu0
        %v4335 = vadd.f32 0.0, %v4334
        %v4336 = vpop.f32.mrf.mxu0
        %4337 = vmatprep.mubr.f32.mxu0 0.0
        %4338 = vmatmul.mubr.f32.gmra.mxu0 %v4174
        %v4339 = vpop.f32.mrf.mxu0
        %v4340 = vadd.f32 0.0, %v4339
        %v4341 = vpop.f32.mrf.mxu0
        %4342 = vmatprep.mubr.f32.mxu0 0.0
        %4343 = vmatmul.mubr.f32.gmra.mxu0 %v4175
        %v4344 = vpop.f32.mrf.mxu0
        %v4345 = vadd.f32 0.0, %v4344
        %v4346 = vpop.f32.mrf.mxu0
        %4347 = vdwg.mxu0
        %v4348 = vadd.f32 %v4140, %v4260
        %v4349 = vadd.f32 %v4141, %v4265
        %v4350 = vadd.f32 %v4142, %v4270
        %v4351 = vadd.f32 %v4143, %v4275
        %v4352 = vadd.f32 %v4144, %v4280
        %v4353 = vadd.f32 %v4145, %v4285
        %v4354 = vadd.f32 %v4146, %v4290
        %v4355 = vadd.f32 %v4147, %v4295
        %v4356 = vadd.f32 %v4148, %v4300
        %v4357 = vadd.f32 %v4149, %v4305
        %v4358 = vadd.f32 %v4150, %v4310
        %v4359 = vadd.f32 %v4151, %v4315
        %v4360 = vadd.f32 %v4152, %v4320
        %v4361 = vadd.f32 %v4153, %v4325
        %v4362 = vadd.f32 %v4154, %v4330
        %v4363 = vadd.f32 %v4155, %v4335
        %v4364 = vadd.f32 %v4156, %v4340
        %v4365 = vadd.f32 %v4157, %v4345
        %v4366 = vld [vmem:[#allocation2 + $0x2d] sm:$0xff]
        %v4367 = vld [vmem:[#allocation2 + $0x35] sm:$0xff]
        %v4368 = vld [vmem:[#allocation2 + $0x3d] sm:$0xff]
        %v4369 = vld [vmem:[#allocation2 + $0x45] sm:$0xff]
        %v4370 = vld [vmem:[#allocation2 + $0x4d] sm:$0xff]
        %v4371 = vld [vmem:[#allocation2 + $0x55] sm:$0xff]
        %v4372 = vld [vmem:[#allocation2 + $0x5d] sm:$0xff]
        %v4373 = vld [vmem:[#allocation2 + $0x65] sm:$0xff]
        %v4374 = vld [vmem:[#allocation2 + $0x6d] sm:$0xff]
        %v4375 = vld [vmem:[#allocation2 + $0x75] sm:$0xff]
        %v4376 = vld [vmem:[#allocation2 + $0x7d] sm:$0xff]
        %v4377 = vld [vmem:[#allocation2 + $0x85] sm:$0xff]
        %v4378 = vld [vmem:[#allocation2 + $0x8d] sm:$0xff]
        %v4379 = vld [vmem:[#allocation2 + $0x95] sm:$0xff]
        %v4380 = vld [vmem:[#allocation2 + $0x9d] sm:$0xff]
        %v4381 = vld [vmem:[#allocation2 + $0xa5] sm:$0xff]
        %v4382 = vld [vmem:[#allocation2 + $0xad] sm:$0xff]
        %v4383 = vld [vmem:[#allocation2 + $0xb5] sm:$0xff]
        %s4384 = scalar_lea.vmem [#allocation8], 1024
        %v4385 = vld [vmem:[%s4384] sm:$0xff]
        %v4386 = vld [vmem:[%s4384 + $0x8] sm:$0xff]
        %v4387 = vld [vmem:[%s4384 + $0x10] sm:$0xff]
        %v4388 = vld [vmem:[%s4384 + $0x18] sm:$0xff]
        %v4389 = vld [vmem:[%s4384 + $0x20] sm:$0xff]
        %v4390 = vld [vmem:[%s4384 + $0x28] sm:$0xff]
        %v4391 = vld [vmem:[%s4384 + $0x30] sm:$0xff]
        %v4392 = vld [vmem:[%s4384 + $0x38] sm:$0xff]
        %v4393 = vld [vmem:[%s4384 + $0x40] sm:$0xff]
        %v4394 = vld [vmem:[%s4384 + $0x48] sm:$0xff]
        %v4395 = vld [vmem:[%s4384 + $0x50] sm:$0xff]
        %v4396 = vld [vmem:[%s4384 + $0x58] sm:$0xff]
        %v4397 = vld [vmem:[%s4384 + $0x60] sm:$0xff]
        %v4398 = vld [vmem:[%s4384 + $0x68] sm:$0xff]
        %v4399 = vld [vmem:[%s4384 + $0x70] sm:$0xff]
        %v4400 = vld [vmem:[%s4384 + $0x78] sm:$0xff]
        %4401 = vmatprep.subr.mxu0 0.0
        %4402 = vmatpush1.msra.mxu0 %v4400
        %4403 = vmatprep.subr.mxu0 0.0
        %4404 = vmatpush1.msra.mxu0 %v4399
        %4405 = vmatprep.subr.mxu0 0.0
        %4406 = vmatpush1.msra.mxu0 %v4398
        %4407 = vmatprep.subr.mxu0 0.0
        %4408 = vmatpush1.msra.mxu0 %v4397
        %4409 = vmatprep.subr.mxu0 0.0
        %4410 = vmatpush1.msra.mxu0 %v4396
        %4411 = vmatprep.subr.mxu0 0.0
        %4412 = vmatpush1.msra.mxu0 %v4395
        %4413 = vmatprep.subr.mxu0 0.0
        %4414 = vmatpush1.msra.mxu0 %v4394
        %4415 = vmatprep.subr.mxu0 0.0
        %4416 = vmatpush1.msra.mxu0 %v4393
        %4417 = vmatprep.subr.mxu0 0.0
        %4418 = vmatpush1.msra.mxu0 %v4392
        %4419 = vmatprep.subr.mxu0 0.0
        %4420 = vmatpush1.msra.mxu0 %v4391
        %4421 = vmatprep.subr.mxu0 0.0
        %4422 = vmatpush1.msra.mxu0 %v4390
        %4423 = vmatprep.subr.mxu0 0.0
        %4424 = vmatpush1.msra.mxu0 %v4389
        %4425 = vmatprep.subr.mxu0 0.0
        %4426 = vmatpush1.msra.mxu0 %v4388
        %4427 = vmatprep.subr.mxu0 0.0
        %4428 = vmatpush1.msra.mxu0 %v4387
        %4429 = vmatprep.subr.mxu0 0.0
        %4430 = vmatpush1.msra.mxu0 %v4386
        %4431 = vmatprep.subr.mxu0 0.0
        %4432 = vmatpush1.msra.mxu0 %v4385
        %4433 = vmatprep.subr.mxu0 0.0
        %4434 = vmatpush2.msra.mxu0 0.0
        %4435 = vmatprep.subr.mxu0 0.0
        %4436 = vmatpush2.msra.mxu0 0.0
        %4437 = vmatprep.subr.mxu0 0.0
        %4438 = vmatpush2.msra.mxu0 0.0
        %4439 = vmatprep.subr.mxu0 0.0
        %4440 = vmatpush2.msra.mxu0 0.0
        %4441 = vmatprep.subr.mxu0 0.0
        %4442 = vmatpush2.msra.mxu0 0.0
        %4443 = vmatprep.subr.mxu0 0.0
        %4444 = vmatpush2.msra.mxu0 0.0
        %4445 = vmatprep.subr.mxu0 0.0
        %4446 = vmatpush2.msra.mxu0 0.0
        %4447 = vmatprep.subr.mxu0 0.0
        %4448 = vmatpush2.msra.mxu0 0.0
        %4449 = vmatprep.subr.mxu0 0.0
        %4450 = vmatpush2.msra.mxu0 0.0
        %4451 = vmatprep.subr.mxu0 0.0
        %4452 = vmatpush2.msra.mxu0 0.0
        %4453 = vmatprep.subr.mxu0 0.0
        %4454 = vmatpush2.msra.mxu0 0.0
        %4455 = vmatprep.subr.mxu0 0.0
        %4456 = vmatpush2.msra.mxu0 0.0
        %4457 = vmatprep.subr.mxu0 0.0
        %4458 = vmatpush2.msra.mxu0 0.0
        %4459 = vmatprep.subr.mxu0 0.0
        %4460 = vmatpush2.msra.mxu0 0.0
        %4461 = vmatprep.subr.mxu0 0.0
        %4462 = vmatpush2.msra.mxu0 0.0
        %4463 = vmatprep.subr.mxu0 0.0
        %4464 = vmatpush2.msra.mxu0 0.0
        %4465 = vmatprep.mubr.f32.mxu0 0.0
        %4466 = vmatmul.mubr.f32.gmra.mxu0 %v4366
        %v4467 = vpop.f32.mrf.mxu0
        %v4468 = vadd.f32 0.0, %v4467
        %v4469 = vpop.f32.mrf.mxu0
        %4470 = vmatprep.mubr.f32.mxu0 0.0
        %4471 = vmatmul.mubr.f32.gmra.mxu0 %v4367
        %v4472 = vpop.f32.mrf.mxu0
        %v4473 = vadd.f32 0.0, %v4472
        %v4474 = vpop.f32.mrf.mxu0
        %4475 = vmatprep.mubr.f32.mxu0 0.0
        %4476 = vmatmul.mubr.f32.gmra.mxu0 %v4368
        %v4477 = vpop.f32.mrf.mxu0
        %v4478 = vadd.f32 0.0, %v4477
        %v4479 = vpop.f32.mrf.mxu0
        %4480 = vmatprep.mubr.f32.mxu0 0.0
        %4481 = vmatmul.mubr.f32.gmra.mxu0 %v4369
        %v4482 = vpop.f32.mrf.mxu0
        %v4483 = vadd.f32 0.0, %v4482
        %v4484 = vpop.f32.mrf.mxu0
        %4485 = vmatprep.mubr.f32.mxu0 0.0
        %4486 = vmatmul.mubr.f32.gmra.mxu0 %v4370
        %v4487 = vpop.f32.mrf.mxu0
        %v4488 = vadd.f32 0.0, %v4487
        %v4489 = vpop.f32.mrf.mxu0
        %4490 = vmatprep.mubr.f32.mxu0 0.0
        %4491 = vmatmul.mubr.f32.gmra.mxu0 %v4371
        %v4492 = vpop.f32.mrf.mxu0
        %v4493 = vadd.f32 0.0, %v4492
        %v4494 = vpop.f32.mrf.mxu0
        %4495 = vmatprep.mubr.f32.mxu0 0.0
        %4496 = vmatmul.mubr.f32.gmra.mxu0 %v4372
        %v4497 = vpop.f32.mrf.mxu0
        %v4498 = vadd.f32 0.0, %v4497
        %v4499 = vpop.f32.mrf.mxu0
        %4500 = vmatprep.mubr.f32.mxu0 0.0
        %4501 = vmatmul.mubr.f32.gmra.mxu0 %v4373
        %v4502 = vpop.f32.mrf.mxu0
        %v4503 = vadd.f32 0.0, %v4502
        %v4504 = vpop.f32.mrf.mxu0
        %4505 = vmatprep.mubr.f32.mxu0 0.0
        %4506 = vmatmul.mubr.f32.gmra.mxu0 %v4374
        %v4507 = vpop.f32.mrf.mxu0
        %v4508 = vadd.f32 0.0, %v4507
        %v4509 = vpop.f32.mrf.mxu0
        %4510 = vmatprep.mubr.f32.mxu0 0.0
        %4511 = vmatmul.mubr.f32.gmra.mxu0 %v4375
        %v4512 = vpop.f32.mrf.mxu0
        %v4513 = vadd.f32 0.0, %v4512
        %v4514 = vpop.f32.mrf.mxu0
        %4515 = vmatprep.mubr.f32.mxu0 0.0
        %4516 = vmatmul.mubr.f32.gmra.mxu0 %v4376
        %v4517 = vpop.f32.mrf.mxu0
        %v4518 = vadd.f32 0.0, %v4517
        %v4519 = vpop.f32.mrf.mxu0
        %4520 = vmatprep.mubr.f32.mxu0 0.0
        %4521 = vmatmul.mubr.f32.gmra.mxu0 %v4377
        %v4522 = vpop.f32.mrf.mxu0
        %v4523 = vadd.f32 0.0, %v4522
        %v4524 = vpop.f32.mrf.mxu0
        %4525 = vmatprep.mubr.f32.mxu0 0.0
        %4526 = vmatmul.mubr.f32.gmra.mxu0 %v4378
        %v4527 = vpop.f32.mrf.mxu0
        %v4528 = vadd.f32 0.0, %v4527
        %v4529 = vpop.f32.mrf.mxu0
        %4530 = vmatprep.mubr.f32.mxu0 0.0
        %4531 = vmatmul.mubr.f32.gmra.mxu0 %v4379
        %v4532 = vpop.f32.mrf.mxu0
        %v4533 = vadd.f32 0.0, %v4532
        %v4534 = vpop.f32.mrf.mxu0
        %4535 = vmatprep.mubr.f32.mxu0 0.0
        %4536 = vmatmul.mubr.f32.gmra.mxu0 %v4380
        %v4537 = vpop.f32.mrf.mxu0
        %v4538 = vadd.f32 0.0, %v4537
        %v4539 = vpop.f32.mrf.mxu0
        %4540 = vmatprep.mubr.f32.mxu0 0.0
        %4541 = vmatmul.mubr.f32.gmra.mxu0 %v4381
        %v4542 = vpop.f32.mrf.mxu0
        %v4543 = vadd.f32 0.0, %v4542
        %v4544 = vpop.f32.mrf.mxu0
        %4545 = vmatprep.mubr.f32.mxu0 0.0
        %4546 = vmatmul.mubr.f32.gmra.mxu0 %v4382
        %v4547 = vpop.f32.mrf.mxu0
        %v4548 = vadd.f32 0.0, %v4547
        %v4549 = vpop.f32.mrf.mxu0
        %4550 = vmatprep.mubr.f32.mxu0 0.0
        %4551 = vmatmul.mubr.f32.gmra.mxu0 %v4383
        %v4552 = vpop.f32.mrf.mxu0
        %v4553 = vadd.f32 0.0, %v4552
        %v4554 = vpop.f32.mrf.mxu0
        %4555 = vdwg.mxu0
        %v4556 = vadd.f32 %v4348, %v4468
        %v4557 = vadd.f32 %v4349, %v4473
        %v4558 = vadd.f32 %v4350, %v4478
        %v4559 = vadd.f32 %v4351, %v4483
        %v4560 = vadd.f32 %v4352, %v4488
        %v4561 = vadd.f32 %v4353, %v4493
        %v4562 = vadd.f32 %v4354, %v4498
        %v4563 = vadd.f32 %v4355, %v4503
        %v4564 = vadd.f32 %v4356, %v4508
        %v4565 = vadd.f32 %v4357, %v4513
        %v4566 = vadd.f32 %v4358, %v4518
        %v4567 = vadd.f32 %v4359, %v4523
        %v4568 = vadd.f32 %v4360, %v4528
        %v4569 = vadd.f32 %v4361, %v4533
        %v4570 = vadd.f32 %v4362, %v4538
        %v4571 = vadd.f32 %v4363, %v4543
        %v4572 = vadd.f32 %v4364, %v4548
        %v4573 = vadd.f32 %v4365, %v4553
        %v4574 = vld [vmem:[%s5] sm:$0x1]
        %v4576 = vlaneseq
        %v4577 = vshrl.u32 %v4576, 7
        %v4578 = vsub.s32 0, %v4577
        %v4579 = vrot.slane %v4574, %v4578
        %v4581 = vadd.f32 %v4556, %v4579
        %v4582 = vadd.f32 %v4557, %v4579
        %v4583 = vadd.f32 %v4558, %v4579
        %v4584 = vadd.f32 %v4559, %v4579
        %v4585 = vadd.f32 %v4560, %v4579
        %v4586 = vadd.f32 %v4561, %v4579
        %v4587 = vadd.f32 %v4562, %v4579
        %v4588 = vadd.f32 %v4563, %v4579
        %v4589 = vadd.f32 %v4564, %v4579
        %v4590 = vadd.f32 %v4565, %v4579
        %v4591 = vadd.f32 %v4566, %v4579
        %v4592 = vadd.f32 %v4567, %v4579
        %v4593 = vadd.f32 %v4568, %v4579
        %v4594 = vadd.f32 %v4569, %v4579
        %v4595 = vadd.f32 %v4570, %v4579
        %v4596 = vadd.f32 %v4571, %v4579
        %v4597 = vadd.f32 %v4572, %v4579
        %v4598 = vadd.f32 %v4573, %v4579
        %v4599 = vmax.f32 %v4581, 0.0
        %v4600 = vmax.f32 %v4582, 0.0
        %v4601 = vmax.f32 %v4583, 0.0
        %v4602 = vmax.f32 %v4584, 0.0
        %v4603 = vmax.f32 %v4585, 0.0
        %v4604 = vmax.f32 %v4586, 0.0
        %v4605 = vmax.f32 %v4587, 0.0
        %v4606 = vmax.f32 %v4588, 0.0
        %v4607 = vmax.f32 %v4589, 0.0
        %v4608 = vmax.f32 %v4590, 0.0
        %v4609 = vmax.f32 %v4591, 0.0
        %v4610 = vmax.f32 %v4592, 0.0
        %v4611 = vmax.f32 %v4593, 0.0
        %v4612 = vmax.f32 %v4594, 0.0
        %v4613 = vmax.f32 %v4595, 0.0
        %v4614 = vmax.f32 %v4596, 0.0
        %v4615 = vmax.f32 %v4597, 0.0
        %v4616 = vmax.f32 %v4598, 0.0
        %4617 = vst [vmem:[%s320] sm:$0xff] %v4599
        %4618 = vst [vmem:[%s320 + $0x8] sm:$0xff] %v4600
        %4619 = vst [vmem:[%s320 + $0x10] sm:$0xff] %v4601
        %4620 = vst [vmem:[%s320 + $0x18] sm:$0xff] %v4602
        %4621 = vst [vmem:[%s320 + $0x20] sm:$0xff] %v4603
        %4622 = vst [vmem:[%s320 + $0x28] sm:$0xff] %v4604
        %4623 = vst [vmem:[%s320 + $0x30] sm:$0xff] %v4605
        %4624 = vst [vmem:[%s320 + $0x38] sm:$0xff] %v4606
        %4625 = vst [vmem:[%s320 + $0x40] sm:$0xff] %v4607
        %4626 = vst [vmem:[%s320 + $0x48] sm:$0xff] %v4608
        %4627 = vst [vmem:[%s320 + $0x50] sm:$0xff] %v4609
        %4628 = vst [vmem:[%s320 + $0x58] sm:$0xff] %v4610
        %4629 = vst [vmem:[%s320 + $0x60] sm:$0xff] %v4611
        %4630 = vst [vmem:[%s320 + $0x68] sm:$0xff] %v4612
        %4631 = vst [vmem:[%s320 + $0x70] sm:$0xff] %v4613
        %4632 = vst [vmem:[%s320 + $0x78] sm:$0xff] %v4614
        %4633 = vst [vmem:[%s320 + $0x80] sm:$0xff] %v4615
        %4634 = vst [vmem:[%s320 + $0x88] sm:$0xff] %v4616
        %s4635 = sand.u32 %s183, 1
        %s4636 = scalar_lea.sflag [#allocation5], %s4635
        %s4637 = sand.u32 %s183, 1
        %s4638 = smul.addr %s4637, 144
        %s4639 = scalar_lea.vmem [#allocation9], %s4638
        // Predicated region
        $region65: #{tpu_custom_call.1} parent=43 // pred_check
          %p4640 = pneg %p193
        $region66: #{tpu_custom_call.1} parent=43 // pred_check_branch
          %4642 = sbr.rel (%p4640) target = $region68
        $region67: #{tpu_custom_call.1} parent=43 // pred_region
          %s4643 = smul.u32 %s28, 2
          %s4644 = sadd.s32 %s4643, %s29
          %s4646 = ssub.s32 2304, 2304
          %4647 = vsyncadd %s4636, %s4646
          %s4648 = smul.addr %s4644, 18
          %s4649 = smul.addr %s4648, 128
          %s4650 = scalar_lea.hbm %s6, %s4649
          %s4651 = sshll.u32 %s4639, 4
          %s4652 = int_to_ptr.vmem [resolvable:$true] %s4651
          %4657 = dma.vmem_to_hbm [thread:$0]  %s4652, 2304, %s4650, %s4636, 128, 128, 8
        $region68: #{tpu_custom_call.1} parent=43 // pred_fallthru
          _
      $region44: #{tpu_custom_call.1} parent=5 // pred_fallthru
        _
      %p4658 = scmp.le.s32.totalorder 2, %s19
      // Predicated region
      $region69: #{tpu_custom_call.1} parent=5 // pred_check
        %p4659 = pneg %p4658
      $region70: #{tpu_custom_call.1} parent=5 // pred_check_branch
        %4661 = sbr.rel (%p4659) target = $region72
      $region71: #{tpu_custom_call.1} parent=5 // pred_region
        %s4662 = ssub.s32 %s19, 2
        // Predicated region
        $region73: #{tpu_custom_call.1} parent=71 // pred_check
          %p4663 = pneg %p199
        $region74: #{tpu_custom_call.1} parent=71 // pred_check_branch
          %4665 = sbr.rel (%p4663) target = $region76
        $region75: #{tpu_custom_call.1} parent=71 // pred_region
          %s4666 = sand.u32 %s184, 1
          %s4667 = scalar_lea.sflag [#allocation5], %s4666
          %s4668 = sand.u32 %s184, 1
          %s4669 = smul.addr %s4668, 144
          %s4670 = scalar_lea.vmem [#allocation9], %s4669
          %4671 = dma.done %s4667, 2304
        $region76: #{tpu_custom_call.1} parent=71 // pred_fallthru
          _
      $region72: #{tpu_custom_call.1} parent=5 // pred_fallthru
        _
    $region6: #{tpu_custom_call.1} parent=1 // loop_footer
      %s23 = sadd.s32 1, %s19
    $region7: #{tpu_custom_call.1} parent=1 // loop_footer_branch
      %18 = sbr.rel target = $region3
    $region8: #{tpu_custom_call.1} parent=1 // loop_exit
      _
    %4672 = vsyncpa [#allocation4], 1
    %s4673 = scalar_lea.sflag [#allocation4], 1
    %4674 = vsyncpa %s4673, 1
    %4675 = vsyncpa [#allocation7], 1
    %4676 = vsyncpa [#allocation5], 1
    %s4677 = scalar_lea.sflag [#allocation5], 1
    %4678 = vsyncpa %s4677, 1

</llo_original>
